<compile_context>
chip_gen: v7x
topology: tpu7x:2x2x1
jax: 0.10.0
libtpu: 0.0.40
codegen_flags: <defaults>
</compile_context>

<pallas_src>
import functools

import jax
import jax.numpy as jnp
from jax import lax
from jax.experimental import pallas as pl
from jax.experimental.pallas import tpu as pltpu


# ------------------------------ fused forward kernel ------------------------------
def _fused_cnn_attention_kernel(p1_ref, w1_ref, b1_ref, w2_ref, b2_ref,
                                wqkv_ref, bqkv_ref, o_ref,
                                *, H, W, C1, C2, hidden, pack_groups):
    H2, W2 = H // 2, W // 2
    H4, W4 = H2 // 2, W2 // 2
    S = H4 * W4

    # ---- conv1 (3x3, pad=1) as a single im2col matmul + bias + ReLU --------------
    # p1_ref[0]: (H*W, 9*cin) patches; w1: (9*cin, C1); b1: (1, C1)
    h = jnp.dot(p1_ref[0], w1_ref[...], preferred_element_type=jnp.float32)
    h = jnp.maximum(h + b1_ref[...], 0.0)                      # (H*W, C1)

    # ---- maxpool 2x2 stride 2 -----------------------------------------------------
    h = jnp.max(h.reshape(H * W2, 2, C1), axis=1)              # pool along W
    h = jnp.max(h.reshape(H2, 2, W2, C1), axis=1)              # pool along H -> (H2, W2, C1)

    # ---- conv2 (3x3, pad=1): build 1-px zero halo in-kernel, im2col, one matmul --
    zrow = jnp.zeros((1, W2, C1), jnp.float32)
    zcol = jnp.zeros((H2 + 2, 1, C1), jnp.float32)
    hp = jnp.concatenate([zrow, h, zrow], axis=0)              # (H2+2, W2,   C1)
    hp = jnp.concatenate([zcol, hp, zcol], axis=1)             # (H2+2, W2+2, C1)
    patches = jnp.concatenate(
        [hp[ky:ky + H2, kx:kx + W2, :].reshape(H2 * W2, C1)
         for ky in range(3) for kx in range(3)],
        axis=-1)                                               # (H2*W2, 9*C1)  K = 576
    g = jnp.dot(patches, w2_ref[...], preferred_element_type=jnp.float32)
    g = jnp.maximum(g + b2_ref[...], 0.0)                      # (H2*W2, C2)

    # ---- maxpool 2x2 stride 2 -> attention tokens ----------------------------------
    g = jnp.max(g.reshape(H2 * W4, 2, C2), axis=1)
    g = jnp.max(g.reshape(H4, 2, W4, C2), axis=1)              # (H4, W4, C2)
    xa = g.reshape(S, C2)                # == torch cnn_features.view(B,C,-1).permute(0,2,1)

    # ---- TinySelfAttention ----------------------------------------------------------
    # Fused QKV projection; the query weight/bias are pre-scaled by 1/sqrt(hidden).
    qkv = jnp.dot(xa, wqkv_ref[...], preferred_element_type=jnp.float32) + bqkv_ref[...]
    q = qkv[:, :hidden]
    k = qkv[:, hidden:2 * hidden]
    v = qkv[:, 2 * hidden:]
    scores = jnp.dot(q, k.T, preferred_element_type=jnp.float32)   # (S, S), scale in q
    scores = scores - jnp.max(scores, axis=-1, keepdims=True)      # stable softmax
    e = jnp.exp(scores)
    attn = e * pl.reciprocal(jnp.sum(e, axis=-1, keepdims=True), approx=True)
    out = jnp.dot(attn, v, preferred_element_type=jnp.float32)     # (S, hidden)
    # TODO(synk): nn.Dropout is declared in the torch module but never applied in
    # forward(), so no dropout is implemented here.

    # ---- store ------------------------------------------------------------------------
    if pack_groups > 1:
        # Lane-dense store: pack `pack_groups` contiguous row-groups along lanes so the
        # output's last dim is 128 (unmasked vst). Un-permuted in the wrapper.
        rows = S // pack_groups
        o_ref[0] = jnp.concatenate(
            [out[j * rows:(j + 1) * rows, :] for j in range(pack_groups)], axis=-1)
    else:
        o_ref[0] = out


# ------------------------------------ wrapper ---------------------------------------
def cnn_with_attention(x_nchw, params, *, hidden_dim):
    """Forward pass of CNNWithAttention. x_nchw: (B, cin, H, W) float32 (NCHW)."""
    x = jnp.transpose(x_nchw, (0, 2, 3, 1)).astype(jnp.float32)   # NCHW -> NHWC
    B, H, W, cin = x.shape
    assert H % 4 == 0 and W % 4 == 0

    # im2col patches for conv1 (done once on the tiny raw input; XLA fuses this).
    xp = jnp.pad(x, ((0, 0), (1, 1), (1, 1), (0, 0)))
    p1 = jnp.concatenate(
        [xp[:, ky:ky + H, kx:kx + W, :] for ky in range(3) for kx in range(3)],
        axis=-1).reshape(B, H * W, 9 * cin)

    w1 = params["w1"].reshape(9 * cin, -1)          # (ky,kx,cin,cout) -> (9*cin, C1)
    b1 = params["b1"]
    C1 = w1.shape[-1]
    w2 = params["w2"].reshape(9 * C1, -1)           # (9*C1, C2)
    b2 = params["b2"]
    C2 = w2.shape[-1]
    assert params["wq"].shape[0] == C2, "attention input_dim must equal conv2 out-channels"

    # Fused QKV weights; fold the 1/sqrt(hidden) score scale into the query projection.
    scale = 1.0 / (hidden_dim ** 0.5)
    wqkv = jnp.concatenate([params["wq"] * scale, params["wk"], params["wv"]], axis=1)
    bqkv = jnp.concatenate([params["bq"] * scale, params["bk"], params["bv"]], axis=1)

    S = (H // 4) * (W // 4)
    if hidden_dim < 128 and 128 % hidden_dim == 0 and S % (128 // hidden_dim) == 0:
        G = 128 // hidden_dim                       # lane-dense packing factor
    else:
        G = 1
    out_rows, out_cols = S // G, G * hidden_dim

    kern = functools.partial(_fused_cnn_attention_kernel,
                             H=H, W=W, C1=C1, C2=C2,
                             hidden=hidden_dim, pack_groups=G)

    y = pl.pallas_call(
        kern,
        out_shape=jax.ShapeDtypeStruct((B, out_rows, out_cols), jnp.float32),
        grid_spec=pltpu.PrefetchScalarGridSpec(
            num_scalar_prefetch=0,
            grid=(B,),
            in_specs=[
                pl.BlockSpec((1, H * W, 9 * cin), lambda b: (b, 0, 0)),
                pl.BlockSpec((9 * cin, C1), lambda b: (0, 0)),
                pl.BlockSpec((1, C1), lambda b: (0, 0)),
                pl.BlockSpec((9 * C1, C2), lambda b: (0, 0)),
                pl.BlockSpec((1, C2), lambda b: (0, 0)),
                pl.BlockSpec((C2, 3 * hidden_dim), lambda b: (0, 0)),
                pl.BlockSpec((1, 3 * hidden_dim), lambda b: (0, 0)),
            ],
            out_specs=pl.BlockSpec((1, out_rows, out_cols), lambda b: (b, 0, 0)),
        ),
        compiler_params=pltpu.CompilerParams(
            dimension_semantics=("parallel",)),     # no cross-batch carry; v7x megacore
    )(p1, w1, b1, w2, b2, wqkv, bqkv)

    if G > 1:   # un-pack the lane-dense slab back to (B, S, hidden)
        y = (y.reshape(B, out_rows, G, hidden_dim)
              .transpose(0, 2, 1, 3)
              .reshape(B, S, hidden_dim))
    return y


# --------------------------------- params / reference --------------------------------
def init_params(key, input_channels, input_dim, hidden_dim):
    ks = jax.random.split(key, 10)
    s = 0.05
    return {
        # conv weights in (ky, kx, cin, cout) order (== torch weight.permute(2,3,1,0))
        "w1": s * jax.random.normal(ks[0], (3, 3, input_channels, 64), jnp.float32),
        "b1": s * jax.random.normal(ks[1], (1, 64), jnp.float32),
        "w2": s * jax.random.normal(ks[2], (3, 3, 64, 128), jnp.float32),
        "b2": s * jax.random.normal(ks[3], (1, 128), jnp.float32),
        # linear weights stored transposed: (input_dim, hidden) (== torch weight.T)
        "wq": s * jax.random.normal(ks[4], (input_dim, hidden_dim), jnp.float32),
        "bq": s * jax.random.normal(ks[5], (1, hidden_dim), jnp.float32),
        "wk": s * jax.random.normal(ks[6], (input_dim, hidden_dim), jnp.float32),
        "bk": s * jax.random.normal(ks[7], (1, hidden_dim), jnp.float32),
        "wv": s * jax.random.normal(ks[8], (input_dim, hidden_dim), jnp.float32),
        "bv": s * jax.random.normal(ks[9], (1, hidden_dim), jnp.float32),
    }


def _reference(x_nchw, params, hidden_dim):
    """Pure-JAX reference matching the torch module (sanity check only)."""
    x = jnp.transpose(x_nchw, (0, 2, 3, 1))
    hiprec = lax.Precision.HIGHEST

    def conv_relu_pool(t, w, b):
        t = lax.conv_general_dilated(t, w, (1, 1), "SAME",
                                     dimension_numbers=("NHWC", "HWIO", "NHWC"),
                                     precision=hiprec)
        t = jnp.maximum(t + b.reshape(1, 1, 1, -1), 0.0)
        return lax.reduce_window(t, -jnp.inf, lax.max,
                                 (1, 2, 2, 1), (1, 2, 2, 1), "VALID")

    h = conv_relu_pool(x, params["w1"], params["b1"])
    h = conv_relu_pool(h, params["w2"], params["b2"])
    B, Hh, Ww, C = h.shape
    t = h.reshape(B, Hh * Ww, C)
    q = jnp.matmul(t, params["wq"], precision=hiprec) + params["bq"]
    k = jnp.matmul(t, params["wk"], precision=hiprec) + params["bk"]
    v = jnp.matmul(t, params["wv"], precision=hiprec) + params["bv"]
    s = jnp.einsum("bsd,btd->bst", q, k, precision=hiprec) / (hidden_dim ** 0.5)
    a = jax.nn.softmax(s, axis=-1)
    return jnp.einsum("bst,btd->bsd", a, v, precision=hiprec)


# -------------------------------------- main ------------------------------------------
if __name__ == "__main__":
    # CNNWithAttention(input_channels=4, input_dim=128, hidden_dim=32)
    B, Cin, Hin, Win = 2, 4, 16, 16
    input_dim, hidden_dim = 128, 32     # input_dim == conv stack's output channels

    key = jax.random.PRNGKey(0)
    kx, kp = jax.random.split(key)
    x = jax.random.normal(kx, (B, Cin, Hin, Win), jnp.float32)   # NCHW, like torch
    params = init_params(kp, Cin, input_dim, hidden_dim)

    fwd = jax.jit(functools.partial(cnn_with_attention, hidden_dim=hidden_dim))
    out = jax.block_until_ready(fwd(x, params))

    assert out.shape == (B, (Hin // 4) * (Win // 4), hidden_dim)
    assert bool(jnp.all(jnp.isfinite(out)))

    ref = _reference(x, params, hidden_dim)
    err = float(jnp.max(jnp.abs(out - ref)))
    assert bool(jnp.allclose(out, ref, rtol=5e-2, atol=1e-2)), f"max abs err = {err}"
    print("KERNEL_OK")
</pallas_src>

<mosaic_0001>
module attributes {stable_mosaic.version = 11 : i64} {
  func.func @_fused_cnn_attention_kernel(%arg0: i32, %arg1: memref<1x256x36xf32, #tpu.memory_space<vmem>>, %arg2: memref<36x64xf32, #tpu.memory_space<vmem>>, %arg3: memref<1x64xf32, #tpu.memory_space<vmem>>, %arg4: memref<576x128xf32, #tpu.memory_space<vmem>>, %arg5: memref<1x128xf32, #tpu.memory_space<vmem>>, %arg6: memref<128x96xf32, #tpu.memory_space<vmem>>, %arg7: memref<1x96xf32, #tpu.memory_space<vmem>>, %arg8: memref<1x4x128xf32, #tpu.memory_space<vmem>>) attributes {dimension_semantics = [#tpu.dimension_semantics<parallel>], iteration_bounds = array<i64: 2>, scalar_prefetch = 0 : i64, scratch_operands = 0 : i64, tpu.core_type = #tpu.core_type<tc>, window_params = [{transform_indices = @transform_0, window_bounds = array<i64: 1, 256, 36>}, {pipeline_mode = #tpu.pipeline_mode<synchronous>, transform_indices = @transform_1, window_bounds = array<i64: 36, 64>}, {pipeline_mode = #tpu.pipeline_mode<synchronous>, transform_indices = @transform_2, window_bounds = array<i64: 1, 64>}, {pipeline_mode = #tpu.pipeline_mode<synchronous>, transform_indices = @transform_3, window_bounds = array<i64: 576, 128>}, {pipeline_mode = #tpu.pipeline_mode<synchronous>, transform_indices = @transform_4, window_bounds = array<i64: 1, 128>}, {pipeline_mode = #tpu.pipeline_mode<synchronous>, transform_indices = @transform_5, window_bounds = array<i64: 128, 96>}, {pipeline_mode = #tpu.pipeline_mode<synchronous>, transform_indices = @transform_6, window_bounds = array<i64: 1, 96>}, {transform_indices = @transform_7, window_bounds = array<i64: 1, 4, 128>}]} {
    %c0 = arith.constant 0 : index
    %c0_0 = arith.constant 0 : index
    %c0_1 = arith.constant 0 : index
    %0 = vector.load %arg1[%c0, %c0_0, %c0_1] : memref<1x256x36xf32, #tpu.memory_space<vmem>>, vector<1x256x36xf32>
    %1 = vector.shape_cast %0 : vector<1x256x36xf32> to vector<256x36xf32>
    %c0_2 = arith.constant 0 : index
    %c0_3 = arith.constant 0 : index
    %2 = vector.load %arg2[%c0_2, %c0_3] : memref<36x64xf32, #tpu.memory_space<vmem>>, vector<36x64xf32>
    %cst = arith.constant dense<0.000000e+00> : vector<256x64xf32>
    %3 = tpu.matmul %1, %2, %cst {dimension_numbers = #tpu.dot_dimension_numbers<[1], [0], [0], [1], [0, 0, 1, 1], [], []>} : vector<256x36xf32>, vector<36x64xf32>, vector<256x64xf32> -> vector<256x64xf32>
    %c0_4 = arith.constant 0 : index
    %c0_5 = arith.constant 0 : index
    %4 = vector.load %arg3[%c0_4, %c0_5] : memref<1x64xf32, #tpu.memory_space<vmem>>, vector<1x64xf32>
    %5 = vector.broadcast %4 : vector<1x64xf32> to vector<256x64xf32>
    %6 = arith.addf %3, %5 : vector<256x64xf32>
    %cst_6 = arith.constant 0.000000e+00 : f32
    %7 = vector.broadcast %cst_6 : f32 to vector<256x64xf32>
    %8 = arith.maximumf %6, %7 : vector<256x64xf32>
    %9 = vector.shape_cast %8 : vector<256x64xf32> to vector<128x2x64xf32>
    %cst_7 = arith.constant dense<0xFF800000> : vector<128x64xf32>
    %10 = vector.multi_reduction <maximumf>, %9, %cst_7 [1] : vector<128x2x64xf32> to vector<128x64xf32>
    %11 = vector.shape_cast %10 : vector<128x64xf32> to vector<8x2x8x64xf32>
    %cst_8 = arith.constant dense<0xFF800000> : vector<8x8x64xf32>
    %12 = vector.multi_reduction <maximumf>, %11, %cst_8 [1] : vector<8x2x8x64xf32> to vector<8x8x64xf32>
    %cst_9 = arith.constant 0.000000e+00 : f32
    %13 = vector.broadcast %cst_9 : f32 to vector<1x8x64xf32>
    %cst_10 = arith.constant 0.000000e+00 : f32
    %14 = vector.broadcast %cst_10 : f32 to vector<10x1x64xf32>
    %15 = tpu.concatenate %13, %12, %13 in 0 : vector<1x8x64xf32>, vector<8x8x64xf32>, vector<1x8x64xf32> -> vector<10x8x64xf32>
    %16 = tpu.concatenate %14, %15, %14 in 1 : vector<10x1x64xf32>, vector<10x8x64xf32>, vector<10x1x64xf32> -> vector<10x10x64xf32>
    %17 = vector.extract_strided_slice %16 {offsets = [0, 0, 0], sizes = [8, 8, 64], strides = [1, 1, 1]} : vector<10x10x64xf32> to vector<8x8x64xf32>
    %18 = vector.shape_cast %17 : vector<8x8x64xf32> to vector<64x64xf32>
    %19 = vector.extract_strided_slice %16 {offsets = [0, 1, 0], sizes = [8, 8, 64], strides = [1, 1, 1]} : vector<10x10x64xf32> to vector<8x8x64xf32>
    %20 = vector.shape_cast %19 : vector<8x8x64xf32> to vector<64x64xf32>
    %21 = vector.extract_strided_slice %16 {offsets = [0, 2, 0], sizes = [8, 8, 64], strides = [1, 1, 1]} : vector<10x10x64xf32> to vector<8x8x64xf32>
    %22 = vector.shape_cast %21 : vector<8x8x64xf32> to vector<64x64xf32>
    %23 = vector.extract_strided_slice %16 {offsets = [1, 0, 0], sizes = [8, 8, 64], strides = [1, 1, 1]} : vector<10x10x64xf32> to vector<8x8x64xf32>
    %24 = vector.shape_cast %23 : vector<8x8x64xf32> to vector<64x64xf32>
    %25 = vector.extract_strided_slice %16 {offsets = [1, 1, 0], sizes = [8, 8, 64], strides = [1, 1, 1]} : vector<10x10x64xf32> to vector<8x8x64xf32>
    %26 = vector.shape_cast %25 : vector<8x8x64xf32> to vector<64x64xf32>
    %27 = vector.extract_strided_slice %16 {offsets = [1, 2, 0], sizes = [8, 8, 64], strides = [1, 1, 1]} : vector<10x10x64xf32> to vector<8x8x64xf32>
    %28 = vector.shape_cast %27 : vector<8x8x64xf32> to vector<64x64xf32>
    %29 = vector.extract_strided_slice %16 {offsets = [2, 0, 0], sizes = [8, 8, 64], strides = [1, 1, 1]} : vector<10x10x64xf32> to vector<8x8x64xf32>
    %30 = vector.shape_cast %29 : vector<8x8x64xf32> to vector<64x64xf32>
    %31 = vector.extract_strided_slice %16 {offsets = [2, 1, 0], sizes = [8, 8, 64], strides = [1, 1, 1]} : vector<10x10x64xf32> to vector<8x8x64xf32>
    %32 = vector.shape_cast %31 : vector<8x8x64xf32> to vector<64x64xf32>
    %33 = vector.extract_strided_slice %16 {offsets = [2, 2, 0], sizes = [8, 8, 64], strides = [1, 1, 1]} : vector<10x10x64xf32> to vector<8x8x64xf32>
    %34 = vector.shape_cast %33 : vector<8x8x64xf32> to vector<64x64xf32>
    %35 = tpu.concatenate %18, %20, %22, %24, %26, %28, %30, %32, %34 in 1 : vector<64x64xf32>, vector<64x64xf32>, vector<64x64xf32>, vector<64x64xf32>, vector<64x64xf32>, vector<64x64xf32>, vector<64x64xf32>, vector<64x64xf32>, vector<64x64xf32> -> vector<64x576xf32>
    %c0_11 = arith.constant 0 : index
    %c0_12 = arith.constant 0 : index
    %36 = vector.load %arg4[%c0_11, %c0_12] : memref<576x128xf32, #tpu.memory_space<vmem>>, vector<576x128xf32>
    %cst_13 = arith.constant dense<0.000000e+00> : vector<64x128xf32>
    %37 = tpu.matmul %35, %36, %cst_13 {dimension_numbers = #tpu.dot_dimension_numbers<[1], [0], [0], [1], [0, 0, 1, 1], [], []>} : vector<64x576xf32>, vector<576x128xf32>, vector<64x128xf32> -> vector<64x128xf32>
    %c0_14 = arith.constant 0 : index
    %c0_15 = arith.constant 0 : index
    %38 = vector.load %arg5[%c0_14, %c0_15] : memref<1x128xf32, #tpu.memory_space<vmem>>, vector<1x128xf32>
    %39 = vector.broadcast %38 : vector<1x128xf32> to vector<64x128xf32>
    %40 = arith.addf %37, %39 : vector<64x128xf32>
    %cst_16 = arith.constant 0.000000e+00 : f32
    %41 = vector.broadcast %cst_16 : f32 to vector<64x128xf32>
    %42 = arith.maximumf %40, %41 : vector<64x128xf32>
    %43 = vector.shape_cast %42 : vector<64x128xf32> to vector<32x2x128xf32>
    %cst_17 = arith.constant dense<0xFF800000> : vector<32x128xf32>
    %44 = vector.multi_reduction <maximumf>, %43, %cst_17 [1] : vector<32x2x128xf32> to vector<32x128xf32>
    %45 = vector.shape_cast %44 : vector<32x128xf32> to vector<4x2x4x128xf32>
    %cst_18 = arith.constant dense<0xFF800000> : vector<4x4x128xf32>
    %46 = vector.multi_reduction <maximumf>, %45, %cst_18 [1] : vector<4x2x4x128xf32> to vector<4x4x128xf32>
    %47 = vector.shape_cast %46 : vector<4x4x128xf32> to vector<16x128xf32>
    %c0_19 = arith.constant 0 : index
    %c0_20 = arith.constant 0 : index
    %48 = vector.load %arg6[%c0_19, %c0_20] : memref<128x96xf32, #tpu.memory_space<vmem>>, vector<128x96xf32>
    %cst_21 = arith.constant dense<0.000000e+00> : vector<16x96xf32>
    %49 = tpu.matmul %47, %48, %cst_21 {dimension_numbers = #tpu.dot_dimension_numbers<[1], [0], [0], [1], [0, 0, 1, 1], [], []>} : vector<16x128xf32>, vector<128x96xf32>, vector<16x96xf32> -> vector<16x96xf32>
    %c0_22 = arith.constant 0 : index
    %c0_23 = arith.constant 0 : index
    %50 = vector.load %arg7[%c0_22, %c0_23] : memref<1x96xf32, #tpu.memory_space<vmem>>, vector<1x96xf32>
    %51 = vector.broadcast %50 : vector<1x96xf32> to vector<16x96xf32>
    %52 = arith.addf %49, %51 : vector<16x96xf32>
    %53 = vector.extract_strided_slice %52 {offsets = [0, 0], sizes = [16, 32], strides = [1, 1]} : vector<16x96xf32> to vector<16x32xf32>
    %54 = vector.extract_strided_slice %52 {offsets = [0, 32], sizes = [16, 32], strides = [1, 1]} : vector<16x96xf32> to vector<16x32xf32>
    %55 = vector.extract_strided_slice %52 {offsets = [0, 64], sizes = [16, 32], strides = [1, 1]} : vector<16x96xf32> to vector<16x32xf32>
    %56 = tpu.transpose %54, [1, 0] : vector<16x32xf32> -> vector<32x16xf32>
    %cst_24 = arith.constant dense<0.000000e+00> : vector<16x16xf32>
    %57 = tpu.matmul %53, %56, %cst_24 {dimension_numbers = #tpu.dot_dimension_numbers<[1], [0], [0], [1], [0, 0, 1, 1], [], []>} : vector<16x32xf32>, vector<32x16xf32>, vector<16x16xf32> -> vector<16x16xf32>
    %cst_25 = arith.constant dense<0xFF800000> : vector<16xf32>
    %58 = vector.multi_reduction <maximumf>, %57, %cst_25 [1] : vector<16x16xf32> to vector<16xf32>
    %59 = vector.shape_cast %58 : vector<16xf32> to vector<16x1xf32>
    %60 = vector.broadcast %59 : vector<16x1xf32> to vector<16x16xf32>
    %61 = arith.subf %57, %60 : vector<16x16xf32>
    %62 = math.exp %61 : vector<16x16xf32>
    %cst_26 = arith.constant dense<0.000000e+00> : vector<16xf32>
    %63 = vector.multi_reduction <add>, %62, %cst_26 [1] : vector<16x16xf32> to vector<16xf32>
    %64 = vector.shape_cast %63 : vector<16xf32> to vector<16x1xf32>
    %65 = tpu.reciprocal %64 {approx = true} : vector<16x1xf32> -> vector<16x1xf32>
    %66 = vector.broadcast %65 : vector<16x1xf32> to vector<16x16xf32>
    %67 = arith.mulf %62, %66 : vector<16x16xf32>
    %cst_27 = arith.constant dense<0.000000e+00> : vector<16x32xf32>
    %68 = tpu.matmul %67, %55, %cst_27 {dimension_numbers = #tpu.dot_dimension_numbers<[1], [0], [0], [1], [0, 0, 1, 1], [], []>} : vector<16x16xf32>, vector<16x32xf32>, vector<16x32xf32> -> vector<16x32xf32>
    %69 = vector.extract_strided_slice %68 {offsets = [0, 0], sizes = [4, 32], strides = [1, 1]} : vector<16x32xf32> to vector<4x32xf32>
    %70 = vector.extract_strided_slice %68 {offsets = [4, 0], sizes = [4, 32], strides = [1, 1]} : vector<16x32xf32> to vector<4x32xf32>
    %71 = vector.extract_strided_slice %68 {offsets = [8, 0], sizes = [4, 32], strides = [1, 1]} : vector<16x32xf32> to vector<4x32xf32>
    %72 = vector.extract_strided_slice %68 {offsets = [12, 0], sizes = [4, 32], strides = [1, 1]} : vector<16x32xf32> to vector<4x32xf32>
    %73 = tpu.concatenate %69, %70, %71, %72 in 1 : vector<4x32xf32>, vector<4x32xf32>, vector<4x32xf32>, vector<4x32xf32> -> vector<4x128xf32>
    %c0_28 = arith.constant 0 : index
    %c0_29 = arith.constant 0 : index
    %c0_30 = arith.constant 0 : index
    %74 = vector.load %arg8[%c0_28, %c0_29, %c0_30] : memref<1x4x128xf32, #tpu.memory_space<vmem>>, vector<1x4x128xf32>
    %75 = vector.shape_cast %74 : vector<1x4x128xf32> to vector<4x128xf32>
    %76 = vector.shape_cast %73 : vector<4x128xf32> to vector<1x4x128xf32>
    tpu.vector_store %arg8[%c0_28, %c0_29, %c0_30], %76 {strides = array<i32>} : memref<1x4x128xf32, #tpu.memory_space<vmem>>, vector<1x4x128xf32>,
    return
  }
  func.func @transform_0(%arg0: i32) -> (i32, i32, i32) {
    %c0_i32 = arith.constant 0 : i32
    %c0_i32_0 = arith.constant 0 : i32
    %c0_i32_1 = arith.constant 0 : i32
    return %arg0, %c0_i32, %c0_i32_0 : i32, i32, i32
  }
  func.func @transform_1(%arg0: i32) -> (i32, i32) {
    %c0_i32 = arith.constant 0 : i32
    %c0_i32_0 = arith.constant 0 : i32
    %c0_i32_1 = arith.constant 0 : i32
    return %c0_i32, %c0_i32_0 : i32, i32
  }
  func.func @transform_2(%arg0: i32) -> (i32, i32) {
    %c0_i32 = arith.constant 0 : i32
    %c0_i32_0 = arith.constant 0 : i32
    %c0_i32_1 = arith.constant 0 : i32
    return %c0_i32, %c0_i32_0 : i32, i32
  }
  func.func @transform_3(%arg0: i32) -> (i32, i32) {
    %c0_i32 = arith.constant 0 : i32
    %c0_i32_0 = arith.constant 0 : i32
    %c0_i32_1 = arith.constant 0 : i32
    return %c0_i32, %c0_i32_0 : i32, i32
  }
  func.func @transform_4(%arg0: i32) -> (i32, i32) {
    %c0_i32 = arith.constant 0 : i32
    %c0_i32_0 = arith.constant 0 : i32
    %c0_i32_1 = arith.constant 0 : i32
    return %c0_i32, %c0_i32_0 : i32, i32
  }
  func.func @transform_5(%arg0: i32) -> (i32, i32) {
    %c0_i32 = arith.constant 0 : i32
    %c0_i32_0 = arith.constant 0 : i32
    %c0_i32_1 = arith.constant 0 : i32
    return %c0_i32, %c0_i32_0 : i32, i32
  }
  func.func @transform_6(%arg0: i32) -> (i32, i32) {
    %c0_i32 = arith.constant 0 : i32
    %c0_i32_0 = arith.constant 0 : i32
    %c0_i32_1 = arith.constant 0 : i32
    return %c0_i32, %c0_i32_0 : i32, i32
  }
  func.func @transform_7(%arg0: i32) -> (i32, i32, i32) {
    %c0_i32 = arith.constant 0 : i32
    %c0_i32_0 = arith.constant 0 : i32
    %c0_i32_1 = arith.constant 0 : i32
    return %arg0, %c0_i32, %c0_i32_0 : i32, i32, i32
  }
}

</mosaic_0001>

<llo_original>
// kernel: cnn_with_attention.1
$region0: #{cnn_with_attention.1}
  #allocation0 [shape = 'u32[]', space=smem, size = 0x4, offset = 0x4, fixed_abs, tag = 'smem constant byte address 0x4 - core index']
  #allocation1 [shape = 'u32[144,128]{1,0:T(1,128)}', space=vmem, size = 0x12000, scoped, tag = 'internal scratch']
  %s0 = inlined_call_operand.vmem [shape: f32[2,256,36], index: 0, kind: input, shape index: {}]
  %s1 = inlined_call_operand.vmem [shape: f32[36,64], index: 1, kind: input, shape index: {}]
  %s2 = inlined_call_operand.vmem [shape: f32[1,64], index: 2, kind: input, shape index: {}]
  %s3 = inlined_call_operand.vmem [shape: f32[576,128], index: 3, kind: input, shape index: {}]
  %s4 = inlined_call_operand.vmem [shape: f32[1,128], index: 4, kind: input, shape index: {}]
  %s5 = inlined_call_operand.vmem [shape: f32[128,96], index: 5, kind: input, shape index: {}]
  %s6 = inlined_call_operand.vmem [shape: f32[1,96], index: 6, kind: input, shape index: {}]
  %s7 = inlined_call_operand.vmem [shape: f32[2,4,128], index: 7, kind: output, shape index: {}]
  %s8 = sld [smem:[#allocation0]]
  $region61: #{cnn_with_attention.1} parent=0
    _
  %s10 = ssub.s32 1, %s8
  %s11 = scalar_select 0, %s10, %s8
  loop: start=0, step=1, limit=4
  $region2: #{cnn_with_attention.1} parent=0 // loop_pre_header
    _
  $region3: #{cnn_with_attention.1} parent=0 // loop_header
    %s13 = sphi 0, %s17
    %p14 = scmp.ge.s32.totalorder %s13, 4
    %s23 = sphi 0, %s25
    %s26 = sphi 0, %s23
    %s27 = sphi 0, %s26
    %s43 = sphi 0, %s27
    %s47 = sphi 0, %s47
    %s49 = sphi 0, %s47
    %s50 = sphi 0, %s49
    %s64 = sphi 0, %s50
    %s68 = sphi 0, %s68
    %s70 = sphi 0, %s68
    %s71 = sphi 0, %s70
    %s85 = sphi 0, %s71
    %s89 = sphi 0, %s89
    %s91 = sphi 0, %s89
    %s92 = sphi 0, %s91
    %s106 = sphi 0, %s92
    %s110 = sphi 0, %s110
    %s112 = sphi 0, %s110
    %s113 = sphi 0, %s112
    %s127 = sphi 0, %s113
    %s131 = sphi 0, %s131
    %s133 = sphi 0, %s131
    %s134 = sphi 0, %s133
    %s148 = sphi 0, %s134
    %s152 = sphi 0, %s152
    %s154 = sphi 0, %s152
    %s155 = sphi 0, %s154
    %s169 = sphi 0, %s155
    %s175 = sphi 0, %s177
    %s178 = sphi 0, %s175
    %s179 = sphi 0, %s178
    %s195 = sphi 0, %s179
  $region4: #{cnn_with_attention.1} parent=0 // loop_header_branch
    %16 = sbr.rel (%p14) target = $region8
  $region5: #{cnn_with_attention.1} parent=0 // loop_body
    %s18 = ssub.s32 %s13, 1
    %s19 = ssub.s32 %s13, 2
    %s20 = sadd.s32 %s13, 1
    %s21 = ssub.s32 %s13, %s20
    %p22 = scmp.eq.s32.totalorder %s21, 0
    %s24 = sadd.s32 %s23, 1
    %s25 = scalar_select %p22, %s23, %s24
    %p28 = pneg %p22
    %p29 = scmp.eq.s32.totalorder %s13, 1
    %p30 = por %p28, %p29
    %p31 = scmp.ne.s32.totalorder %s23, %s26
    %p32 = scmp.eq.s32.totalorder %s13, 0
    %p33 = por %p31, %p32
    %p34 = scmp.ne.s32.totalorder %s23, %s26
    %p35 = scmp.eq.s32.totalorder %s18, 1
    %p36 = por %p34, %p35
    %p37 = scmp.ne.s32.totalorder %s26, %s27
    %p38 = scmp.eq.s32.totalorder %s18, 0
    %p39 = por %p37, %p38
    %p40 = scmp.ne.s32.totalorder %s26, %s27
    %p41 = scmp.eq.s32.totalorder %s19, 1
    %p42 = por %p40, %p41
    %p44 = scmp.ne.s32.totalorder %s27, %s43
    %p45 = scmp.eq.s32.totalorder %s19, 0
    %p46 = por %p44, %p45
    %s48 = sadd.s32 %s47, 1
    %p51 = scmp.eq.s32.totalorder %s13, 1
    %p52 = scmp.ne.s32.totalorder %s47, %s49
    %p53 = scmp.eq.s32.totalorder %s13, 0
    %p54 = por %p52, %p53
    %p55 = scmp.ne.s32.totalorder %s47, %s49
    %p56 = scmp.eq.s32.totalorder %s18, 1
    %p57 = por %p55, %p56
    %p58 = scmp.ne.s32.totalorder %s49, %s50
    %p59 = scmp.eq.s32.totalorder %s18, 0
    %p60 = por %p58, %p59
    %p61 = scmp.ne.s32.totalorder %s49, %s50
    %p62 = scmp.eq.s32.totalorder %s19, 1
    %p63 = por %p61, %p62
    %p65 = scmp.ne.s32.totalorder %s50, %s64
    %p66 = scmp.eq.s32.totalorder %s19, 0
    %p67 = por %p65, %p66
    %s69 = sadd.s32 %s68, 1
    %p72 = scmp.eq.s32.totalorder %s13, 1
    %p73 = scmp.ne.s32.totalorder %s68, %s70
    %p74 = scmp.eq.s32.totalorder %s13, 0
    %p75 = por %p73, %p74
    %p76 = scmp.ne.s32.totalorder %s68, %s70
    %p77 = scmp.eq.s32.totalorder %s18, 1
    %p78 = por %p76, %p77
    %p79 = scmp.ne.s32.totalorder %s70, %s71
    %p80 = scmp.eq.s32.totalorder %s18, 0
    %p81 = por %p79, %p80
    %p82 = scmp.ne.s32.totalorder %s70, %s71
    %p83 = scmp.eq.s32.totalorder %s19, 1
    %p84 = por %p82, %p83
    %p86 = scmp.ne.s32.totalorder %s71, %s85
    %p87 = scmp.eq.s32.totalorder %s19, 0
    %p88 = por %p86, %p87
    %s90 = sadd.s32 %s89, 1
    %p93 = scmp.eq.s32.totalorder %s13, 1
    %p94 = scmp.ne.s32.totalorder %s89, %s91
    %p95 = scmp.eq.s32.totalorder %s13, 0
    %p96 = por %p94, %p95
    %p97 = scmp.ne.s32.totalorder %s89, %s91
    %p98 = scmp.eq.s32.totalorder %s18, 1
    %p99 = por %p97, %p98
    %p100 = scmp.ne.s32.totalorder %s91, %s92
    %p101 = scmp.eq.s32.totalorder %s18, 0
    %p102 = por %p100, %p101
    %p103 = scmp.ne.s32.totalorder %s91, %s92
    %p104 = scmp.eq.s32.totalorder %s19, 1
    %p105 = por %p103, %p104
    %p107 = scmp.ne.s32.totalorder %s92, %s106
    %p108 = scmp.eq.s32.totalorder %s19, 0
    %p109 = por %p107, %p108
    %s111 = sadd.s32 %s110, 1
    %p114 = scmp.eq.s32.totalorder %s13, 1
    %p115 = scmp.ne.s32.totalorder %s110, %s112
    %p116 = scmp.eq.s32.totalorder %s13, 0
    %p117 = por %p115, %p116
    %p118 = scmp.ne.s32.totalorder %s110, %s112
    %p119 = scmp.eq.s32.totalorder %s18, 1
    %p120 = por %p118, %p119
    %p121 = scmp.ne.s32.totalorder %s112, %s113
    %p122 = scmp.eq.s32.totalorder %s18, 0
    %p123 = por %p121, %p122
    %p124 = scmp.ne.s32.totalorder %s112, %s113
    %p125 = scmp.eq.s32.totalorder %s19, 1
    %p126 = por %p124, %p125
    %p128 = scmp.ne.s32.totalorder %s113, %s127
    %p129 = scmp.eq.s32.totalorder %s19, 0
    %p130 = por %p128, %p129
    %s132 = sadd.s32 %s131, 1
    %p135 = scmp.eq.s32.totalorder %s13, 1
    %p136 = scmp.ne.s32.totalorder %s131, %s133
    %p137 = scmp.eq.s32.totalorder %s13, 0
    %p138 = por %p136, %p137
    %p139 = scmp.ne.s32.totalorder %s131, %s133
    %p140 = scmp.eq.s32.totalorder %s18, 1
    %p141 = por %p139, %p140
    %p142 = scmp.ne.s32.totalorder %s133, %s134
    %p143 = scmp.eq.s32.totalorder %s18, 0
    %p144 = por %p142, %p143
    %p145 = scmp.ne.s32.totalorder %s133, %s134
    %p146 = scmp.eq.s32.totalorder %s19, 1
    %p147 = por %p145, %p146
    %p149 = scmp.ne.s32.totalorder %s134, %s148
    %p150 = scmp.eq.s32.totalorder %s19, 0
    %p151 = por %p149, %p150
    %s153 = sadd.s32 %s152, 1
    %p156 = scmp.eq.s32.totalorder %s13, 1
    %p157 = scmp.ne.s32.totalorder %s152, %s154
    %p158 = scmp.eq.s32.totalorder %s13, 0
    %p159 = por %p157, %p158
    %p160 = scmp.ne.s32.totalorder %s152, %s154
    %p161 = scmp.eq.s32.totalorder %s18, 1
    %p162 = por %p160, %p161
    %p163 = scmp.ne.s32.totalorder %s154, %s155
    %p164 = scmp.eq.s32.totalorder %s18, 0
    %p165 = por %p163, %p164
    %p166 = scmp.ne.s32.totalorder %s154, %s155
    %p167 = scmp.eq.s32.totalorder %s19, 1
    %p168 = por %p166, %p167
    %p170 = scmp.ne.s32.totalorder %s155, %s169
    %p171 = scmp.eq.s32.totalorder %s19, 0
    %p172 = por %p170, %p171
    %s173 = ssub.s32 %s13, %s20
    %p174 = scmp.eq.s32.totalorder %s173, 0
    %s176 = sadd.s32 %s175, 1
    %s177 = scalar_select %p174, %s175, %s176
    %p180 = pneg %p174
    %p181 = scmp.eq.s32.totalorder %s13, 1
    %p182 = por %p180, %p181
    %p183 = scmp.ne.s32.totalorder %s175, %s178
    %p184 = scmp.eq.s32.totalorder %s13, 0
    %p185 = por %p183, %p184
    %p186 = scmp.ne.s32.totalorder %s175, %s178
    %p187 = scmp.eq.s32.totalorder %s18, 1
    %p188 = por %p186, %p187
    %p189 = scmp.ne.s32.totalorder %s178, %s179
    %p190 = scmp.eq.s32.totalorder %s18, 0
    %p191 = por %p189, %p190
    %p192 = scmp.ne.s32.totalorder %s178, %s179
    %p193 = scmp.eq.s32.totalorder %s19, 1
    %p194 = por %p192, %p193
    %p196 = scmp.ne.s32.totalorder %s179, %s195
    %p197 = scmp.eq.s32.totalorder %s19, 0
    %p198 = por %p196, %p197
    %p199 = scmp.le.s32.totalorder 1, %s13
    %p200 = scmp.lt.s32.totalorder %s13, 3
    %p201 = pnand %p199, %p200
    %p202 = pneg %p201
    // Predicated region
    $region9: #{cnn_with_attention.1} parent=5 // pred_check
      _
    $region10: #{cnn_with_attention.1} parent=5 // pred_check_branch
      %204 = sbr.rel (%p201) target = $region12
    $region11: #{cnn_with_attention.1} parent=5 // pred_region
      %s205 = ssub.s32 %s13, 1
      // Predicated region
      $region13: #{cnn_with_attention.1} parent=11 // pred_check
        %p206 = pneg %p60
      $region14: #{cnn_with_attention.1} parent=11 // pred_check_branch
        %208 = sbr.rel (%p206) target = $region16
      $region15: #{cnn_with_attention.1} parent=11 // pred_region
        _
      $region16: #{cnn_with_attention.1} parent=11 // pred_fallthru
        _
      // Predicated region
      $region17: #{cnn_with_attention.1} parent=11 // pred_check
        %p209 = pneg %p81
      $region18: #{cnn_with_attention.1} parent=11 // pred_check_branch
        %211 = sbr.rel (%p209) target = $region20
      $region19: #{cnn_with_attention.1} parent=11 // pred_region
        _
      $region20: #{cnn_with_attention.1} parent=11 // pred_fallthru
        _
      // Predicated region
      $region21: #{cnn_with_attention.1} parent=11 // pred_check
        %p212 = pneg %p102
      $region22: #{cnn_with_attention.1} parent=11 // pred_check_branch
        %214 = sbr.rel (%p212) target = $region24
      $region23: #{cnn_with_attention.1} parent=11 // pred_region
        _
      $region24: #{cnn_with_attention.1} parent=11 // pred_fallthru
        _
      // Predicated region
      $region25: #{cnn_with_attention.1} parent=11 // pred_check
        %p215 = pneg %p123
      $region26: #{cnn_with_attention.1} parent=11 // pred_check_branch
        %217 = sbr.rel (%p215) target = $region28
      $region27: #{cnn_with_attention.1} parent=11 // pred_region
        _
      $region28: #{cnn_with_attention.1} parent=11 // pred_fallthru
        _
      // Predicated region
      $region29: #{cnn_with_attention.1} parent=11 // pred_check
        %p218 = pneg %p144
      $region30: #{cnn_with_attention.1} parent=11 // pred_check_branch
        %220 = sbr.rel (%p218) target = $region32
      $region31: #{cnn_with_attention.1} parent=11 // pred_region
        _
      $region32: #{cnn_with_attention.1} parent=11 // pred_fallthru
        _
      // Predicated region
      $region33: #{cnn_with_attention.1} parent=11 // pred_check
        %p221 = pneg %p165
      $region34: #{cnn_with_attention.1} parent=11 // pred_check_branch
        %223 = sbr.rel (%p221) target = $region36
      $region35: #{cnn_with_attention.1} parent=11 // pred_region
        _
      $region36: #{cnn_with_attention.1} parent=11 // pred_fallthru
        _
    $region12: #{cnn_with_attention.1} parent=5 // pred_fallthru
      _
    %p224 = scmp.lt.s32.totalorder %s13, 2
    // Predicated region
    $region37: #{cnn_with_attention.1} parent=5 // pred_check
      %p225 = pneg %p224
    $region38: #{cnn_with_attention.1} parent=5 // pred_check_branch
      %227 = sbr.rel (%p225) target = $region40
    $region39: #{cnn_with_attention.1} parent=5 // pred_region
      // Predicated region
      $region41: #{cnn_with_attention.1} parent=39 // pred_check
        %p228 = pneg %p33
      $region42: #{cnn_with_attention.1} parent=39 // pred_check_branch
        %230 = sbr.rel (%p228) target = $region44
      $region43: #{cnn_with_attention.1} parent=39 // pred_region
        %p231 = scmp.lt.s32.totalorder %s13, 1
        %s232 = scalar_select %p231, %s13, 1
        %s233 = smul.addr %s232, 32
        %s234 = smul.addr %s233, 8
        %s235 = scalar_lea.vmem %s0, %s234
      $region44: #{cnn_with_attention.1} parent=39 // pred_fallthru
        _
    $region40: #{cnn_with_attention.1} parent=5 // pred_fallthru
      _
    %p236 = scmp.le.s32.totalorder 1, %s13
    %p237 = scmp.lt.s32.totalorder %s13, 3
    %p238 = pnand %p236, %p237
    %p239 = pneg %p238
    // Predicated region
    $region45: #{cnn_with_attention.1} parent=5 // pred_check
      _
    $region46: #{cnn_with_attention.1} parent=5 // pred_check_branch
      %241 = sbr.rel (%p238) target = $region48
    $region47: #{cnn_with_attention.1} parent=5 // pred_region
      %s242 = ssub.s32 %s13, 1
      %p243 = scmp.lt.s32.totalorder %s18, 1
      %s244 = scalar_select %p243, %s18, 1
      %s245 = smul.addr %s244, 32
      %s246 = smul.addr %s245, 8
      %s247 = scalar_lea.vmem %s0, %s246
      %p248 = pneg %p39
      %p249 = pneg %p36
      %p250 = pneg %p60
      %p251 = pneg %p57
      %p252 = pneg %p81
      %p253 = pneg %p78
      %p254 = pneg %p102
      %p255 = pneg %p99
      %p256 = pneg %p123
      %p257 = pneg %p120
      %p258 = pneg %p144
      %p259 = pneg %p141
      %p260 = pneg %p165
      %p261 = pneg %p162
      %p262 = pneg %p191
      %p263 = pneg %p188
      %p264 = scmp.lt.s32.totalorder %s18, 1
      %s265 = scalar_select %p264, %s18, 1
      %s266 = smul.addr %s265, 4
      %s267 = scalar_lea.vmem %s7, %s266
      %p268 = scmp.lt.s32.totalorder %s18, 1
      %s269 = scalar_select %p268, %s18, 1
      %s270 = smul.addr %s269, 32
      %s271 = smul.addr %s270, 8
      %s272 = scalar_lea.vmem %s0, %s271
      %p273 = scmp.lt.s32.totalorder %s18, 1
      %s274 = scalar_select %p273, %s18, 1
      %s275 = smul.addr %s274, 4
      %s276 = scalar_lea.vmem %s7, %s275
      %v277 = vld [vmem:[%s272] sm:$0xff]
      %v278 = vld [vmem:[%s272 + $0x8] sm:$0xff]
      %v279 = vld [vmem:[%s272 + $0x10] sm:$0xff]
      %v280 = vld [vmem:[%s272 + $0x18] sm:$0xff]
      %v281 = vld [vmem:[%s272 + $0x20] sm:$0xff]
      %v282 = vld [vmem:[%s272 + $0x28] sm:$0xff]
      %v283 = vld [vmem:[%s272 + $0x30] sm:$0xff]
      %v284 = vld [vmem:[%s272 + $0x38] sm:$0xff]
      %v285 = vld [vmem:[%s272 + $0x40] sm:$0xff]
      %v286 = vld [vmem:[%s272 + $0x48] sm:$0xff]
      %v287 = vld [vmem:[%s272 + $0x50] sm:$0xff]
      %v288 = vld [vmem:[%s272 + $0x58] sm:$0xff]
      %v289 = vld [vmem:[%s272 + $0x60] sm:$0xff]
      %v290 = vld [vmem:[%s272 + $0x68] sm:$0xff]
      %v291 = vld [vmem:[%s272 + $0x70] sm:$0xff]
      %v292 = vld [vmem:[%s272 + $0x78] sm:$0xff]
      %v293 = vld [vmem:[%s272 + $0x80] sm:$0xff]
      %v294 = vld [vmem:[%s272 + $0x88] sm:$0xff]
      %v295 = vld [vmem:[%s272 + $0x90] sm:$0xff]
      %v296 = vld [vmem:[%s272 + $0x98] sm:$0xff]
      %v297 = vld [vmem:[%s272 + $0xa0] sm:$0xff]
      %v298 = vld [vmem:[%s272 + $0xa8] sm:$0xff]
      %v299 = vld [vmem:[%s272 + $0xb0] sm:$0xff]
      %v300 = vld [vmem:[%s272 + $0xb8] sm:$0xff]
      %v301 = vld [vmem:[%s272 + $0xc0] sm:$0xff]
      %v302 = vld [vmem:[%s272 + $0xc8] sm:$0xff]
      %v303 = vld [vmem:[%s272 + $0xd0] sm:$0xff]
      %v304 = vld [vmem:[%s272 + $0xd8] sm:$0xff]
      %v305 = vld [vmem:[%s272 + $0xe0] sm:$0xff]
      %v306 = vld [vmem:[%s272 + $0xe8] sm:$0xff]
      %v307 = vld [vmem:[%s272 + $0xf0] sm:$0xff]
      %v308 = vld [vmem:[%s272 + $0xf8] sm:$0xff]
      %v309 = vld [vmem:[%s1] sm:$0xff]
      %v310 = vld [vmem:[%s1 + $0x8] sm:$0xff]
      %v311 = vld [vmem:[%s1 + $0x10] sm:$0xff]
      %v312 = vld [vmem:[%s1 + $0x18] sm:$0xff]
      %v313 = vld [vmem:[%s1 + $0x20] sm:$0xf]
      %v314 = vld [vmem:[%s2] sm:$0x1]
      %v316 = vlaneseq
      %v317 = vshrl.u32 %v316, 7
      %v318 = vsub.s32 0, %v317
      %v319 = vrot.slane %v314, %v318
      %vm321 = vcmask 293888
      %v323 = vsel %vm321, %v277, 0
      %v326 = vsel %vm321, %v278, 0
      %v329 = vsel %vm321, %v279, 0
      %v332 = vsel %vm321, %v280, 0
      %v335 = vsel %vm321, %v281, 0
      %v338 = vsel %vm321, %v282, 0
      %v341 = vsel %vm321, %v283, 0
      %v344 = vsel %vm321, %v284, 0
      %v347 = vsel %vm321, %v285, 0
      %v350 = vsel %vm321, %v286, 0
      %v353 = vsel %vm321, %v287, 0
      %v356 = vsel %vm321, %v288, 0
      %v359 = vsel %vm321, %v289, 0
      %v362 = vsel %vm321, %v290, 0
      %v365 = vsel %vm321, %v291, 0
      %v368 = vsel %vm321, %v292, 0
      %v371 = vsel %vm321, %v293, 0
      %v374 = vsel %vm321, %v294, 0
      %v377 = vsel %vm321, %v295, 0
      %v380 = vsel %vm321, %v296, 0
      %v383 = vsel %vm321, %v297, 0
      %v386 = vsel %vm321, %v298, 0
      %v389 = vsel %vm321, %v299, 0
      %v392 = vsel %vm321, %v300, 0
      %v395 = vsel %vm321, %v301, 0
      %v398 = vsel %vm321, %v302, 0
      %v401 = vsel %vm321, %v303, 0
      %v404 = vsel %vm321, %v304, 0
      %v407 = vsel %vm321, %v305, 0
      %v410 = vsel %vm321, %v306, 0
      %v413 = vsel %vm321, %v307, 0
      %v416 = vsel %vm321, %v308, 0
      %vm418 = vcmask 1043456
      %v420 = vsel %vm418, %v313, 0
      %422 = vmatprep.subr.mxu0 0.0
      %423 = vmatpush1.msra.mxu0 %v309
      %424 = vmatprep.subr.mxu0 0.0
      %425 = vmatpush1.msra.mxu0 %v310
      %426 = vmatprep.subr.mxu0 0.0
      %427 = vmatpush1.msra.mxu0 %v311
      %428 = vmatprep.subr.mxu0 0.0
      %429 = vmatpush1.msra.mxu0 %v312
      %430 = vmatprep.subr.mxu0 0.0
      %431 = vmatpush1.msra.mxu0 %v420
      %432 = vmatprep.subr.mxu0 0.0
      %433 = vmatpush1.msra.mxu0 0.0
      %434 = vmatprep.subr.mxu0 0.0
      %435 = vmatpush1.msra.mxu0 0.0
      %436 = vmatprep.subr.mxu0 0.0
      %437 = vmatpush1.msra.mxu0 0.0
      %438 = vmatprep.subr.mxu0 0.0
      %439 = vmatpush1.msra.mxu0 0.0
      %440 = vmatprep.subr.mxu0 0.0
      %441 = vmatpush1.msra.mxu0 0.0
      %442 = vmatprep.subr.mxu0 0.0
      %443 = vmatpush1.msra.mxu0 0.0
      %444 = vmatprep.subr.mxu0 0.0
      %445 = vmatpush1.msra.mxu0 0.0
      %446 = vmatprep.subr.mxu0 0.0
      %447 = vmatpush1.msra.mxu0 0.0
      %448 = vmatprep.subr.mxu0 0.0
      %449 = vmatpush1.msra.mxu0 0.0
      %450 = vmatprep.subr.mxu0 0.0
      %451 = vmatpush1.msra.mxu0 0.0
      %452 = vmatprep.subr.mxu0 0.0
      %453 = vmatpush1.msra.mxu0 0.0
      %454 = vmatprep.subr.mxu0 0.0
      %455 = vmatpush1.msra.mxu0 0.0
      %456 = vmatprep.subr.mxu0 0.0
      %457 = vmatpush1.msra.mxu0 0.0
      %458 = vmatprep.subr.mxu0 0.0
      %459 = vmatpush1.msra.mxu0 0.0
      %460 = vmatprep.subr.mxu0 0.0
      %461 = vmatpush1.msra.mxu0 0.0
      %462 = vmatprep.subr.mxu0 0.0
      %463 = vmatpush1.msra.mxu0 0.0
      %464 = vmatprep.subr.mxu0 0.0
      %465 = vmatpush1.msra.mxu0 0.0
      %466 = vmatprep.subr.mxu0 0.0
      %467 = vmatpush1.msra.mxu0 0.0
      %468 = vmatprep.subr.mxu0 0.0
      %469 = vmatpush1.msra.mxu0 0.0
      %470 = vmatprep.subr.mxu0 0.0
      %471 = vmatpush1.msra.mxu0 0.0
      %472 = vmatprep.subr.mxu0 0.0
      %473 = vmatpush1.msra.mxu0 0.0
      %474 = vmatprep.subr.mxu0 0.0
      %475 = vmatpush1.msra.mxu0 0.0
      %476 = vmatprep.subr.mxu0 0.0
      %477 = vmatpush1.msra.mxu0 0.0
      %478 = vmatprep.subr.mxu0 0.0
      %479 = vmatpush1.msra.mxu0 0.0
      %480 = vmatprep.subr.mxu0 0.0
      %481 = vmatpush1.msra.mxu0 0.0
      %482 = vmatprep.subr.mxu0 0.0
      %483 = vmatpush1.msra.mxu0 0.0
      %484 = vmatprep.subr.mxu0 0.0
      %485 = vmatpush1.msra.mxu0 0.0
      %486 = vmatprep.mubr.f32.mxu0 0.0
      %487 = vmatmul.mubr.f32.gmra.mrb[0].mxu0 %v323
      %v488 = vpop.f32.mrb[0].mxu0
      %v489 = vadd.f32 %v319, %v488
      %v490 = vpop.f32.mrb[0].mxu0
      %491 = vmatprep.mubr.f32.mxu0 0.0
      %492 = vmatmul.mubr.f32.gmra.mrb[0].mxu0 %v326
      %v493 = vpop.f32.mrb[0].mxu0
      %v494 = vadd.f32 %v319, %v493
      %v495 = vpop.f32.mrb[0].mxu0
      %496 = vmatprep.mubr.f32.mxu0 0.0
      %497 = vmatmul.mubr.f32.gmra.mrb[0].mxu0 %v329
      %v498 = vpop.f32.mrb[0].mxu0
      %v499 = vadd.f32 %v319, %v498
      %v500 = vpop.f32.mrb[0].mxu0
      %501 = vmatprep.mubr.f32.mxu0 0.0
      %502 = vmatmul.mubr.f32.gmra.mrb[0].mxu0 %v332
      %v503 = vpop.f32.mrb[0].mxu0
      %v504 = vadd.f32 %v319, %v503
      %v505 = vpop.f32.mrb[0].mxu0
      %506 = vmatprep.mubr.f32.mxu0 0.0
      %507 = vmatmul.mubr.f32.gmra.mrb[0].mxu0 %v335
      %v508 = vpop.f32.mrb[0].mxu0
      %v509 = vadd.f32 %v319, %v508
      %v510 = vpop.f32.mrb[0].mxu0
      %511 = vmatprep.mubr.f32.mxu0 0.0
      %512 = vmatmul.mubr.f32.gmra.mrb[0].mxu0 %v338
      %v513 = vpop.f32.mrb[0].mxu0
      %v514 = vadd.f32 %v319, %v513
      %v515 = vpop.f32.mrb[0].mxu0
      %516 = vmatprep.mubr.f32.mxu0 0.0
      %517 = vmatmul.mubr.f32.gmra.mrb[0].mxu0 %v341
      %v518 = vpop.f32.mrb[0].mxu0
      %v519 = vadd.f32 %v319, %v518
      %v520 = vpop.f32.mrb[0].mxu0
      %521 = vmatprep.mubr.f32.mxu0 0.0
      %522 = vmatmul.mubr.f32.gmra.mrb[0].mxu0 %v344
      %v523 = vpop.f32.mrb[0].mxu0
      %v524 = vadd.f32 %v319, %v523
      %v525 = vpop.f32.mrb[0].mxu0
      %526 = vmatprep.mubr.f32.mxu0 0.0
      %527 = vmatmul.mubr.f32.gmra.mrb[0].mxu0 %v347
      %v528 = vpop.f32.mrb[0].mxu0
      %v529 = vadd.f32 %v319, %v528
      %v530 = vpop.f32.mrb[0].mxu0
      %531 = vmatprep.mubr.f32.mxu0 0.0
      %532 = vmatmul.mubr.f32.gmra.mrb[0].mxu0 %v350
      %v533 = vpop.f32.mrb[0].mxu0
      %v534 = vadd.f32 %v319, %v533
      %v535 = vpop.f32.mrb[0].mxu0
      %536 = vmatprep.mubr.f32.mxu0 0.0
      %537 = vmatmul.mubr.f32.gmra.mrb[0].mxu0 %v353
      %v538 = vpop.f32.mrb[0].mxu0
      %v539 = vadd.f32 %v319, %v538
      %v540 = vpop.f32.mrb[0].mxu0
      %541 = vmatprep.mubr.f32.mxu0 0.0
      %542 = vmatmul.mubr.f32.gmra.mrb[0].mxu0 %v356
      %v543 = vpop.f32.mrb[0].mxu0
      %v544 = vadd.f32 %v319, %v543
      %v545 = vpop.f32.mrb[0].mxu0
      %546 = vmatprep.mubr.f32.mxu0 0.0
      %547 = vmatmul.mubr.f32.gmra.mrb[0].mxu0 %v359
      %v548 = vpop.f32.mrb[0].mxu0
      %v549 = vadd.f32 %v319, %v548
      %v550 = vpop.f32.mrb[0].mxu0
      %551 = vmatprep.mubr.f32.mxu0 0.0
      %552 = vmatmul.mubr.f32.gmra.mrb[0].mxu0 %v362
      %v553 = vpop.f32.mrb[0].mxu0
      %v554 = vadd.f32 %v319, %v553
      %v555 = vpop.f32.mrb[0].mxu0
      %556 = vmatprep.mubr.f32.mxu0 0.0
      %557 = vmatmul.mubr.f32.gmra.mrb[0].mxu0 %v365
      %v558 = vpop.f32.mrb[0].mxu0
      %v559 = vadd.f32 %v319, %v558
      %v560 = vpop.f32.mrb[0].mxu0
      %561 = vmatprep.mubr.f32.mxu0 0.0
      %562 = vmatmul.mubr.f32.gmra.mrb[0].mxu0 %v368
      %v563 = vpop.f32.mrb[0].mxu0
      %v564 = vadd.f32 %v319, %v563
      %v565 = vpop.f32.mrb[0].mxu0
      %566 = vmatprep.mubr.f32.mxu0 0.0
      %567 = vmatmul.mubr.f32.gmra.mrb[0].mxu0 %v371
      %v568 = vpop.f32.mrb[0].mxu0
      %v569 = vadd.f32 %v319, %v568
      %v570 = vpop.f32.mrb[0].mxu0
      %571 = vmatprep.mubr.f32.mxu0 0.0
      %572 = vmatmul.mubr.f32.gmra.mrb[0].mxu0 %v374
      %v573 = vpop.f32.mrb[0].mxu0
      %v574 = vadd.f32 %v319, %v573
      %v575 = vpop.f32.mrb[0].mxu0
      %576 = vmatprep.mubr.f32.mxu0 0.0
      %577 = vmatmul.mubr.f32.gmra.mrb[0].mxu0 %v377
      %v578 = vpop.f32.mrb[0].mxu0
      %v579 = vadd.f32 %v319, %v578
      %v580 = vpop.f32.mrb[0].mxu0
      %581 = vmatprep.mubr.f32.mxu0 0.0
      %582 = vmatmul.mubr.f32.gmra.mrb[0].mxu0 %v380
      %v583 = vpop.f32.mrb[0].mxu0
      %v584 = vadd.f32 %v319, %v583
      %v585 = vpop.f32.mrb[0].mxu0
      %586 = vmatprep.mubr.f32.mxu0 0.0
      %587 = vmatmul.mubr.f32.gmra.mrb[0].mxu0 %v383
      %v588 = vpop.f32.mrb[0].mxu0
      %v589 = vadd.f32 %v319, %v588
      %v590 = vpop.f32.mrb[0].mxu0
      %591 = vmatprep.mubr.f32.mxu0 0.0
      %592 = vmatmul.mubr.f32.gmra.mrb[0].mxu0 %v386
      %v593 = vpop.f32.mrb[0].mxu0
      %v594 = vadd.f32 %v319, %v593
      %v595 = vpop.f32.mrb[0].mxu0
      %596 = vmatprep.mubr.f32.mxu0 0.0
      %597 = vmatmul.mubr.f32.gmra.mrb[0].mxu0 %v389
      %v598 = vpop.f32.mrb[0].mxu0
      %v599 = vadd.f32 %v319, %v598
      %v600 = vpop.f32.mrb[0].mxu0
      %601 = vmatprep.mubr.f32.mxu0 0.0
      %602 = vmatmul.mubr.f32.gmra.mrb[0].mxu0 %v392
      %v603 = vpop.f32.mrb[0].mxu0
      %v604 = vadd.f32 %v319, %v603
      %v605 = vpop.f32.mrb[0].mxu0
      %606 = vmatprep.mubr.f32.mxu0 0.0
      %607 = vmatmul.mubr.f32.gmra.mrb[0].mxu0 %v395
      %v608 = vpop.f32.mrb[0].mxu0
      %v609 = vadd.f32 %v319, %v608
      %v610 = vpop.f32.mrb[0].mxu0
      %611 = vmatprep.mubr.f32.mxu0 0.0
      %612 = vmatmul.mubr.f32.gmra.mrb[0].mxu0 %v398
      %v613 = vpop.f32.mrb[0].mxu0
      %v614 = vadd.f32 %v319, %v613
      %v615 = vpop.f32.mrb[0].mxu0
      %616 = vmatprep.mubr.f32.mxu0 0.0
      %617 = vmatmul.mubr.f32.gmra.mrb[0].mxu0 %v401
      %v618 = vpop.f32.mrb[0].mxu0
      %v619 = vadd.f32 %v319, %v618
      %v620 = vpop.f32.mrb[0].mxu0
      %621 = vmatprep.mubr.f32.mxu0 0.0
      %622 = vmatmul.mubr.f32.gmra.mrb[0].mxu0 %v404
      %v623 = vpop.f32.mrb[0].mxu0
      %v624 = vadd.f32 %v319, %v623
      %v625 = vpop.f32.mrb[0].mxu0
      %626 = vmatprep.mubr.f32.mxu0 0.0
      %627 = vmatmul.mubr.f32.gmra.mrb[0].mxu0 %v407
      %v628 = vpop.f32.mrb[0].mxu0
      %v629 = vadd.f32 %v319, %v628
      %v630 = vpop.f32.mrb[0].mxu0
      %631 = vmatprep.mubr.f32.mxu0 0.0
      %632 = vmatmul.mubr.f32.gmra.mrb[0].mxu0 %v410
      %v633 = vpop.f32.mrb[0].mxu0
      %v634 = vadd.f32 %v319, %v633
      %v635 = vpop.f32.mrb[0].mxu0
      %636 = vmatprep.mubr.f32.mxu0 0.0
      %637 = vmatmul.mubr.f32.gmra.mrb[0].mxu0 %v413
      %v638 = vpop.f32.mrb[0].mxu0
      %v639 = vadd.f32 %v319, %v638
      %v640 = vpop.f32.mrb[0].mxu0
      %641 = vmatprep.mubr.f32.mxu0 0.0
      %642 = vmatmul.mubr.f32.gmra.mrb[0].mxu0 %v416
      %v643 = vpop.f32.mrb[0].mxu0
      %v644 = vadd.f32 %v319, %v643
      %v645 = vpop.f32.mrb[0].mxu0
      %646 = vdwg.mxu0
      %v647 = vmax.f32 %v489, 0.0
      %v648 = vmax.f32 %v494, 0.0
      %v649 = vmax.f32 %v499, 0.0
      %v650 = vmax.f32 %v504, 0.0
      %v651 = vmax.f32 %v509, 0.0
      %v652 = vmax.f32 %v514, 0.0
      %v653 = vmax.f32 %v519, 0.0
      %v654 = vmax.f32 %v524, 0.0
      %v655 = vmax.f32 %v529, 0.0
      %v656 = vmax.f32 %v534, 0.0
      %v657 = vmax.f32 %v539, 0.0
      %v658 = vmax.f32 %v544, 0.0
      %v659 = vmax.f32 %v549, 0.0
      %v660 = vmax.f32 %v554, 0.0
      %v661 = vmax.f32 %v559, 0.0
      %v662 = vmax.f32 %v564, 0.0
      %v663 = vmax.f32 %v569, 0.0
      %v664 = vmax.f32 %v574, 0.0
      %v665 = vmax.f32 %v579, 0.0
      %v666 = vmax.f32 %v584, 0.0
      %v667 = vmax.f32 %v589, 0.0
      %v668 = vmax.f32 %v594, 0.0
      %v669 = vmax.f32 %v599, 0.0
      %v670 = vmax.f32 %v604, 0.0
      %v671 = vmax.f32 %v609, 0.0
      %v672 = vmax.f32 %v614, 0.0
      %v673 = vmax.f32 %v619, 0.0
      %v674 = vmax.f32 %v624, 0.0
      %v675 = vmax.f32 %v629, 0.0
      %v676 = vmax.f32 %v634, 0.0
      %v677 = vmax.f32 %v639, 0.0
      %v678 = vmax.f32 %v644, 0.0
      %v711 = vcombine.high %v647, %v647
      %v713 = vunpack.c.l.s4 1983009808
      %v714 = vunpack.c.0.s8 %v713
      %v715 = vlaneseq
      %v716 = vshrl.u32 %v715, 7
      %v717 = vsub.s32 %v714, %v716
      %v718 = vrot.slane %v647, %v717
      %v720 = vunpack.c.l.s4 1983009808
      %v721 = vunpack.c.0.s8 %v720
      %v722 = vlaneseq
      %v723 = vshrl.u32 %v722, 7
      %v724 = vsub.s32 %v721, %v723
      %v725 = vrot.slane %v711, %v724
      %v726 = vcombine.high %v718, %v718
      %v727 = vcombine.high %v725, %v725
      %v728 = vcombine.high %v648, %v648
      %v730 = vunpack.c.l.s4 1983009808
      %v731 = vunpack.c.0.s8 %v730
      %v732 = vlaneseq
      %v733 = vshrl.u32 %v732, 7
      %v734 = vsub.s32 %v731, %v733
      %v735 = vrot.slane %v648, %v734
      %v737 = vunpack.c.l.s4 1983009808
      %v738 = vunpack.c.0.s8 %v737
      %v739 = vlaneseq
      %v740 = vshrl.u32 %v739, 7
      %v741 = vsub.s32 %v738, %v740
      %v742 = vrot.slane %v728, %v741
      %v743 = vcombine.high %v735, %v735
      %v744 = vcombine.high %v742, %v742
      %v745 = vcombine.high %v649, %v649
      %v747 = vunpack.c.l.s4 1983009808
      %v748 = vunpack.c.0.s8 %v747
      %v749 = vlaneseq
      %v750 = vshrl.u32 %v749, 7
      %v751 = vsub.s32 %v748, %v750
      %v752 = vrot.slane %v649, %v751
      %v754 = vunpack.c.l.s4 1983009808
      %v755 = vunpack.c.0.s8 %v754
      %v756 = vlaneseq
      %v757 = vshrl.u32 %v756, 7
      %v758 = vsub.s32 %v755, %v757
      %v759 = vrot.slane %v745, %v758
      %v760 = vcombine.high %v752, %v752
      %v761 = vcombine.high %v759, %v759
      %v762 = vcombine.high %v650, %v650
      %v764 = vunpack.c.l.s4 1983009808
      %v765 = vunpack.c.0.s8 %v764
      %v766 = vlaneseq
      %v767 = vshrl.u32 %v766, 7
      %v768 = vsub.s32 %v765, %v767
      %v769 = vrot.slane %v650, %v768
      %v771 = vunpack.c.l.s4 1983009808
      %v772 = vunpack.c.0.s8 %v771
      %v773 = vlaneseq
      %v774 = vshrl.u32 %v773, 7
      %v775 = vsub.s32 %v772, %v774
      %v776 = vrot.slane %v762, %v775
      %v777 = vcombine.high %v769, %v769
      %v778 = vcombine.high %v776, %v776
      %v779 = vcombine.high %v651, %v651
      %v781 = vunpack.c.l.s4 1983009808
      %v782 = vunpack.c.0.s8 %v781
      %v783 = vlaneseq
      %v784 = vshrl.u32 %v783, 7
      %v785 = vsub.s32 %v782, %v784
      %v786 = vrot.slane %v651, %v785
      %v788 = vunpack.c.l.s4 1983009808
      %v789 = vunpack.c.0.s8 %v788
      %v790 = vlaneseq
      %v791 = vshrl.u32 %v790, 7
      %v792 = vsub.s32 %v789, %v791
      %v793 = vrot.slane %v779, %v792
      %v794 = vcombine.high %v786, %v786
      %v795 = vcombine.high %v793, %v793
      %v796 = vcombine.high %v652, %v652
      %v798 = vunpack.c.l.s4 1983009808
      %v799 = vunpack.c.0.s8 %v798
      %v800 = vlaneseq
      %v801 = vshrl.u32 %v800, 7
      %v802 = vsub.s32 %v799, %v801
      %v803 = vrot.slane %v652, %v802
      %v805 = vunpack.c.l.s4 1983009808
      %v806 = vunpack.c.0.s8 %v805
      %v807 = vlaneseq
      %v808 = vshrl.u32 %v807, 7
      %v809 = vsub.s32 %v806, %v808
      %v810 = vrot.slane %v796, %v809
      %v811 = vcombine.high %v803, %v803
      %v812 = vcombine.high %v810, %v810
      %v813 = vcombine.high %v653, %v653
      %v815 = vunpack.c.l.s4 1983009808
      %v816 = vunpack.c.0.s8 %v815
      %v817 = vlaneseq
      %v818 = vshrl.u32 %v817, 7
      %v819 = vsub.s32 %v816, %v818
      %v820 = vrot.slane %v653, %v819
      %v822 = vunpack.c.l.s4 1983009808
      %v823 = vunpack.c.0.s8 %v822
      %v824 = vlaneseq
      %v825 = vshrl.u32 %v824, 7
      %v826 = vsub.s32 %v823, %v825
      %v827 = vrot.slane %v813, %v826
      %v828 = vcombine.high %v820, %v820
      %v829 = vcombine.high %v827, %v827
      %v830 = vcombine.high %v654, %v654
      %v832 = vunpack.c.l.s4 1983009808
      %v833 = vunpack.c.0.s8 %v832
      %v834 = vlaneseq
      %v835 = vshrl.u32 %v834, 7
      %v836 = vsub.s32 %v833, %v835
      %v837 = vrot.slane %v654, %v836
      %v839 = vunpack.c.l.s4 1983009808
      %v840 = vunpack.c.0.s8 %v839
      %v841 = vlaneseq
      %v842 = vshrl.u32 %v841, 7
      %v843 = vsub.s32 %v840, %v842
      %v844 = vrot.slane %v830, %v843
      %v845 = vcombine.high %v837, %v837
      %v846 = vcombine.high %v844, %v844
      %v847 = vcombine.high %v655, %v655
      %v849 = vunpack.c.l.s4 1983009808
      %v850 = vunpack.c.0.s8 %v849
      %v851 = vlaneseq
      %v852 = vshrl.u32 %v851, 7
      %v853 = vsub.s32 %v850, %v852
      %v854 = vrot.slane %v655, %v853
      %v856 = vunpack.c.l.s4 1983009808
      %v857 = vunpack.c.0.s8 %v856
      %v858 = vlaneseq
      %v859 = vshrl.u32 %v858, 7
      %v860 = vsub.s32 %v857, %v859
      %v861 = vrot.slane %v847, %v860
      %v862 = vcombine.high %v854, %v854
      %v863 = vcombine.high %v861, %v861
      %v864 = vcombine.high %v656, %v656
      %v866 = vunpack.c.l.s4 1983009808
      %v867 = vunpack.c.0.s8 %v866
      %v868 = vlaneseq
      %v869 = vshrl.u32 %v868, 7
      %v870 = vsub.s32 %v867, %v869
      %v871 = vrot.slane %v656, %v870
      %v873 = vunpack.c.l.s4 1983009808
      %v874 = vunpack.c.0.s8 %v873
      %v875 = vlaneseq
      %v876 = vshrl.u32 %v875, 7
      %v877 = vsub.s32 %v874, %v876
      %v878 = vrot.slane %v864, %v877
      %v879 = vcombine.high %v871, %v871
      %v880 = vcombine.high %v878, %v878
      %v881 = vcombine.high %v657, %v657
      %v883 = vunpack.c.l.s4 1983009808
      %v884 = vunpack.c.0.s8 %v883
      %v885 = vlaneseq
      %v886 = vshrl.u32 %v885, 7
      %v887 = vsub.s32 %v884, %v886
      %v888 = vrot.slane %v657, %v887
      %v890 = vunpack.c.l.s4 1983009808
      %v891 = vunpack.c.0.s8 %v890
      %v892 = vlaneseq
      %v893 = vshrl.u32 %v892, 7
      %v894 = vsub.s32 %v891, %v893
      %v895 = vrot.slane %v881, %v894
      %v896 = vcombine.high %v888, %v888
      %v897 = vcombine.high %v895, %v895
      %v898 = vcombine.high %v658, %v658
      %v900 = vunpack.c.l.s4 1983009808
      %v901 = vunpack.c.0.s8 %v900
      %v902 = vlaneseq
      %v903 = vshrl.u32 %v902, 7
      %v904 = vsub.s32 %v901, %v903
      %v905 = vrot.slane %v658, %v904
      %v907 = vunpack.c.l.s4 1983009808
      %v908 = vunpack.c.0.s8 %v907
      %v909 = vlaneseq
      %v910 = vshrl.u32 %v909, 7
      %v911 = vsub.s32 %v908, %v910
      %v912 = vrot.slane %v898, %v911
      %v913 = vcombine.high %v905, %v905
      %v914 = vcombine.high %v912, %v912
      %v915 = vcombine.high %v659, %v659
      %v917 = vunpack.c.l.s4 1983009808
      %v918 = vunpack.c.0.s8 %v917
      %v919 = vlaneseq
      %v920 = vshrl.u32 %v919, 7
      %v921 = vsub.s32 %v918, %v920
      %v922 = vrot.slane %v659, %v921
      %v924 = vunpack.c.l.s4 1983009808
      %v925 = vunpack.c.0.s8 %v924
      %v926 = vlaneseq
      %v927 = vshrl.u32 %v926, 7
      %v928 = vsub.s32 %v925, %v927
      %v929 = vrot.slane %v915, %v928
      %v930 = vcombine.high %v922, %v922
      %v931 = vcombine.high %v929, %v929
      %v932 = vcombine.high %v660, %v660
      %v934 = vunpack.c.l.s4 1983009808
      %v935 = vunpack.c.0.s8 %v934
      %v936 = vlaneseq
      %v937 = vshrl.u32 %v936, 7
      %v938 = vsub.s32 %v935, %v937
      %v939 = vrot.slane %v660, %v938
      %v941 = vunpack.c.l.s4 1983009808
      %v942 = vunpack.c.0.s8 %v941
      %v943 = vlaneseq
      %v944 = vshrl.u32 %v943, 7
      %v945 = vsub.s32 %v942, %v944
      %v946 = vrot.slane %v932, %v945
      %v947 = vcombine.high %v939, %v939
      %v948 = vcombine.high %v946, %v946
      %v949 = vcombine.high %v661, %v661
      %v951 = vunpack.c.l.s4 1983009808
      %v952 = vunpack.c.0.s8 %v951
      %v953 = vlaneseq
      %v954 = vshrl.u32 %v953, 7
      %v955 = vsub.s32 %v952, %v954
      %v956 = vrot.slane %v661, %v955
      %v958 = vunpack.c.l.s4 1983009808
      %v959 = vunpack.c.0.s8 %v958
      %v960 = vlaneseq
      %v961 = vshrl.u32 %v960, 7
      %v962 = vsub.s32 %v959, %v961
      %v963 = vrot.slane %v949, %v962
      %v964 = vcombine.high %v956, %v956
      %v965 = vcombine.high %v963, %v963
      %v966 = vcombine.high %v662, %v662
      %v968 = vunpack.c.l.s4 1983009808
      %v969 = vunpack.c.0.s8 %v968
      %v970 = vlaneseq
      %v971 = vshrl.u32 %v970, 7
      %v972 = vsub.s32 %v969, %v971
      %v973 = vrot.slane %v662, %v972
      %v975 = vunpack.c.l.s4 1983009808
      %v976 = vunpack.c.0.s8 %v975
      %v977 = vlaneseq
      %v978 = vshrl.u32 %v977, 7
      %v979 = vsub.s32 %v976, %v978
      %v980 = vrot.slane %v966, %v979
      %v981 = vcombine.high %v973, %v973
      %v982 = vcombine.high %v980, %v980
      %v983 = vcombine.high %v663, %v663
      %v985 = vunpack.c.l.s4 1983009808
      %v986 = vunpack.c.0.s8 %v985
      %v987 = vlaneseq
      %v988 = vshrl.u32 %v987, 7
      %v989 = vsub.s32 %v986, %v988
      %v990 = vrot.slane %v663, %v989
      %v992 = vunpack.c.l.s4 1983009808
      %v993 = vunpack.c.0.s8 %v992
      %v994 = vlaneseq
      %v995 = vshrl.u32 %v994, 7
      %v996 = vsub.s32 %v993, %v995
      %v997 = vrot.slane %v983, %v996
      %v998 = vcombine.high %v990, %v990
      %v999 = vcombine.high %v997, %v997
      %v1000 = vcombine.high %v664, %v664
      %v1002 = vunpack.c.l.s4 1983009808
      %v1003 = vunpack.c.0.s8 %v1002
      %v1004 = vlaneseq
      %v1005 = vshrl.u32 %v1004, 7
      %v1006 = vsub.s32 %v1003, %v1005
      %v1007 = vrot.slane %v664, %v1006
      %v1009 = vunpack.c.l.s4 1983009808
      %v1010 = vunpack.c.0.s8 %v1009
      %v1011 = vlaneseq
      %v1012 = vshrl.u32 %v1011, 7
      %v1013 = vsub.s32 %v1010, %v1012
      %v1014 = vrot.slane %v1000, %v1013
      %v1015 = vcombine.high %v1007, %v1007
      %v1016 = vcombine.high %v1014, %v1014
      %v1017 = vcombine.high %v665, %v665
      %v1019 = vunpack.c.l.s4 1983009808
      %v1020 = vunpack.c.0.s8 %v1019
      %v1021 = vlaneseq
      %v1022 = vshrl.u32 %v1021, 7
      %v1023 = vsub.s32 %v1020, %v1022
      %v1024 = vrot.slane %v665, %v1023
      %v1026 = vunpack.c.l.s4 1983009808
      %v1027 = vunpack.c.0.s8 %v1026
      %v1028 = vlaneseq
      %v1029 = vshrl.u32 %v1028, 7
      %v1030 = vsub.s32 %v1027, %v1029
      %v1031 = vrot.slane %v1017, %v1030
      %v1032 = vcombine.high %v1024, %v1024
      %v1033 = vcombine.high %v1031, %v1031
      %v1034 = vcombine.high %v666, %v666
      %v1036 = vunpack.c.l.s4 1983009808
      %v1037 = vunpack.c.0.s8 %v1036
      %v1038 = vlaneseq
      %v1039 = vshrl.u32 %v1038, 7
      %v1040 = vsub.s32 %v1037, %v1039
      %v1041 = vrot.slane %v666, %v1040
      %v1043 = vunpack.c.l.s4 1983009808
      %v1044 = vunpack.c.0.s8 %v1043
      %v1045 = vlaneseq
      %v1046 = vshrl.u32 %v1045, 7
      %v1047 = vsub.s32 %v1044, %v1046
      %v1048 = vrot.slane %v1034, %v1047
      %v1049 = vcombine.high %v1041, %v1041
      %v1050 = vcombine.high %v1048, %v1048
      %v1051 = vcombine.high %v667, %v667
      %v1053 = vunpack.c.l.s4 1983009808
      %v1054 = vunpack.c.0.s8 %v1053
      %v1055 = vlaneseq
      %v1056 = vshrl.u32 %v1055, 7
      %v1057 = vsub.s32 %v1054, %v1056
      %v1058 = vrot.slane %v667, %v1057
      %v1060 = vunpack.c.l.s4 1983009808
      %v1061 = vunpack.c.0.s8 %v1060
      %v1062 = vlaneseq
      %v1063 = vshrl.u32 %v1062, 7
      %v1064 = vsub.s32 %v1061, %v1063
      %v1065 = vrot.slane %v1051, %v1064
      %v1066 = vcombine.high %v1058, %v1058
      %v1067 = vcombine.high %v1065, %v1065
      %v1068 = vcombine.high %v668, %v668
      %v1070 = vunpack.c.l.s4 1983009808
      %v1071 = vunpack.c.0.s8 %v1070
      %v1072 = vlaneseq
      %v1073 = vshrl.u32 %v1072, 7
      %v1074 = vsub.s32 %v1071, %v1073
      %v1075 = vrot.slane %v668, %v1074
      %v1077 = vunpack.c.l.s4 1983009808
      %v1078 = vunpack.c.0.s8 %v1077
      %v1079 = vlaneseq
      %v1080 = vshrl.u32 %v1079, 7
      %v1081 = vsub.s32 %v1078, %v1080
      %v1082 = vrot.slane %v1068, %v1081
      %v1083 = vcombine.high %v1075, %v1075
      %v1084 = vcombine.high %v1082, %v1082
      %v1085 = vcombine.high %v669, %v669
      %v1087 = vunpack.c.l.s4 1983009808
      %v1088 = vunpack.c.0.s8 %v1087
      %v1089 = vlaneseq
      %v1090 = vshrl.u32 %v1089, 7
      %v1091 = vsub.s32 %v1088, %v1090
      %v1092 = vrot.slane %v669, %v1091
      %v1094 = vunpack.c.l.s4 1983009808
      %v1095 = vunpack.c.0.s8 %v1094
      %v1096 = vlaneseq
      %v1097 = vshrl.u32 %v1096, 7
      %v1098 = vsub.s32 %v1095, %v1097
      %v1099 = vrot.slane %v1085, %v1098
      %v1100 = vcombine.high %v1092, %v1092
      %v1101 = vcombine.high %v1099, %v1099
      %v1102 = vcombine.high %v670, %v670
      %v1104 = vunpack.c.l.s4 1983009808
      %v1105 = vunpack.c.0.s8 %v1104
      %v1106 = vlaneseq
      %v1107 = vshrl.u32 %v1106, 7
      %v1108 = vsub.s32 %v1105, %v1107
      %v1109 = vrot.slane %v670, %v1108
      %v1111 = vunpack.c.l.s4 1983009808
      %v1112 = vunpack.c.0.s8 %v1111
      %v1113 = vlaneseq
      %v1114 = vshrl.u32 %v1113, 7
      %v1115 = vsub.s32 %v1112, %v1114
      %v1116 = vrot.slane %v1102, %v1115
      %v1117 = vcombine.high %v1109, %v1109
      %v1118 = vcombine.high %v1116, %v1116
      %v1119 = vcombine.high %v671, %v671
      %v1121 = vunpack.c.l.s4 1983009808
      %v1122 = vunpack.c.0.s8 %v1121
      %v1123 = vlaneseq
      %v1124 = vshrl.u32 %v1123, 7
      %v1125 = vsub.s32 %v1122, %v1124
      %v1126 = vrot.slane %v671, %v1125
      %v1128 = vunpack.c.l.s4 1983009808
      %v1129 = vunpack.c.0.s8 %v1128
      %v1130 = vlaneseq
      %v1131 = vshrl.u32 %v1130, 7
      %v1132 = vsub.s32 %v1129, %v1131
      %v1133 = vrot.slane %v1119, %v1132
      %v1134 = vcombine.high %v1126, %v1126
      %v1135 = vcombine.high %v1133, %v1133
      %v1136 = vcombine.high %v672, %v672
      %v1138 = vunpack.c.l.s4 1983009808
      %v1139 = vunpack.c.0.s8 %v1138
      %v1140 = vlaneseq
      %v1141 = vshrl.u32 %v1140, 7
      %v1142 = vsub.s32 %v1139, %v1141
      %v1143 = vrot.slane %v672, %v1142
      %v1145 = vunpack.c.l.s4 1983009808
      %v1146 = vunpack.c.0.s8 %v1145
      %v1147 = vlaneseq
      %v1148 = vshrl.u32 %v1147, 7
      %v1149 = vsub.s32 %v1146, %v1148
      %v1150 = vrot.slane %v1136, %v1149
      %v1151 = vcombine.high %v1143, %v1143
      %v1152 = vcombine.high %v1150, %v1150
      %v1153 = vcombine.high %v673, %v673
      %v1155 = vunpack.c.l.s4 1983009808
      %v1156 = vunpack.c.0.s8 %v1155
      %v1157 = vlaneseq
      %v1158 = vshrl.u32 %v1157, 7
      %v1159 = vsub.s32 %v1156, %v1158
      %v1160 = vrot.slane %v673, %v1159
      %v1162 = vunpack.c.l.s4 1983009808
      %v1163 = vunpack.c.0.s8 %v1162
      %v1164 = vlaneseq
      %v1165 = vshrl.u32 %v1164, 7
      %v1166 = vsub.s32 %v1163, %v1165
      %v1167 = vrot.slane %v1153, %v1166
      %v1168 = vcombine.high %v1160, %v1160
      %v1169 = vcombine.high %v1167, %v1167
      %v1170 = vcombine.high %v674, %v674
      %v1172 = vunpack.c.l.s4 1983009808
      %v1173 = vunpack.c.0.s8 %v1172
      %v1174 = vlaneseq
      %v1175 = vshrl.u32 %v1174, 7
      %v1176 = vsub.s32 %v1173, %v1175
      %v1177 = vrot.slane %v674, %v1176
      %v1179 = vunpack.c.l.s4 1983009808
      %v1180 = vunpack.c.0.s8 %v1179
      %v1181 = vlaneseq
      %v1182 = vshrl.u32 %v1181, 7
      %v1183 = vsub.s32 %v1180, %v1182
      %v1184 = vrot.slane %v1170, %v1183
      %v1185 = vcombine.high %v1177, %v1177
      %v1186 = vcombine.high %v1184, %v1184
      %v1187 = vcombine.high %v675, %v675
      %v1189 = vunpack.c.l.s4 1983009808
      %v1190 = vunpack.c.0.s8 %v1189
      %v1191 = vlaneseq
      %v1192 = vshrl.u32 %v1191, 7
      %v1193 = vsub.s32 %v1190, %v1192
      %v1194 = vrot.slane %v675, %v1193
      %v1196 = vunpack.c.l.s4 1983009808
      %v1197 = vunpack.c.0.s8 %v1196
      %v1198 = vlaneseq
      %v1199 = vshrl.u32 %v1198, 7
      %v1200 = vsub.s32 %v1197, %v1199
      %v1201 = vrot.slane %v1187, %v1200
      %v1202 = vcombine.high %v1194, %v1194
      %v1203 = vcombine.high %v1201, %v1201
      %v1204 = vcombine.high %v676, %v676
      %v1206 = vunpack.c.l.s4 1983009808
      %v1207 = vunpack.c.0.s8 %v1206
      %v1208 = vlaneseq
      %v1209 = vshrl.u32 %v1208, 7
      %v1210 = vsub.s32 %v1207, %v1209
      %v1211 = vrot.slane %v676, %v1210
      %v1213 = vunpack.c.l.s4 1983009808
      %v1214 = vunpack.c.0.s8 %v1213
      %v1215 = vlaneseq
      %v1216 = vshrl.u32 %v1215, 7
      %v1217 = vsub.s32 %v1214, %v1216
      %v1218 = vrot.slane %v1204, %v1217
      %v1219 = vcombine.high %v1211, %v1211
      %v1220 = vcombine.high %v1218, %v1218
      %v1221 = vcombine.high %v677, %v677
      %v1223 = vunpack.c.l.s4 1983009808
      %v1224 = vunpack.c.0.s8 %v1223
      %v1225 = vlaneseq
      %v1226 = vshrl.u32 %v1225, 7
      %v1227 = vsub.s32 %v1224, %v1226
      %v1228 = vrot.slane %v677, %v1227
      %v1230 = vunpack.c.l.s4 1983009808
      %v1231 = vunpack.c.0.s8 %v1230
      %v1232 = vlaneseq
      %v1233 = vshrl.u32 %v1232, 7
      %v1234 = vsub.s32 %v1231, %v1233
      %v1235 = vrot.slane %v1221, %v1234
      %v1236 = vcombine.high %v1228, %v1228
      %v1237 = vcombine.high %v1235, %v1235
      %v1238 = vcombine.high %v678, %v678
      %v1240 = vunpack.c.l.s4 1983009808
      %v1241 = vunpack.c.0.s8 %v1240
      %v1242 = vlaneseq
      %v1243 = vshrl.u32 %v1242, 7
      %v1244 = vsub.s32 %v1241, %v1243
      %v1245 = vrot.slane %v678, %v1244
      %v1247 = vunpack.c.l.s4 1983009808
      %v1248 = vunpack.c.0.s8 %v1247
      %v1249 = vlaneseq
      %v1250 = vshrl.u32 %v1249, 7
      %v1251 = vsub.s32 %v1248, %v1250
      %v1252 = vrot.slane %v1238, %v1251
      %v1253 = vcombine.high %v1245, %v1245
      %v1254 = vcombine.high %v1252, %v1252
      %vm1383 = vcmask 517120
      %v1384 = vsel %vm1383, %v718, -inf
      %v1385 = vrot.slane %v1384, 4
      %v1386 = vmax.f32 %v1384, %v1385
      %v1387 = vrot.slane %v1386, 2
      %v1388 = vmax.f32 %v1386, %v1387
      %v1389 = vrot.slane %v1388, 1
      %v1390 = vmax.f32 %v1388, %v1389
      %v1391 = vsel %vm1383, %v726, -inf
      %v1392 = vrot.slane %v1391, 4
      %v1393 = vmax.f32 %v1391, %v1392
      %v1394 = vrot.slane %v1393, 2
      %v1395 = vmax.f32 %v1393, %v1394
      %v1396 = vrot.slane %v1395, 1
      %v1397 = vmax.f32 %v1395, %v1396
      %v1398 = vsel %vm1383, %v725, -inf
      %v1399 = vrot.slane %v1398, 4
      %v1400 = vmax.f32 %v1398, %v1399
      %v1401 = vrot.slane %v1400, 2
      %v1402 = vmax.f32 %v1400, %v1401
      %v1403 = vrot.slane %v1402, 1
      %v1404 = vmax.f32 %v1402, %v1403
      %v1405 = vsel %vm1383, %v727, -inf
      %v1406 = vrot.slane %v1405, 4
      %v1407 = vmax.f32 %v1405, %v1406
      %v1408 = vrot.slane %v1407, 2
      %v1409 = vmax.f32 %v1407, %v1408
      %v1410 = vrot.slane %v1409, 1
      %v1411 = vmax.f32 %v1409, %v1410
      %v1412 = vsel %vm1383, %v735, -inf
      %v1413 = vrot.slane %v1412, 4
      %v1414 = vmax.f32 %v1412, %v1413
      %v1415 = vrot.slane %v1414, 2
      %v1416 = vmax.f32 %v1414, %v1415
      %v1417 = vrot.slane %v1416, 1
      %v1418 = vmax.f32 %v1416, %v1417
      %v1419 = vsel %vm1383, %v743, -inf
      %v1420 = vrot.slane %v1419, 4
      %v1421 = vmax.f32 %v1419, %v1420
      %v1422 = vrot.slane %v1421, 2
      %v1423 = vmax.f32 %v1421, %v1422
      %v1424 = vrot.slane %v1423, 1
      %v1425 = vmax.f32 %v1423, %v1424
      %v1426 = vsel %vm1383, %v742, -inf
      %v1427 = vrot.slane %v1426, 4
      %v1428 = vmax.f32 %v1426, %v1427
      %v1429 = vrot.slane %v1428, 2
      %v1430 = vmax.f32 %v1428, %v1429
      %v1431 = vrot.slane %v1430, 1
      %v1432 = vmax.f32 %v1430, %v1431
      %v1433 = vsel %vm1383, %v744, -inf
      %v1434 = vrot.slane %v1433, 4
      %v1435 = vmax.f32 %v1433, %v1434
      %v1436 = vrot.slane %v1435, 2
      %v1437 = vmax.f32 %v1435, %v1436
      %v1438 = vrot.slane %v1437, 1
      %v1439 = vmax.f32 %v1437, %v1438
      %v1440 = vsel %vm1383, %v752, -inf
      %v1441 = vrot.slane %v1440, 4
      %v1442 = vmax.f32 %v1440, %v1441
      %v1443 = vrot.slane %v1442, 2
      %v1444 = vmax.f32 %v1442, %v1443
      %v1445 = vrot.slane %v1444, 1
      %v1446 = vmax.f32 %v1444, %v1445
      %v1447 = vsel %vm1383, %v760, -inf
      %v1448 = vrot.slane %v1447, 4
      %v1449 = vmax.f32 %v1447, %v1448
      %v1450 = vrot.slane %v1449, 2
      %v1451 = vmax.f32 %v1449, %v1450
      %v1452 = vrot.slane %v1451, 1
      %v1453 = vmax.f32 %v1451, %v1452
      %v1454 = vsel %vm1383, %v759, -inf
      %v1455 = vrot.slane %v1454, 4
      %v1456 = vmax.f32 %v1454, %v1455
      %v1457 = vrot.slane %v1456, 2
      %v1458 = vmax.f32 %v1456, %v1457
      %v1459 = vrot.slane %v1458, 1
      %v1460 = vmax.f32 %v1458, %v1459
      %v1461 = vsel %vm1383, %v761, -inf
      %v1462 = vrot.slane %v1461, 4
      %v1463 = vmax.f32 %v1461, %v1462
      %v1464 = vrot.slane %v1463, 2
      %v1465 = vmax.f32 %v1463, %v1464
      %v1466 = vrot.slane %v1465, 1
      %v1467 = vmax.f32 %v1465, %v1466
      %v1468 = vsel %vm1383, %v769, -inf
      %v1469 = vrot.slane %v1468, 4
      %v1470 = vmax.f32 %v1468, %v1469
      %v1471 = vrot.slane %v1470, 2
      %v1472 = vmax.f32 %v1470, %v1471
      %v1473 = vrot.slane %v1472, 1
      %v1474 = vmax.f32 %v1472, %v1473
      %v1475 = vsel %vm1383, %v777, -inf
      %v1476 = vrot.slane %v1475, 4
      %v1477 = vmax.f32 %v1475, %v1476
      %v1478 = vrot.slane %v1477, 2
      %v1479 = vmax.f32 %v1477, %v1478
      %v1480 = vrot.slane %v1479, 1
      %v1481 = vmax.f32 %v1479, %v1480
      %v1482 = vsel %vm1383, %v776, -inf
      %v1483 = vrot.slane %v1482, 4
      %v1484 = vmax.f32 %v1482, %v1483
      %v1485 = vrot.slane %v1484, 2
      %v1486 = vmax.f32 %v1484, %v1485
      %v1487 = vrot.slane %v1486, 1
      %v1488 = vmax.f32 %v1486, %v1487
      %v1489 = vsel %vm1383, %v778, -inf
      %v1490 = vrot.slane %v1489, 4
      %v1491 = vmax.f32 %v1489, %v1490
      %v1492 = vrot.slane %v1491, 2
      %v1493 = vmax.f32 %v1491, %v1492
      %v1494 = vrot.slane %v1493, 1
      %v1495 = vmax.f32 %v1493, %v1494
      %v1496 = vsel %vm1383, %v786, -inf
      %v1497 = vrot.slane %v1496, 4
      %v1498 = vmax.f32 %v1496, %v1497
      %v1499 = vrot.slane %v1498, 2
      %v1500 = vmax.f32 %v1498, %v1499
      %v1501 = vrot.slane %v1500, 1
      %v1502 = vmax.f32 %v1500, %v1501
      %v1503 = vsel %vm1383, %v794, -inf
      %v1504 = vrot.slane %v1503, 4
      %v1505 = vmax.f32 %v1503, %v1504
      %v1506 = vrot.slane %v1505, 2
      %v1507 = vmax.f32 %v1505, %v1506
      %v1508 = vrot.slane %v1507, 1
      %v1509 = vmax.f32 %v1507, %v1508
      %v1510 = vsel %vm1383, %v793, -inf
      %v1511 = vrot.slane %v1510, 4
      %v1512 = vmax.f32 %v1510, %v1511
      %v1513 = vrot.slane %v1512, 2
      %v1514 = vmax.f32 %v1512, %v1513
      %v1515 = vrot.slane %v1514, 1
      %v1516 = vmax.f32 %v1514, %v1515
      %v1517 = vsel %vm1383, %v795, -inf
      %v1518 = vrot.slane %v1517, 4
      %v1519 = vmax.f32 %v1517, %v1518
      %v1520 = vrot.slane %v1519, 2
      %v1521 = vmax.f32 %v1519, %v1520
      %v1522 = vrot.slane %v1521, 1
      %v1523 = vmax.f32 %v1521, %v1522
      %v1524 = vsel %vm1383, %v803, -inf
      %v1525 = vrot.slane %v1524, 4
      %v1526 = vmax.f32 %v1524, %v1525
      %v1527 = vrot.slane %v1526, 2
      %v1528 = vmax.f32 %v1526, %v1527
      %v1529 = vrot.slane %v1528, 1
      %v1530 = vmax.f32 %v1528, %v1529
      %v1531 = vsel %vm1383, %v811, -inf
      %v1532 = vrot.slane %v1531, 4
      %v1533 = vmax.f32 %v1531, %v1532
      %v1534 = vrot.slane %v1533, 2
      %v1535 = vmax.f32 %v1533, %v1534
      %v1536 = vrot.slane %v1535, 1
      %v1537 = vmax.f32 %v1535, %v1536
      %v1538 = vsel %vm1383, %v810, -inf
      %v1539 = vrot.slane %v1538, 4
      %v1540 = vmax.f32 %v1538, %v1539
      %v1541 = vrot.slane %v1540, 2
      %v1542 = vmax.f32 %v1540, %v1541
      %v1543 = vrot.slane %v1542, 1
      %v1544 = vmax.f32 %v1542, %v1543
      %v1545 = vsel %vm1383, %v812, -inf
      %v1546 = vrot.slane %v1545, 4
      %v1547 = vmax.f32 %v1545, %v1546
      %v1548 = vrot.slane %v1547, 2
      %v1549 = vmax.f32 %v1547, %v1548
      %v1550 = vrot.slane %v1549, 1
      %v1551 = vmax.f32 %v1549, %v1550
      %v1552 = vsel %vm1383, %v820, -inf
      %v1553 = vrot.slane %v1552, 4
      %v1554 = vmax.f32 %v1552, %v1553
      %v1555 = vrot.slane %v1554, 2
      %v1556 = vmax.f32 %v1554, %v1555
      %v1557 = vrot.slane %v1556, 1
      %v1558 = vmax.f32 %v1556, %v1557
      %v1559 = vsel %vm1383, %v828, -inf
      %v1560 = vrot.slane %v1559, 4
      %v1561 = vmax.f32 %v1559, %v1560
      %v1562 = vrot.slane %v1561, 2
      %v1563 = vmax.f32 %v1561, %v1562
      %v1564 = vrot.slane %v1563, 1
      %v1565 = vmax.f32 %v1563, %v1564
      %v1566 = vsel %vm1383, %v827, -inf
      %v1567 = vrot.slane %v1566, 4
      %v1568 = vmax.f32 %v1566, %v1567
      %v1569 = vrot.slane %v1568, 2
      %v1570 = vmax.f32 %v1568, %v1569
      %v1571 = vrot.slane %v1570, 1
      %v1572 = vmax.f32 %v1570, %v1571
      %v1573 = vsel %vm1383, %v829, -inf
      %v1574 = vrot.slane %v1573, 4
      %v1575 = vmax.f32 %v1573, %v1574
      %v1576 = vrot.slane %v1575, 2
      %v1577 = vmax.f32 %v1575, %v1576
      %v1578 = vrot.slane %v1577, 1
      %v1579 = vmax.f32 %v1577, %v1578
      %v1580 = vsel %vm1383, %v837, -inf
      %v1581 = vrot.slane %v1580, 4
      %v1582 = vmax.f32 %v1580, %v1581
      %v1583 = vrot.slane %v1582, 2
      %v1584 = vmax.f32 %v1582, %v1583
      %v1585 = vrot.slane %v1584, 1
      %v1586 = vmax.f32 %v1584, %v1585
      %v1587 = vsel %vm1383, %v845, -inf
      %v1588 = vrot.slane %v1587, 4
      %v1589 = vmax.f32 %v1587, %v1588
      %v1590 = vrot.slane %v1589, 2
      %v1591 = vmax.f32 %v1589, %v1590
      %v1592 = vrot.slane %v1591, 1
      %v1593 = vmax.f32 %v1591, %v1592
      %v1594 = vsel %vm1383, %v844, -inf
      %v1595 = vrot.slane %v1594, 4
      %v1596 = vmax.f32 %v1594, %v1595
      %v1597 = vrot.slane %v1596, 2
      %v1598 = vmax.f32 %v1596, %v1597
      %v1599 = vrot.slane %v1598, 1
      %v1600 = vmax.f32 %v1598, %v1599
      %v1601 = vsel %vm1383, %v846, -inf
      %v1602 = vrot.slane %v1601, 4
      %v1603 = vmax.f32 %v1601, %v1602
      %v1604 = vrot.slane %v1603, 2
      %v1605 = vmax.f32 %v1603, %v1604
      %v1606 = vrot.slane %v1605, 1
      %v1607 = vmax.f32 %v1605, %v1606
      %v1608 = vsel %vm1383, %v854, -inf
      %v1609 = vrot.slane %v1608, 4
      %v1610 = vmax.f32 %v1608, %v1609
      %v1611 = vrot.slane %v1610, 2
      %v1612 = vmax.f32 %v1610, %v1611
      %v1613 = vrot.slane %v1612, 1
      %v1614 = vmax.f32 %v1612, %v1613
      %v1615 = vsel %vm1383, %v862, -inf
      %v1616 = vrot.slane %v1615, 4
      %v1617 = vmax.f32 %v1615, %v1616
      %v1618 = vrot.slane %v1617, 2
      %v1619 = vmax.f32 %v1617, %v1618
      %v1620 = vrot.slane %v1619, 1
      %v1621 = vmax.f32 %v1619, %v1620
      %v1622 = vsel %vm1383, %v861, -inf
      %v1623 = vrot.slane %v1622, 4
      %v1624 = vmax.f32 %v1622, %v1623
      %v1625 = vrot.slane %v1624, 2
      %v1626 = vmax.f32 %v1624, %v1625
      %v1627 = vrot.slane %v1626, 1
      %v1628 = vmax.f32 %v1626, %v1627
      %v1629 = vsel %vm1383, %v863, -inf
      %v1630 = vrot.slane %v1629, 4
      %v1631 = vmax.f32 %v1629, %v1630
      %v1632 = vrot.slane %v1631, 2
      %v1633 = vmax.f32 %v1631, %v1632
      %v1634 = vrot.slane %v1633, 1
      %v1635 = vmax.f32 %v1633, %v1634
      %v1636 = vsel %vm1383, %v871, -inf
      %v1637 = vrot.slane %v1636, 4
      %v1638 = vmax.f32 %v1636, %v1637
      %v1639 = vrot.slane %v1638, 2
      %v1640 = vmax.f32 %v1638, %v1639
      %v1641 = vrot.slane %v1640, 1
      %v1642 = vmax.f32 %v1640, %v1641
      %v1643 = vsel %vm1383, %v879, -inf
      %v1644 = vrot.slane %v1643, 4
      %v1645 = vmax.f32 %v1643, %v1644
      %v1646 = vrot.slane %v1645, 2
      %v1647 = vmax.f32 %v1645, %v1646
      %v1648 = vrot.slane %v1647, 1
      %v1649 = vmax.f32 %v1647, %v1648
      %v1650 = vsel %vm1383, %v878, -inf
      %v1651 = vrot.slane %v1650, 4
      %v1652 = vmax.f32 %v1650, %v1651
      %v1653 = vrot.slane %v1652, 2
      %v1654 = vmax.f32 %v1652, %v1653
      %v1655 = vrot.slane %v1654, 1
      %v1656 = vmax.f32 %v1654, %v1655
      %v1657 = vsel %vm1383, %v880, -inf
      %v1658 = vrot.slane %v1657, 4
      %v1659 = vmax.f32 %v1657, %v1658
      %v1660 = vrot.slane %v1659, 2
      %v1661 = vmax.f32 %v1659, %v1660
      %v1662 = vrot.slane %v1661, 1
      %v1663 = vmax.f32 %v1661, %v1662
      %v1664 = vsel %vm1383, %v888, -inf
      %v1665 = vrot.slane %v1664, 4
      %v1666 = vmax.f32 %v1664, %v1665
      %v1667 = vrot.slane %v1666, 2
      %v1668 = vmax.f32 %v1666, %v1667
      %v1669 = vrot.slane %v1668, 1
      %v1670 = vmax.f32 %v1668, %v1669
      %v1671 = vsel %vm1383, %v896, -inf
      %v1672 = vrot.slane %v1671, 4
      %v1673 = vmax.f32 %v1671, %v1672
      %v1674 = vrot.slane %v1673, 2
      %v1675 = vmax.f32 %v1673, %v1674
      %v1676 = vrot.slane %v1675, 1
      %v1677 = vmax.f32 %v1675, %v1676
      %v1678 = vsel %vm1383, %v895, -inf
      %v1679 = vrot.slane %v1678, 4
      %v1680 = vmax.f32 %v1678, %v1679
      %v1681 = vrot.slane %v1680, 2
      %v1682 = vmax.f32 %v1680, %v1681
      %v1683 = vrot.slane %v1682, 1
      %v1684 = vmax.f32 %v1682, %v1683
      %v1685 = vsel %vm1383, %v897, -inf
      %v1686 = vrot.slane %v1685, 4
      %v1687 = vmax.f32 %v1685, %v1686
      %v1688 = vrot.slane %v1687, 2
      %v1689 = vmax.f32 %v1687, %v1688
      %v1690 = vrot.slane %v1689, 1
      %v1691 = vmax.f32 %v1689, %v1690
      %v1692 = vsel %vm1383, %v905, -inf
      %v1693 = vrot.slane %v1692, 4
      %v1694 = vmax.f32 %v1692, %v1693
      %v1695 = vrot.slane %v1694, 2
      %v1696 = vmax.f32 %v1694, %v1695
      %v1697 = vrot.slane %v1696, 1
      %v1698 = vmax.f32 %v1696, %v1697
      %v1699 = vsel %vm1383, %v913, -inf
      %v1700 = vrot.slane %v1699, 4
      %v1701 = vmax.f32 %v1699, %v1700
      %v1702 = vrot.slane %v1701, 2
      %v1703 = vmax.f32 %v1701, %v1702
      %v1704 = vrot.slane %v1703, 1
      %v1705 = vmax.f32 %v1703, %v1704
      %v1706 = vsel %vm1383, %v912, -inf
      %v1707 = vrot.slane %v1706, 4
      %v1708 = vmax.f32 %v1706, %v1707
      %v1709 = vrot.slane %v1708, 2
      %v1710 = vmax.f32 %v1708, %v1709
      %v1711 = vrot.slane %v1710, 1
      %v1712 = vmax.f32 %v1710, %v1711
      %v1713 = vsel %vm1383, %v914, -inf
      %v1714 = vrot.slane %v1713, 4
      %v1715 = vmax.f32 %v1713, %v1714
      %v1716 = vrot.slane %v1715, 2
      %v1717 = vmax.f32 %v1715, %v1716
      %v1718 = vrot.slane %v1717, 1
      %v1719 = vmax.f32 %v1717, %v1718
      %v1720 = vsel %vm1383, %v922, -inf
      %v1721 = vrot.slane %v1720, 4
      %v1722 = vmax.f32 %v1720, %v1721
      %v1723 = vrot.slane %v1722, 2
      %v1724 = vmax.f32 %v1722, %v1723
      %v1725 = vrot.slane %v1724, 1
      %v1726 = vmax.f32 %v1724, %v1725
      %v1727 = vsel %vm1383, %v930, -inf
      %v1728 = vrot.slane %v1727, 4
      %v1729 = vmax.f32 %v1727, %v1728
      %v1730 = vrot.slane %v1729, 2
      %v1731 = vmax.f32 %v1729, %v1730
      %v1732 = vrot.slane %v1731, 1
      %v1733 = vmax.f32 %v1731, %v1732
      %v1734 = vsel %vm1383, %v929, -inf
      %v1735 = vrot.slane %v1734, 4
      %v1736 = vmax.f32 %v1734, %v1735
      %v1737 = vrot.slane %v1736, 2
      %v1738 = vmax.f32 %v1736, %v1737
      %v1739 = vrot.slane %v1738, 1
      %v1740 = vmax.f32 %v1738, %v1739
      %v1741 = vsel %vm1383, %v931, -inf
      %v1742 = vrot.slane %v1741, 4
      %v1743 = vmax.f32 %v1741, %v1742
      %v1744 = vrot.slane %v1743, 2
      %v1745 = vmax.f32 %v1743, %v1744
      %v1746 = vrot.slane %v1745, 1
      %v1747 = vmax.f32 %v1745, %v1746
      %v1748 = vsel %vm1383, %v939, -inf
      %v1749 = vrot.slane %v1748, 4
      %v1750 = vmax.f32 %v1748, %v1749
      %v1751 = vrot.slane %v1750, 2
      %v1752 = vmax.f32 %v1750, %v1751
      %v1753 = vrot.slane %v1752, 1
      %v1754 = vmax.f32 %v1752, %v1753
      %v1755 = vsel %vm1383, %v947, -inf
      %v1756 = vrot.slane %v1755, 4
      %v1757 = vmax.f32 %v1755, %v1756
      %v1758 = vrot.slane %v1757, 2
      %v1759 = vmax.f32 %v1757, %v1758
      %v1760 = vrot.slane %v1759, 1
      %v1761 = vmax.f32 %v1759, %v1760
      %v1762 = vsel %vm1383, %v946, -inf
      %v1763 = vrot.slane %v1762, 4
      %v1764 = vmax.f32 %v1762, %v1763
      %v1765 = vrot.slane %v1764, 2
      %v1766 = vmax.f32 %v1764, %v1765
      %v1767 = vrot.slane %v1766, 1
      %v1768 = vmax.f32 %v1766, %v1767
      %v1769 = vsel %vm1383, %v948, -inf
      %v1770 = vrot.slane %v1769, 4
      %v1771 = vmax.f32 %v1769, %v1770
      %v1772 = vrot.slane %v1771, 2
      %v1773 = vmax.f32 %v1771, %v1772
      %v1774 = vrot.slane %v1773, 1
      %v1775 = vmax.f32 %v1773, %v1774
      %v1776 = vsel %vm1383, %v956, -inf
      %v1777 = vrot.slane %v1776, 4
      %v1778 = vmax.f32 %v1776, %v1777
      %v1779 = vrot.slane %v1778, 2
      %v1780 = vmax.f32 %v1778, %v1779
      %v1781 = vrot.slane %v1780, 1
      %v1782 = vmax.f32 %v1780, %v1781
      %v1783 = vsel %vm1383, %v964, -inf
      %v1784 = vrot.slane %v1783, 4
      %v1785 = vmax.f32 %v1783, %v1784
      %v1786 = vrot.slane %v1785, 2
      %v1787 = vmax.f32 %v1785, %v1786
      %v1788 = vrot.slane %v1787, 1
      %v1789 = vmax.f32 %v1787, %v1788
      %v1790 = vsel %vm1383, %v963, -inf
      %v1791 = vrot.slane %v1790, 4
      %v1792 = vmax.f32 %v1790, %v1791
      %v1793 = vrot.slane %v1792, 2
      %v1794 = vmax.f32 %v1792, %v1793
      %v1795 = vrot.slane %v1794, 1
      %v1796 = vmax.f32 %v1794, %v1795
      %v1797 = vsel %vm1383, %v965, -inf
      %v1798 = vrot.slane %v1797, 4
      %v1799 = vmax.f32 %v1797, %v1798
      %v1800 = vrot.slane %v1799, 2
      %v1801 = vmax.f32 %v1799, %v1800
      %v1802 = vrot.slane %v1801, 1
      %v1803 = vmax.f32 %v1801, %v1802
      %v1804 = vsel %vm1383, %v973, -inf
      %v1805 = vrot.slane %v1804, 4
      %v1806 = vmax.f32 %v1804, %v1805
      %v1807 = vrot.slane %v1806, 2
      %v1808 = vmax.f32 %v1806, %v1807
      %v1809 = vrot.slane %v1808, 1
      %v1810 = vmax.f32 %v1808, %v1809
      %v1811 = vsel %vm1383, %v981, -inf
      %v1812 = vrot.slane %v1811, 4
      %v1813 = vmax.f32 %v1811, %v1812
      %v1814 = vrot.slane %v1813, 2
      %v1815 = vmax.f32 %v1813, %v1814
      %v1816 = vrot.slane %v1815, 1
      %v1817 = vmax.f32 %v1815, %v1816
      %v1818 = vsel %vm1383, %v980, -inf
      %v1819 = vrot.slane %v1818, 4
      %v1820 = vmax.f32 %v1818, %v1819
      %v1821 = vrot.slane %v1820, 2
      %v1822 = vmax.f32 %v1820, %v1821
      %v1823 = vrot.slane %v1822, 1
      %v1824 = vmax.f32 %v1822, %v1823
      %v1825 = vsel %vm1383, %v982, -inf
      %v1826 = vrot.slane %v1825, 4
      %v1827 = vmax.f32 %v1825, %v1826
      %v1828 = vrot.slane %v1827, 2
      %v1829 = vmax.f32 %v1827, %v1828
      %v1830 = vrot.slane %v1829, 1
      %v1831 = vmax.f32 %v1829, %v1830
      %v1832 = vsel %vm1383, %v990, -inf
      %v1833 = vrot.slane %v1832, 4
      %v1834 = vmax.f32 %v1832, %v1833
      %v1835 = vrot.slane %v1834, 2
      %v1836 = vmax.f32 %v1834, %v1835
      %v1837 = vrot.slane %v1836, 1
      %v1838 = vmax.f32 %v1836, %v1837
      %v1839 = vsel %vm1383, %v998, -inf
      %v1840 = vrot.slane %v1839, 4
      %v1841 = vmax.f32 %v1839, %v1840
      %v1842 = vrot.slane %v1841, 2
      %v1843 = vmax.f32 %v1841, %v1842
      %v1844 = vrot.slane %v1843, 1
      %v1845 = vmax.f32 %v1843, %v1844
      %v1846 = vsel %vm1383, %v997, -inf
      %v1847 = vrot.slane %v1846, 4
      %v1848 = vmax.f32 %v1846, %v1847
      %v1849 = vrot.slane %v1848, 2
      %v1850 = vmax.f32 %v1848, %v1849
      %v1851 = vrot.slane %v1850, 1
      %v1852 = vmax.f32 %v1850, %v1851
      %v1853 = vsel %vm1383, %v999, -inf
      %v1854 = vrot.slane %v1853, 4
      %v1855 = vmax.f32 %v1853, %v1854
      %v1856 = vrot.slane %v1855, 2
      %v1857 = vmax.f32 %v1855, %v1856
      %v1858 = vrot.slane %v1857, 1
      %v1859 = vmax.f32 %v1857, %v1858
      %v1860 = vsel %vm1383, %v1007, -inf
      %v1861 = vrot.slane %v1860, 4
      %v1862 = vmax.f32 %v1860, %v1861
      %v1863 = vrot.slane %v1862, 2
      %v1864 = vmax.f32 %v1862, %v1863
      %v1865 = vrot.slane %v1864, 1
      %v1866 = vmax.f32 %v1864, %v1865
      %v1867 = vsel %vm1383, %v1015, -inf
      %v1868 = vrot.slane %v1867, 4
      %v1869 = vmax.f32 %v1867, %v1868
      %v1870 = vrot.slane %v1869, 2
      %v1871 = vmax.f32 %v1869, %v1870
      %v1872 = vrot.slane %v1871, 1
      %v1873 = vmax.f32 %v1871, %v1872
      %v1874 = vsel %vm1383, %v1014, -inf
      %v1875 = vrot.slane %v1874, 4
      %v1876 = vmax.f32 %v1874, %v1875
      %v1877 = vrot.slane %v1876, 2
      %v1878 = vmax.f32 %v1876, %v1877
      %v1879 = vrot.slane %v1878, 1
      %v1880 = vmax.f32 %v1878, %v1879
      %v1881 = vsel %vm1383, %v1016, -inf
      %v1882 = vrot.slane %v1881, 4
      %v1883 = vmax.f32 %v1881, %v1882
      %v1884 = vrot.slane %v1883, 2
      %v1885 = vmax.f32 %v1883, %v1884
      %v1886 = vrot.slane %v1885, 1
      %v1887 = vmax.f32 %v1885, %v1886
      %v1888 = vsel %vm1383, %v1024, -inf
      %v1889 = vrot.slane %v1888, 4
      %v1890 = vmax.f32 %v1888, %v1889
      %v1891 = vrot.slane %v1890, 2
      %v1892 = vmax.f32 %v1890, %v1891
      %v1893 = vrot.slane %v1892, 1
      %v1894 = vmax.f32 %v1892, %v1893
      %v1895 = vsel %vm1383, %v1032, -inf
      %v1896 = vrot.slane %v1895, 4
      %v1897 = vmax.f32 %v1895, %v1896
      %v1898 = vrot.slane %v1897, 2
      %v1899 = vmax.f32 %v1897, %v1898
      %v1900 = vrot.slane %v1899, 1
      %v1901 = vmax.f32 %v1899, %v1900
      %v1902 = vsel %vm1383, %v1031, -inf
      %v1903 = vrot.slane %v1902, 4
      %v1904 = vmax.f32 %v1902, %v1903
      %v1905 = vrot.slane %v1904, 2
      %v1906 = vmax.f32 %v1904, %v1905
      %v1907 = vrot.slane %v1906, 1
      %v1908 = vmax.f32 %v1906, %v1907
      %v1909 = vsel %vm1383, %v1033, -inf
      %v1910 = vrot.slane %v1909, 4
      %v1911 = vmax.f32 %v1909, %v1910
      %v1912 = vrot.slane %v1911, 2
      %v1913 = vmax.f32 %v1911, %v1912
      %v1914 = vrot.slane %v1913, 1
      %v1915 = vmax.f32 %v1913, %v1914
      %v1916 = vsel %vm1383, %v1041, -inf
      %v1917 = vrot.slane %v1916, 4
      %v1918 = vmax.f32 %v1916, %v1917
      %v1919 = vrot.slane %v1918, 2
      %v1920 = vmax.f32 %v1918, %v1919
      %v1921 = vrot.slane %v1920, 1
      %v1922 = vmax.f32 %v1920, %v1921
      %v1923 = vsel %vm1383, %v1049, -inf
      %v1924 = vrot.slane %v1923, 4
      %v1925 = vmax.f32 %v1923, %v1924
      %v1926 = vrot.slane %v1925, 2
      %v1927 = vmax.f32 %v1925, %v1926
      %v1928 = vrot.slane %v1927, 1
      %v1929 = vmax.f32 %v1927, %v1928
      %v1930 = vsel %vm1383, %v1048, -inf
      %v1931 = vrot.slane %v1930, 4
      %v1932 = vmax.f32 %v1930, %v1931
      %v1933 = vrot.slane %v1932, 2
      %v1934 = vmax.f32 %v1932, %v1933
      %v1935 = vrot.slane %v1934, 1
      %v1936 = vmax.f32 %v1934, %v1935
      %v1937 = vsel %vm1383, %v1050, -inf
      %v1938 = vrot.slane %v1937, 4
      %v1939 = vmax.f32 %v1937, %v1938
      %v1940 = vrot.slane %v1939, 2
      %v1941 = vmax.f32 %v1939, %v1940
      %v1942 = vrot.slane %v1941, 1
      %v1943 = vmax.f32 %v1941, %v1942
      %v1944 = vsel %vm1383, %v1058, -inf
      %v1945 = vrot.slane %v1944, 4
      %v1946 = vmax.f32 %v1944, %v1945
      %v1947 = vrot.slane %v1946, 2
      %v1948 = vmax.f32 %v1946, %v1947
      %v1949 = vrot.slane %v1948, 1
      %v1950 = vmax.f32 %v1948, %v1949
      %v1951 = vsel %vm1383, %v1066, -inf
      %v1952 = vrot.slane %v1951, 4
      %v1953 = vmax.f32 %v1951, %v1952
      %v1954 = vrot.slane %v1953, 2
      %v1955 = vmax.f32 %v1953, %v1954
      %v1956 = vrot.slane %v1955, 1
      %v1957 = vmax.f32 %v1955, %v1956
      %v1958 = vsel %vm1383, %v1065, -inf
      %v1959 = vrot.slane %v1958, 4
      %v1960 = vmax.f32 %v1958, %v1959
      %v1961 = vrot.slane %v1960, 2
      %v1962 = vmax.f32 %v1960, %v1961
      %v1963 = vrot.slane %v1962, 1
      %v1964 = vmax.f32 %v1962, %v1963
      %v1965 = vsel %vm1383, %v1067, -inf
      %v1966 = vrot.slane %v1965, 4
      %v1967 = vmax.f32 %v1965, %v1966
      %v1968 = vrot.slane %v1967, 2
      %v1969 = vmax.f32 %v1967, %v1968
      %v1970 = vrot.slane %v1969, 1
      %v1971 = vmax.f32 %v1969, %v1970
      %v1972 = vsel %vm1383, %v1075, -inf
      %v1973 = vrot.slane %v1972, 4
      %v1974 = vmax.f32 %v1972, %v1973
      %v1975 = vrot.slane %v1974, 2
      %v1976 = vmax.f32 %v1974, %v1975
      %v1977 = vrot.slane %v1976, 1
      %v1978 = vmax.f32 %v1976, %v1977
      %v1979 = vsel %vm1383, %v1083, -inf
      %v1980 = vrot.slane %v1979, 4
      %v1981 = vmax.f32 %v1979, %v1980
      %v1982 = vrot.slane %v1981, 2
      %v1983 = vmax.f32 %v1981, %v1982
      %v1984 = vrot.slane %v1983, 1
      %v1985 = vmax.f32 %v1983, %v1984
      %v1986 = vsel %vm1383, %v1082, -inf
      %v1987 = vrot.slane %v1986, 4
      %v1988 = vmax.f32 %v1986, %v1987
      %v1989 = vrot.slane %v1988, 2
      %v1990 = vmax.f32 %v1988, %v1989
      %v1991 = vrot.slane %v1990, 1
      %v1992 = vmax.f32 %v1990, %v1991
      %v1993 = vsel %vm1383, %v1084, -inf
      %v1994 = vrot.slane %v1993, 4
      %v1995 = vmax.f32 %v1993, %v1994
      %v1996 = vrot.slane %v1995, 2
      %v1997 = vmax.f32 %v1995, %v1996
      %v1998 = vrot.slane %v1997, 1
      %v1999 = vmax.f32 %v1997, %v1998
      %v2000 = vsel %vm1383, %v1092, -inf
      %v2001 = vrot.slane %v2000, 4
      %v2002 = vmax.f32 %v2000, %v2001
      %v2003 = vrot.slane %v2002, 2
      %v2004 = vmax.f32 %v2002, %v2003
      %v2005 = vrot.slane %v2004, 1
      %v2006 = vmax.f32 %v2004, %v2005
      %v2007 = vsel %vm1383, %v1100, -inf
      %v2008 = vrot.slane %v2007, 4
      %v2009 = vmax.f32 %v2007, %v2008
      %v2010 = vrot.slane %v2009, 2
      %v2011 = vmax.f32 %v2009, %v2010
      %v2012 = vrot.slane %v2011, 1
      %v2013 = vmax.f32 %v2011, %v2012
      %v2014 = vsel %vm1383, %v1099, -inf
      %v2015 = vrot.slane %v2014, 4
      %v2016 = vmax.f32 %v2014, %v2015
      %v2017 = vrot.slane %v2016, 2
      %v2018 = vmax.f32 %v2016, %v2017
      %v2019 = vrot.slane %v2018, 1
      %v2020 = vmax.f32 %v2018, %v2019
      %v2021 = vsel %vm1383, %v1101, -inf
      %v2022 = vrot.slane %v2021, 4
      %v2023 = vmax.f32 %v2021, %v2022
      %v2024 = vrot.slane %v2023, 2
      %v2025 = vmax.f32 %v2023, %v2024
      %v2026 = vrot.slane %v2025, 1
      %v2027 = vmax.f32 %v2025, %v2026
      %v2028 = vsel %vm1383, %v1109, -inf
      %v2029 = vrot.slane %v2028, 4
      %v2030 = vmax.f32 %v2028, %v2029
      %v2031 = vrot.slane %v2030, 2
      %v2032 = vmax.f32 %v2030, %v2031
      %v2033 = vrot.slane %v2032, 1
      %v2034 = vmax.f32 %v2032, %v2033
      %v2035 = vsel %vm1383, %v1117, -inf
      %v2036 = vrot.slane %v2035, 4
      %v2037 = vmax.f32 %v2035, %v2036
      %v2038 = vrot.slane %v2037, 2
      %v2039 = vmax.f32 %v2037, %v2038
      %v2040 = vrot.slane %v2039, 1
      %v2041 = vmax.f32 %v2039, %v2040
      %v2042 = vsel %vm1383, %v1116, -inf
      %v2043 = vrot.slane %v2042, 4
      %v2044 = vmax.f32 %v2042, %v2043
      %v2045 = vrot.slane %v2044, 2
      %v2046 = vmax.f32 %v2044, %v2045
      %v2047 = vrot.slane %v2046, 1
      %v2048 = vmax.f32 %v2046, %v2047
      %v2049 = vsel %vm1383, %v1118, -inf
      %v2050 = vrot.slane %v2049, 4
      %v2051 = vmax.f32 %v2049, %v2050
      %v2052 = vrot.slane %v2051, 2
      %v2053 = vmax.f32 %v2051, %v2052
      %v2054 = vrot.slane %v2053, 1
      %v2055 = vmax.f32 %v2053, %v2054
      %v2056 = vsel %vm1383, %v1126, -inf
      %v2057 = vrot.slane %v2056, 4
      %v2058 = vmax.f32 %v2056, %v2057
      %v2059 = vrot.slane %v2058, 2
      %v2060 = vmax.f32 %v2058, %v2059
      %v2061 = vrot.slane %v2060, 1
      %v2062 = vmax.f32 %v2060, %v2061
      %v2063 = vsel %vm1383, %v1134, -inf
      %v2064 = vrot.slane %v2063, 4
      %v2065 = vmax.f32 %v2063, %v2064
      %v2066 = vrot.slane %v2065, 2
      %v2067 = vmax.f32 %v2065, %v2066
      %v2068 = vrot.slane %v2067, 1
      %v2069 = vmax.f32 %v2067, %v2068
      %v2070 = vsel %vm1383, %v1133, -inf
      %v2071 = vrot.slane %v2070, 4
      %v2072 = vmax.f32 %v2070, %v2071
      %v2073 = vrot.slane %v2072, 2
      %v2074 = vmax.f32 %v2072, %v2073
      %v2075 = vrot.slane %v2074, 1
      %v2076 = vmax.f32 %v2074, %v2075
      %v2077 = vsel %vm1383, %v1135, -inf
      %v2078 = vrot.slane %v2077, 4
      %v2079 = vmax.f32 %v2077, %v2078
      %v2080 = vrot.slane %v2079, 2
      %v2081 = vmax.f32 %v2079, %v2080
      %v2082 = vrot.slane %v2081, 1
      %v2083 = vmax.f32 %v2081, %v2082
      %v2084 = vsel %vm1383, %v1143, -inf
      %v2085 = vrot.slane %v2084, 4
      %v2086 = vmax.f32 %v2084, %v2085
      %v2087 = vrot.slane %v2086, 2
      %v2088 = vmax.f32 %v2086, %v2087
      %v2089 = vrot.slane %v2088, 1
      %v2090 = vmax.f32 %v2088, %v2089
      %v2091 = vsel %vm1383, %v1151, -inf
      %v2092 = vrot.slane %v2091, 4
      %v2093 = vmax.f32 %v2091, %v2092
      %v2094 = vrot.slane %v2093, 2
      %v2095 = vmax.f32 %v2093, %v2094
      %v2096 = vrot.slane %v2095, 1
      %v2097 = vmax.f32 %v2095, %v2096
      %v2098 = vsel %vm1383, %v1150, -inf
      %v2099 = vrot.slane %v2098, 4
      %v2100 = vmax.f32 %v2098, %v2099
      %v2101 = vrot.slane %v2100, 2
      %v2102 = vmax.f32 %v2100, %v2101
      %v2103 = vrot.slane %v2102, 1
      %v2104 = vmax.f32 %v2102, %v2103
      %v2105 = vsel %vm1383, %v1152, -inf
      %v2106 = vrot.slane %v2105, 4
      %v2107 = vmax.f32 %v2105, %v2106
      %v2108 = vrot.slane %v2107, 2
      %v2109 = vmax.f32 %v2107, %v2108
      %v2110 = vrot.slane %v2109, 1
      %v2111 = vmax.f32 %v2109, %v2110
      %v2112 = vsel %vm1383, %v1160, -inf
      %v2113 = vrot.slane %v2112, 4
      %v2114 = vmax.f32 %v2112, %v2113
      %v2115 = vrot.slane %v2114, 2
      %v2116 = vmax.f32 %v2114, %v2115
      %v2117 = vrot.slane %v2116, 1
      %v2118 = vmax.f32 %v2116, %v2117
      %v2119 = vsel %vm1383, %v1168, -inf
      %v2120 = vrot.slane %v2119, 4
      %v2121 = vmax.f32 %v2119, %v2120
      %v2122 = vrot.slane %v2121, 2
      %v2123 = vmax.f32 %v2121, %v2122
      %v2124 = vrot.slane %v2123, 1
      %v2125 = vmax.f32 %v2123, %v2124
      %v2126 = vsel %vm1383, %v1167, -inf
      %v2127 = vrot.slane %v2126, 4
      %v2128 = vmax.f32 %v2126, %v2127
      %v2129 = vrot.slane %v2128, 2
      %v2130 = vmax.f32 %v2128, %v2129
      %v2131 = vrot.slane %v2130, 1
      %v2132 = vmax.f32 %v2130, %v2131
      %v2133 = vsel %vm1383, %v1169, -inf
      %v2134 = vrot.slane %v2133, 4
      %v2135 = vmax.f32 %v2133, %v2134
      %v2136 = vrot.slane %v2135, 2
      %v2137 = vmax.f32 %v2135, %v2136
      %v2138 = vrot.slane %v2137, 1
      %v2139 = vmax.f32 %v2137, %v2138
      %v2140 = vsel %vm1383, %v1177, -inf
      %v2141 = vrot.slane %v2140, 4
      %v2142 = vmax.f32 %v2140, %v2141
      %v2143 = vrot.slane %v2142, 2
      %v2144 = vmax.f32 %v2142, %v2143
      %v2145 = vrot.slane %v2144, 1
      %v2146 = vmax.f32 %v2144, %v2145
      %v2147 = vsel %vm1383, %v1185, -inf
      %v2148 = vrot.slane %v2147, 4
      %v2149 = vmax.f32 %v2147, %v2148
      %v2150 = vrot.slane %v2149, 2
      %v2151 = vmax.f32 %v2149, %v2150
      %v2152 = vrot.slane %v2151, 1
      %v2153 = vmax.f32 %v2151, %v2152
      %v2154 = vsel %vm1383, %v1184, -inf
      %v2155 = vrot.slane %v2154, 4
      %v2156 = vmax.f32 %v2154, %v2155
      %v2157 = vrot.slane %v2156, 2
      %v2158 = vmax.f32 %v2156, %v2157
      %v2159 = vrot.slane %v2158, 1
      %v2160 = vmax.f32 %v2158, %v2159
      %v2161 = vsel %vm1383, %v1186, -inf
      %v2162 = vrot.slane %v2161, 4
      %v2163 = vmax.f32 %v2161, %v2162
      %v2164 = vrot.slane %v2163, 2
      %v2165 = vmax.f32 %v2163, %v2164
      %v2166 = vrot.slane %v2165, 1
      %v2167 = vmax.f32 %v2165, %v2166
      %v2168 = vsel %vm1383, %v1194, -inf
      %v2169 = vrot.slane %v2168, 4
      %v2170 = vmax.f32 %v2168, %v2169
      %v2171 = vrot.slane %v2170, 2
      %v2172 = vmax.f32 %v2170, %v2171
      %v2173 = vrot.slane %v2172, 1
      %v2174 = vmax.f32 %v2172, %v2173
      %v2175 = vsel %vm1383, %v1202, -inf
      %v2176 = vrot.slane %v2175, 4
      %v2177 = vmax.f32 %v2175, %v2176
      %v2178 = vrot.slane %v2177, 2
      %v2179 = vmax.f32 %v2177, %v2178
      %v2180 = vrot.slane %v2179, 1
      %v2181 = vmax.f32 %v2179, %v2180
      %v2182 = vsel %vm1383, %v1201, -inf
      %v2183 = vrot.slane %v2182, 4
      %v2184 = vmax.f32 %v2182, %v2183
      %v2185 = vrot.slane %v2184, 2
      %v2186 = vmax.f32 %v2184, %v2185
      %v2187 = vrot.slane %v2186, 1
      %v2188 = vmax.f32 %v2186, %v2187
      %v2189 = vsel %vm1383, %v1203, -inf
      %v2190 = vrot.slane %v2189, 4
      %v2191 = vmax.f32 %v2189, %v2190
      %v2192 = vrot.slane %v2191, 2
      %v2193 = vmax.f32 %v2191, %v2192
      %v2194 = vrot.slane %v2193, 1
      %v2195 = vmax.f32 %v2193, %v2194
      %v2196 = vsel %vm1383, %v1211, -inf
      %v2197 = vrot.slane %v2196, 4
      %v2198 = vmax.f32 %v2196, %v2197
      %v2199 = vrot.slane %v2198, 2
      %v2200 = vmax.f32 %v2198, %v2199
      %v2201 = vrot.slane %v2200, 1
      %v2202 = vmax.f32 %v2200, %v2201
      %v2203 = vsel %vm1383, %v1219, -inf
      %v2204 = vrot.slane %v2203, 4
      %v2205 = vmax.f32 %v2203, %v2204
      %v2206 = vrot.slane %v2205, 2
      %v2207 = vmax.f32 %v2205, %v2206
      %v2208 = vrot.slane %v2207, 1
      %v2209 = vmax.f32 %v2207, %v2208
      %v2210 = vsel %vm1383, %v1218, -inf
      %v2211 = vrot.slane %v2210, 4
      %v2212 = vmax.f32 %v2210, %v2211
      %v2213 = vrot.slane %v2212, 2
      %v2214 = vmax.f32 %v2212, %v2213
      %v2215 = vrot.slane %v2214, 1
      %v2216 = vmax.f32 %v2214, %v2215
      %v2217 = vsel %vm1383, %v1220, -inf
      %v2218 = vrot.slane %v2217, 4
      %v2219 = vmax.f32 %v2217, %v2218
      %v2220 = vrot.slane %v2219, 2
      %v2221 = vmax.f32 %v2219, %v2220
      %v2222 = vrot.slane %v2221, 1
      %v2223 = vmax.f32 %v2221, %v2222
      %v2224 = vsel %vm1383, %v1228, -inf
      %v2225 = vrot.slane %v2224, 4
      %v2226 = vmax.f32 %v2224, %v2225
      %v2227 = vrot.slane %v2226, 2
      %v2228 = vmax.f32 %v2226, %v2227
      %v2229 = vrot.slane %v2228, 1
      %v2230 = vmax.f32 %v2228, %v2229
      %v2231 = vsel %vm1383, %v1236, -inf
      %v2232 = vrot.slane %v2231, 4
      %v2233 = vmax.f32 %v2231, %v2232
      %v2234 = vrot.slane %v2233, 2
      %v2235 = vmax.f32 %v2233, %v2234
      %v2236 = vrot.slane %v2235, 1
      %v2237 = vmax.f32 %v2235, %v2236
      %v2238 = vsel %vm1383, %v1235, -inf
      %v2239 = vrot.slane %v2238, 4
      %v2240 = vmax.f32 %v2238, %v2239
      %v2241 = vrot.slane %v2240, 2
      %v2242 = vmax.f32 %v2240, %v2241
      %v2243 = vrot.slane %v2242, 1
      %v2244 = vmax.f32 %v2242, %v2243
      %v2245 = vsel %vm1383, %v1237, -inf
      %v2246 = vrot.slane %v2245, 4
      %v2247 = vmax.f32 %v2245, %v2246
      %v2248 = vrot.slane %v2247, 2
      %v2249 = vmax.f32 %v2247, %v2248
      %v2250 = vrot.slane %v2249, 1
      %v2251 = vmax.f32 %v2249, %v2250
      %v2252 = vsel %vm1383, %v1245, -inf
      %v2253 = vrot.slane %v2252, 4
      %v2254 = vmax.f32 %v2252, %v2253
      %v2255 = vrot.slane %v2254, 2
      %v2256 = vmax.f32 %v2254, %v2255
      %v2257 = vrot.slane %v2256, 1
      %v2258 = vmax.f32 %v2256, %v2257
      %v2259 = vsel %vm1383, %v1253, -inf
      %v2260 = vrot.slane %v2259, 4
      %v2261 = vmax.f32 %v2259, %v2260
      %v2262 = vrot.slane %v2261, 2
      %v2263 = vmax.f32 %v2261, %v2262
      %v2264 = vrot.slane %v2263, 1
      %v2265 = vmax.f32 %v2263, %v2264
      %v2266 = vsel %vm1383, %v1252, -inf
      %v2267 = vrot.slane %v2266, 4
      %v2268 = vmax.f32 %v2266, %v2267
      %v2269 = vrot.slane %v2268, 2
      %v2270 = vmax.f32 %v2268, %v2269
      %v2271 = vrot.slane %v2270, 1
      %v2272 = vmax.f32 %v2270, %v2271
      %v2273 = vsel %vm1383, %v1254, -inf
      %v2274 = vrot.slane %v2273, 4
      %v2275 = vmax.f32 %v2273, %v2274
      %v2276 = vrot.slane %v2275, 2
      %v2277 = vmax.f32 %v2275, %v2276
      %v2278 = vrot.slane %v2277, 1
      %v2279 = vmax.f32 %v2277, %v2278
      %vm2280 = vcmask 523264
      %v2281 = vsel %vm2280, %v1390, -inf
      %v2282 = vsel %vm2280, %v1446, -inf
      %v2283 = vmax.f32 %v2281, %v2282
      %v2284 = vsel %vm2280, %v1397, -inf
      %v2285 = vsel %vm2280, %v1453, -inf
      %v2286 = vmax.f32 %v2284, %v2285
      %v2287 = vsel %vm2280, %v1404, -inf
      %v2288 = vsel %vm2280, %v1460, -inf
      %v2289 = vmax.f32 %v2287, %v2288
      %v2290 = vsel %vm2280, %v1411, -inf
      %v2291 = vsel %vm2280, %v1467, -inf
      %v2292 = vmax.f32 %v2290, %v2291
      %v2293 = vsel %vm2280, %v1418, -inf
      %v2294 = vsel %vm2280, %v1474, -inf
      %v2295 = vmax.f32 %v2293, %v2294
      %v2296 = vsel %vm2280, %v1425, -inf
      %v2297 = vsel %vm2280, %v1481, -inf
      %v2298 = vmax.f32 %v2296, %v2297
      %v2299 = vsel %vm2280, %v1432, -inf
      %v2300 = vsel %vm2280, %v1488, -inf
      %v2301 = vmax.f32 %v2299, %v2300
      %v2302 = vsel %vm2280, %v1439, -inf
      %v2303 = vsel %vm2280, %v1495, -inf
      %v2304 = vmax.f32 %v2302, %v2303
      %v2305 = vsel %vm2280, %v1502, -inf
      %v2306 = vsel %vm2280, %v1558, -inf
      %v2307 = vmax.f32 %v2305, %v2306
      %v2308 = vsel %vm2280, %v1509, -inf
      %v2309 = vsel %vm2280, %v1565, -inf
      %v2310 = vmax.f32 %v2308, %v2309
      %v2311 = vsel %vm2280, %v1516, -inf
      %v2312 = vsel %vm2280, %v1572, -inf
      %v2313 = vmax.f32 %v2311, %v2312
      %v2314 = vsel %vm2280, %v1523, -inf
      %v2315 = vsel %vm2280, %v1579, -inf
      %v2316 = vmax.f32 %v2314, %v2315
      %v2317 = vsel %vm2280, %v1530, -inf
      %v2318 = vsel %vm2280, %v1586, -inf
      %v2319 = vmax.f32 %v2317, %v2318
      %v2320 = vsel %vm2280, %v1537, -inf
      %v2321 = vsel %vm2280, %v1593, -inf
      %v2322 = vmax.f32 %v2320, %v2321
      %v2323 = vsel %vm2280, %v1544, -inf
      %v2324 = vsel %vm2280, %v1600, -inf
      %v2325 = vmax.f32 %v2323, %v2324
      %v2326 = vsel %vm2280, %v1551, -inf
      %v2327 = vsel %vm2280, %v1607, -inf
      %v2328 = vmax.f32 %v2326, %v2327
      %v2329 = vsel %vm2280, %v1614, -inf
      %v2330 = vsel %vm2280, %v1670, -inf
      %v2331 = vmax.f32 %v2329, %v2330
      %v2332 = vsel %vm2280, %v1621, -inf
      %v2333 = vsel %vm2280, %v1677, -inf
      %v2334 = vmax.f32 %v2332, %v2333
      %v2335 = vsel %vm2280, %v1628, -inf
      %v2336 = vsel %vm2280, %v1684, -inf
      %v2337 = vmax.f32 %v2335, %v2336
      %v2338 = vsel %vm2280, %v1635, -inf
      %v2339 = vsel %vm2280, %v1691, -inf
      %v2340 = vmax.f32 %v2338, %v2339
      %v2341 = vsel %vm2280, %v1642, -inf
      %v2342 = vsel %vm2280, %v1698, -inf
      %v2343 = vmax.f32 %v2341, %v2342
      %v2344 = vsel %vm2280, %v1649, -inf
      %v2345 = vsel %vm2280, %v1705, -inf
      %v2346 = vmax.f32 %v2344, %v2345
      %v2347 = vsel %vm2280, %v1656, -inf
      %v2348 = vsel %vm2280, %v1712, -inf
      %v2349 = vmax.f32 %v2347, %v2348
      %v2350 = vsel %vm2280, %v1663, -inf
      %v2351 = vsel %vm2280, %v1719, -inf
      %v2352 = vmax.f32 %v2350, %v2351
      %v2353 = vsel %vm2280, %v1726, -inf
      %v2354 = vsel %vm2280, %v1782, -inf
      %v2355 = vmax.f32 %v2353, %v2354
      %v2356 = vsel %vm2280, %v1733, -inf
      %v2357 = vsel %vm2280, %v1789, -inf
      %v2358 = vmax.f32 %v2356, %v2357
      %v2359 = vsel %vm2280, %v1740, -inf
      %v2360 = vsel %vm2280, %v1796, -inf
      %v2361 = vmax.f32 %v2359, %v2360
      %v2362 = vsel %vm2280, %v1747, -inf
      %v2363 = vsel %vm2280, %v1803, -inf
      %v2364 = vmax.f32 %v2362, %v2363
      %v2365 = vsel %vm2280, %v1754, -inf
      %v2366 = vsel %vm2280, %v1810, -inf
      %v2367 = vmax.f32 %v2365, %v2366
      %v2368 = vsel %vm2280, %v1761, -inf
      %v2369 = vsel %vm2280, %v1817, -inf
      %v2370 = vmax.f32 %v2368, %v2369
      %v2371 = vsel %vm2280, %v1768, -inf
      %v2372 = vsel %vm2280, %v1824, -inf
      %v2373 = vmax.f32 %v2371, %v2372
      %v2374 = vsel %vm2280, %v1775, -inf
      %v2375 = vsel %vm2280, %v1831, -inf
      %v2376 = vmax.f32 %v2374, %v2375
      %v2377 = vsel %vm2280, %v1838, -inf
      %v2378 = vsel %vm2280, %v1894, -inf
      %v2379 = vmax.f32 %v2377, %v2378
      %v2380 = vsel %vm2280, %v1845, -inf
      %v2381 = vsel %vm2280, %v1901, -inf
      %v2382 = vmax.f32 %v2380, %v2381
      %v2383 = vsel %vm2280, %v1852, -inf
      %v2384 = vsel %vm2280, %v1908, -inf
      %v2385 = vmax.f32 %v2383, %v2384
      %v2386 = vsel %vm2280, %v1859, -inf
      %v2387 = vsel %vm2280, %v1915, -inf
      %v2388 = vmax.f32 %v2386, %v2387
      %v2389 = vsel %vm2280, %v1866, -inf
      %v2390 = vsel %vm2280, %v1922, -inf
      %v2391 = vmax.f32 %v2389, %v2390
      %v2392 = vsel %vm2280, %v1873, -inf
      %v2393 = vsel %vm2280, %v1929, -inf
      %v2394 = vmax.f32 %v2392, %v2393
      %v2395 = vsel %vm2280, %v1880, -inf
      %v2396 = vsel %vm2280, %v1936, -inf
      %v2397 = vmax.f32 %v2395, %v2396
      %v2398 = vsel %vm2280, %v1887, -inf
      %v2399 = vsel %vm2280, %v1943, -inf
      %v2400 = vmax.f32 %v2398, %v2399
      %v2401 = vsel %vm2280, %v1950, -inf
      %v2402 = vsel %vm2280, %v2006, -inf
      %v2403 = vmax.f32 %v2401, %v2402
      %v2404 = vsel %vm2280, %v1957, -inf
      %v2405 = vsel %vm2280, %v2013, -inf
      %v2406 = vmax.f32 %v2404, %v2405
      %v2407 = vsel %vm2280, %v1964, -inf
      %v2408 = vsel %vm2280, %v2020, -inf
      %v2409 = vmax.f32 %v2407, %v2408
      %v2410 = vsel %vm2280, %v1971, -inf
      %v2411 = vsel %vm2280, %v2027, -inf
      %v2412 = vmax.f32 %v2410, %v2411
      %v2413 = vsel %vm2280, %v1978, -inf
      %v2414 = vsel %vm2280, %v2034, -inf
      %v2415 = vmax.f32 %v2413, %v2414
      %v2416 = vsel %vm2280, %v1985, -inf
      %v2417 = vsel %vm2280, %v2041, -inf
      %v2418 = vmax.f32 %v2416, %v2417
      %v2419 = vsel %vm2280, %v1992, -inf
      %v2420 = vsel %vm2280, %v2048, -inf
      %v2421 = vmax.f32 %v2419, %v2420
      %v2422 = vsel %vm2280, %v1999, -inf
      %v2423 = vsel %vm2280, %v2055, -inf
      %v2424 = vmax.f32 %v2422, %v2423
      %v2425 = vsel %vm2280, %v2062, -inf
      %v2426 = vsel %vm2280, %v2118, -inf
      %v2427 = vmax.f32 %v2425, %v2426
      %v2428 = vsel %vm2280, %v2069, -inf
      %v2429 = vsel %vm2280, %v2125, -inf
      %v2430 = vmax.f32 %v2428, %v2429
      %v2431 = vsel %vm2280, %v2076, -inf
      %v2432 = vsel %vm2280, %v2132, -inf
      %v2433 = vmax.f32 %v2431, %v2432
      %v2434 = vsel %vm2280, %v2083, -inf
      %v2435 = vsel %vm2280, %v2139, -inf
      %v2436 = vmax.f32 %v2434, %v2435
      %v2437 = vsel %vm2280, %v2090, -inf
      %v2438 = vsel %vm2280, %v2146, -inf
      %v2439 = vmax.f32 %v2437, %v2438
      %v2440 = vsel %vm2280, %v2097, -inf
      %v2441 = vsel %vm2280, %v2153, -inf
      %v2442 = vmax.f32 %v2440, %v2441
      %v2443 = vsel %vm2280, %v2104, -inf
      %v2444 = vsel %vm2280, %v2160, -inf
      %v2445 = vmax.f32 %v2443, %v2444
      %v2446 = vsel %vm2280, %v2111, -inf
      %v2447 = vsel %vm2280, %v2167, -inf
      %v2448 = vmax.f32 %v2446, %v2447
      %v2449 = vsel %vm2280, %v2174, -inf
      %v2450 = vsel %vm2280, %v2230, -inf
      %v2451 = vmax.f32 %v2449, %v2450
      %v2452 = vsel %vm2280, %v2181, -inf
      %v2453 = vsel %vm2280, %v2237, -inf
      %v2454 = vmax.f32 %v2452, %v2453
      %v2455 = vsel %vm2280, %v2188, -inf
      %v2456 = vsel %vm2280, %v2244, -inf
      %v2457 = vmax.f32 %v2455, %v2456
      %v2458 = vsel %vm2280, %v2195, -inf
      %v2459 = vsel %vm2280, %v2251, -inf
      %v2460 = vmax.f32 %v2458, %v2459
      %v2461 = vsel %vm2280, %v2202, -inf
      %v2462 = vsel %vm2280, %v2258, -inf
      %v2463 = vmax.f32 %v2461, %v2462
      %v2464 = vsel %vm2280, %v2209, -inf
      %v2465 = vsel %vm2280, %v2265, -inf
      %v2466 = vmax.f32 %v2464, %v2465
      %v2467 = vsel %vm2280, %v2216, -inf
      %v2468 = vsel %vm2280, %v2272, -inf
      %v2469 = vmax.f32 %v2467, %v2468
      %v2470 = vsel %vm2280, %v2223, -inf
      %v2471 = vsel %vm2280, %v2279, -inf
      %v2472 = vmax.f32 %v2470, %v2471
      %vm2537 = vcmask 1041409
      %v2538 = vsel %vm2537, %v2286, %v2283
      %vm2539 = vcmask 1042434
      %v2540 = vsel %vm2539, %v2289, %v2538
      %vm2541 = vcmask 1043459
      %v2542 = vsel %vm2541, %v2292, %v2540
      %vm2543 = vcmask 1044484
      %v2544 = vsel %vm2543, %v2295, %v2542
      %vm2545 = vcmask 1045509
      %v2546 = vsel %vm2545, %v2298, %v2544
      %vm2547 = vcmask 1046534
      %v2548 = vsel %vm2547, %v2301, %v2546
      %vm2549 = vcmask 1047559
      %v2550 = vsel %vm2549, %v2304, %v2548
      %v2551 = vsel %vm2537, %v2310, %v2307
      %v2552 = vsel %vm2539, %v2313, %v2551
      %v2553 = vsel %vm2541, %v2316, %v2552
      %v2554 = vsel %vm2543, %v2319, %v2553
      %v2555 = vsel %vm2545, %v2322, %v2554
      %v2556 = vsel %vm2547, %v2325, %v2555
      %v2557 = vsel %vm2549, %v2328, %v2556
      %v2558 = vsel %vm2537, %v2334, %v2331
      %v2559 = vsel %vm2539, %v2337, %v2558
      %v2560 = vsel %vm2541, %v2340, %v2559
      %v2561 = vsel %vm2543, %v2343, %v2560
      %v2562 = vsel %vm2545, %v2346, %v2561
      %v2563 = vsel %vm2547, %v2349, %v2562
      %v2564 = vsel %vm2549, %v2352, %v2563
      %v2565 = vsel %vm2537, %v2358, %v2355
      %v2566 = vsel %vm2539, %v2361, %v2565
      %v2567 = vsel %vm2541, %v2364, %v2566
      %v2568 = vsel %vm2543, %v2367, %v2567
      %v2569 = vsel %vm2545, %v2370, %v2568
      %v2570 = vsel %vm2547, %v2373, %v2569
      %v2571 = vsel %vm2549, %v2376, %v2570
      %v2572 = vsel %vm2537, %v2382, %v2379
      %v2573 = vsel %vm2539, %v2385, %v2572
      %v2574 = vsel %vm2541, %v2388, %v2573
      %v2575 = vsel %vm2543, %v2391, %v2574
      %v2576 = vsel %vm2545, %v2394, %v2575
      %v2577 = vsel %vm2547, %v2397, %v2576
      %v2578 = vsel %vm2549, %v2400, %v2577
      %v2579 = vsel %vm2537, %v2406, %v2403
      %v2580 = vsel %vm2539, %v2409, %v2579
      %v2581 = vsel %vm2541, %v2412, %v2580
      %v2582 = vsel %vm2543, %v2415, %v2581
      %v2583 = vsel %vm2545, %v2418, %v2582
      %v2584 = vsel %vm2547, %v2421, %v2583
      %v2585 = vsel %vm2549, %v2424, %v2584
      %v2586 = vsel %vm2537, %v2430, %v2427
      %v2587 = vsel %vm2539, %v2433, %v2586
      %v2588 = vsel %vm2541, %v2436, %v2587
      %v2589 = vsel %vm2543, %v2439, %v2588
      %v2590 = vsel %vm2545, %v2442, %v2589
      %v2591 = vsel %vm2547, %v2445, %v2590
      %v2592 = vsel %vm2549, %v2448, %v2591
      %v2593 = vsel %vm2537, %v2454, %v2451
      %v2594 = vsel %vm2539, %v2457, %v2593
      %v2595 = vsel %vm2541, %v2460, %v2594
      %v2596 = vsel %vm2543, %v2463, %v2595
      %v2597 = vsel %vm2545, %v2466, %v2596
      %v2598 = vsel %vm2547, %v2469, %v2597
      %v2599 = vsel %vm2549, %v2472, %v2598
      %v2601 = vrot.slane 0.0, 7
      %v2602 = vrot.slane %v2550, 7
      %v2603 = vrot.slane %v2557, 7
      %v2604 = vrot.slane %v2564, 7
      %v2605 = vrot.slane %v2571, 7
      %v2606 = vrot.slane %v2578, 7
      %v2607 = vrot.slane %v2585, 7
      %v2608 = vrot.slane %v2592, 7
      %v2609 = vrot.slane %v2599, 7
      %vm2619 = vcmask 1040384
      %v2620 = vsel %vm2619, 0.0, %v2601
      %v2621 = vsel %vm2619, 0.0, %v2602
      %v2622 = vsel %vm2619, 0.0, %v2603
      %v2623 = vsel %vm2619, 0.0, %v2604
      %v2624 = vsel %vm2619, 0.0, %v2605
      %v2625 = vsel %vm2619, 0.0, %v2606
      %v2626 = vsel %vm2619, 0.0, %v2607
      %v2627 = vsel %vm2619, 0.0, %v2608
      %v2628 = vsel %vm2619, 0.0, %v2609
      %v2629 = vsel %vm2619, %v2601, 0.0
      %v2630 = vsel %vm2619, %v2602, 0.0
      %v2631 = vsel %vm2619, %v2603, 0.0
      %v2632 = vsel %vm2619, %v2604, 0.0
      %v2633 = vsel %vm2619, %v2605, 0.0
      %v2634 = vsel %vm2619, %v2606, 0.0
      %v2635 = vsel %vm2619, %v2607, 0.0
      %v2636 = vsel %vm2619, %v2608, 0.0
      %v2637 = vsel %vm2619, %v2609, 0.0
      %vm2654 = vcmask 1046528
      %v2655 = vrot.slane %v2620, 1
      %v2656 = vrot.slane %v2629, 1
      %v2657 = vsel %vm2654, %v2655, %v2656
      %v2658 = vrot.slane %v2621, 1
      %v2659 = vrot.slane %v2630, 1
      %v2660 = vsel %vm2654, %v2658, %v2659
      %v2661 = vrot.slane %v2622, 1
      %v2662 = vrot.slane %v2631, 1
      %v2663 = vsel %vm2654, %v2661, %v2662
      %v2664 = vrot.slane %v2623, 1
      %v2665 = vrot.slane %v2632, 1
      %v2666 = vsel %vm2654, %v2664, %v2665
      %v2667 = vrot.slane %v2624, 1
      %v2668 = vrot.slane %v2633, 1
      %v2669 = vsel %vm2654, %v2667, %v2668
      %v2670 = vrot.slane %v2625, 1
      %v2671 = vrot.slane %v2634, 1
      %v2672 = vsel %vm2654, %v2670, %v2671
      %v2673 = vrot.slane %v2626, 1
      %v2674 = vrot.slane %v2635, 1
      %v2675 = vsel %vm2654, %v2673, %v2674
      %v2676 = vrot.slane %v2627, 1
      %v2677 = vrot.slane %v2636, 1
      %v2678 = vsel %vm2654, %v2676, %v2677
      %vm2679 = vcmask 1045504
      %v2680 = vrot.slane %v2620, 2
      %v2681 = vrot.slane %v2629, 2
      %v2682 = vsel %vm2679, %v2680, %v2681
      %v2683 = vrot.slane %v2621, 2
      %v2684 = vrot.slane %v2630, 2
      %v2685 = vsel %vm2679, %v2683, %v2684
      %v2686 = vrot.slane %v2622, 2
      %v2687 = vrot.slane %v2631, 2
      %v2688 = vsel %vm2679, %v2686, %v2687
      %v2689 = vrot.slane %v2623, 2
      %v2690 = vrot.slane %v2632, 2
      %v2691 = vsel %vm2679, %v2689, %v2690
      %v2692 = vrot.slane %v2624, 2
      %v2693 = vrot.slane %v2633, 2
      %v2694 = vsel %vm2679, %v2692, %v2693
      %v2695 = vrot.slane %v2625, 2
      %v2696 = vrot.slane %v2634, 2
      %v2697 = vsel %vm2679, %v2695, %v2696
      %v2698 = vrot.slane %v2626, 2
      %v2699 = vrot.slane %v2635, 2
      %v2700 = vsel %vm2679, %v2698, %v2699
      %v2701 = vrot.slane %v2627, 2
      %v2702 = vrot.slane %v2636, 2
      %v2703 = vsel %vm2679, %v2701, %v2702
      %v2714 = vrot.slane %v2628, 1
      %v2715 = vrot.slane %v2637, 1
      %v2716 = vsel %vm2654, %v2714, %v2715
      %v2725 = vrot.slane %v2628, 2
      %v2726 = vrot.slane %v2637, 2
      %v2727 = vsel %vm2679, %v2725, %v2726
      %2728 = vrot.lane.b32.xlu0 %v2657, 64
      %v2729 = vpop.permute.xlu0 %2728
      %2730 = vrot.lane.b32.xlu0 %v2660, 64
      %v2731 = vpop.permute.xlu0 %2730
      %2732 = vrot.lane.b32.xlu0 %v2663, 64
      %v2733 = vpop.permute.xlu0 %2732
      %2734 = vrot.lane.b32.xlu0 %v2666, 64
      %v2735 = vpop.permute.xlu0 %2734
      %2736 = vrot.lane.b32.xlu0 %v2669, 64
      %v2737 = vpop.permute.xlu0 %2736
      %2738 = vrot.lane.b32.xlu0 %v2672, 64
      %v2739 = vpop.permute.xlu0 %2738
      %2740 = vrot.lane.b32.xlu0 %v2675, 64
      %v2741 = vpop.permute.xlu0 %2740
      %2742 = vrot.lane.b32.xlu0 %v2678, 64
      %v2743 = vpop.permute.xlu0 %2742
      %2752 = vrot.lane.b32.xlu0 %v2621, 64
      %v2753 = vpop.permute.xlu0 %2752
      %2754 = vrot.lane.b32.xlu0 %v2622, 64
      %v2755 = vpop.permute.xlu0 %2754
      %2756 = vrot.lane.b32.xlu0 %v2623, 64
      %v2757 = vpop.permute.xlu0 %2756
      %2758 = vrot.lane.b32.xlu0 %v2624, 64
      %v2759 = vpop.permute.xlu0 %2758
      %2760 = vrot.lane.b32.xlu0 %v2625, 64
      %v2761 = vpop.permute.xlu0 %2760
      %2762 = vrot.lane.b32.xlu0 %v2626, 64
      %v2763 = vpop.permute.xlu0 %2762
      %2764 = vrot.lane.b32.xlu0 %v2627, 64
      %v2765 = vpop.permute.xlu0 %2764
      %2766 = vrot.lane.b32.xlu0 %v2628, 64
      %v2767 = vpop.permute.xlu0 %2766
      %2776 = vrot.lane.b32.xlu0 %v2685, 64
      %v2777 = vpop.permute.xlu0 %2776
      %2778 = vrot.lane.b32.xlu0 %v2688, 64
      %v2779 = vpop.permute.xlu0 %2778
      %2780 = vrot.lane.b32.xlu0 %v2691, 64
      %v2781 = vpop.permute.xlu0 %2780
      %2782 = vrot.lane.b32.xlu0 %v2694, 64
      %v2783 = vpop.permute.xlu0 %2782
      %2784 = vrot.lane.b32.xlu0 %v2697, 64
      %v2785 = vpop.permute.xlu0 %2784
      %2786 = vrot.lane.b32.xlu0 %v2700, 64
      %v2787 = vpop.permute.xlu0 %2786
      %2788 = vrot.lane.b32.xlu0 %v2703, 64
      %v2789 = vpop.permute.xlu0 %2788
      %2790 = vrot.lane.b32.xlu0 %v2727, 64
      %v2791 = vpop.permute.xlu0 %2790
      %2800 = vrot.lane.b32.xlu0 %v2716, 64
      %v2801 = vpop.permute.xlu0 %2800
      %v2803 = vsel %vm2280, %v2620, %v2729
      %v2804 = vsel %vm2280, %v2621, %v2731
      %v2805 = vsel %vm2280, %v2622, %v2733
      %v2806 = vsel %vm2280, %v2623, %v2735
      %v2807 = vsel %vm2280, %v2624, %v2737
      %v2808 = vsel %vm2280, %v2625, %v2739
      %v2809 = vsel %vm2280, %v2626, %v2741
      %v2810 = vsel %vm2280, %v2627, %v2743
      %v2811 = vsel %vm2280, %v2682, %v2753
      %v2812 = vsel %vm2280, %v2685, %v2755
      %v2813 = vsel %vm2280, %v2688, %v2757
      %v2814 = vsel %vm2280, %v2691, %v2759
      %v2815 = vsel %vm2280, %v2694, %v2761
      %v2816 = vsel %vm2280, %v2697, %v2763
      %v2817 = vsel %vm2280, %v2700, %v2765
      %v2818 = vsel %vm2280, %v2703, %v2767
      %v2819 = vsel %vm2280, %v2660, %v2777
      %v2820 = vsel %vm2280, %v2663, %v2779
      %v2821 = vsel %vm2280, %v2666, %v2781
      %v2822 = vsel %vm2280, %v2669, %v2783
      %v2823 = vsel %vm2280, %v2672, %v2785
      %v2824 = vsel %vm2280, %v2675, %v2787
      %v2825 = vsel %vm2280, %v2678, %v2789
      %v2826 = vsel %vm2280, %v2716, %v2791
      %v2827 = vsel %vm2280, %v2628, %v2801
      %v2828 = vld [vmem:[%s3] sm:$0xff]
      %v2829 = vld [vmem:[%s3 + $0x8] sm:$0xff]
      %v2830 = vld [vmem:[%s3 + $0x10] sm:$0xff]
      %v2831 = vld [vmem:[%s3 + $0x18] sm:$0xff]
      %v2832 = vld [vmem:[%s3 + $0x20] sm:$0xff]
      %v2833 = vld [vmem:[%s3 + $0x28] sm:$0xff]
      %v2834 = vld [vmem:[%s3 + $0x30] sm:$0xff]
      %v2835 = vld [vmem:[%s3 + $0x38] sm:$0xff]
      %v2836 = vld [vmem:[%s3 + $0x40] sm:$0xff]
      %v2837 = vld [vmem:[%s3 + $0x48] sm:$0xff]
      %v2838 = vld [vmem:[%s3 + $0x50] sm:$0xff]
      %v2839 = vld [vmem:[%s3 + $0x58] sm:$0xff]
      %v2840 = vld [vmem:[%s3 + $0x60] sm:$0xff]
      %v2841 = vld [vmem:[%s3 + $0x68] sm:$0xff]
      %v2842 = vld [vmem:[%s3 + $0x70] sm:$0xff]
      %v2843 = vld [vmem:[%s3 + $0x78] sm:$0xff]
      %v2844 = vld [vmem:[%s3 + $0x80] sm:$0xff]
      %v2845 = vld [vmem:[%s3 + $0x88] sm:$0xff]
      %v2846 = vld [vmem:[%s3 + $0x90] sm:$0xff]
      %v2847 = vld [vmem:[%s3 + $0x98] sm:$0xff]
      %v2848 = vld [vmem:[%s3 + $0xa0] sm:$0xff]
      %v2849 = vld [vmem:[%s3 + $0xa8] sm:$0xff]
      %v2850 = vld [vmem:[%s3 + $0xb0] sm:$0xff]
      %v2851 = vld [vmem:[%s3 + $0xb8] sm:$0xff]
      %v2852 = vld [vmem:[%s3 + $0xc0] sm:$0xff]
      %v2853 = vld [vmem:[%s3 + $0xc8] sm:$0xff]
      %v2854 = vld [vmem:[%s3 + $0xd0] sm:$0xff]
      %v2855 = vld [vmem:[%s3 + $0xd8] sm:$0xff]
      %v2856 = vld [vmem:[%s3 + $0xe0] sm:$0xff]
      %v2857 = vld [vmem:[%s3 + $0xe8] sm:$0xff]
      %v2858 = vld [vmem:[%s3 + $0xf0] sm:$0xff]
      %v2859 = vld [vmem:[%s3 + $0xf8] sm:$0xff]
      %v2860 = vld [vmem:[%s3 + $0x100] sm:$0xff]
      %v2861 = vld [vmem:[%s3 + $0x108] sm:$0xff]
      %v2862 = vld [vmem:[%s3 + $0x110] sm:$0xff]
      %v2863 = vld [vmem:[%s3 + $0x118] sm:$0xff]
      %v2864 = vld [vmem:[%s3 + $0x120] sm:$0xff]
      %v2865 = vld [vmem:[%s3 + $0x128] sm:$0xff]
      %v2866 = vld [vmem:[%s3 + $0x130] sm:$0xff]
      %v2867 = vld [vmem:[%s3 + $0x138] sm:$0xff]
      %v2868 = vld [vmem:[%s3 + $0x140] sm:$0xff]
      %v2869 = vld [vmem:[%s3 + $0x148] sm:$0xff]
      %v2870 = vld [vmem:[%s3 + $0x150] sm:$0xff]
      %v2871 = vld [vmem:[%s3 + $0x158] sm:$0xff]
      %v2872 = vld [vmem:[%s3 + $0x160] sm:$0xff]
      %v2873 = vld [vmem:[%s3 + $0x168] sm:$0xff]
      %v2874 = vld [vmem:[%s3 + $0x170] sm:$0xff]
      %v2875 = vld [vmem:[%s3 + $0x178] sm:$0xff]
      %v2876 = vld [vmem:[%s3 + $0x180] sm:$0xff]
      %v2877 = vld [vmem:[%s3 + $0x188] sm:$0xff]
      %v2878 = vld [vmem:[%s3 + $0x190] sm:$0xff]
      %v2879 = vld [vmem:[%s3 + $0x198] sm:$0xff]
      %v2880 = vld [vmem:[%s3 + $0x1a0] sm:$0xff]
      %v2881 = vld [vmem:[%s3 + $0x1a8] sm:$0xff]
      %v2882 = vld [vmem:[%s3 + $0x1b0] sm:$0xff]
      %v2883 = vld [vmem:[%s3 + $0x1b8] sm:$0xff]
      %v2884 = vld [vmem:[%s3 + $0x1c0] sm:$0xff]
      %v2885 = vld [vmem:[%s3 + $0x1c8] sm:$0xff]
      %v2886 = vld [vmem:[%s3 + $0x1d0] sm:$0xff]
      %v2887 = vld [vmem:[%s3 + $0x1d8] sm:$0xff]
      %v2888 = vld [vmem:[%s3 + $0x1e0] sm:$0xff]
      %v2889 = vld [vmem:[%s3 + $0x1e8] sm:$0xff]
      %v2890 = vld [vmem:[%s3 + $0x1f0] sm:$0xff]
      %v2891 = vld [vmem:[%s3 + $0x1f8] sm:$0xff]
      %v2892 = vld [vmem:[%s3 + $0x200] sm:$0xff]
      %v2893 = vld [vmem:[%s3 + $0x208] sm:$0xff]
      %v2894 = vld [vmem:[%s3 + $0x210] sm:$0xff]
      %v2895 = vld [vmem:[%s3 + $0x218] sm:$0xff]
      %v2896 = vld [vmem:[%s3 + $0x220] sm:$0xff]
      %v2897 = vld [vmem:[%s3 + $0x228] sm:$0xff]
      %v2898 = vld [vmem:[%s3 + $0x230] sm:$0xff]
      %v2899 = vld [vmem:[%s3 + $0x238] sm:$0xff]
      %v2900 = vld [vmem:[%s4] sm:$0x1]
      %v2902 = vlaneseq
      %v2903 = vshrl.u32 %v2902, 7
      %v2904 = vsub.s32 0, %v2903
      %v2905 = vrot.slane %v2900, %v2904
      %v2907 = vsel %vm2280, %v2688, 0
      %v2909 = vsel %vm2280, %v2691, 0
      %v2911 = vsel %vm2280, %v2694, 0
      %v2913 = vsel %vm2280, %v2697, 0
      %v2915 = vsel %vm2280, %v2700, 0
      %v2917 = vsel %vm2280, %v2703, 0
      %v2919 = vsel %vm2280, %v2727, 0
      %v2921 = vsel %vm2280, %v2682, 0
      %2923 = vmatprep.subr.mxu0 0.0
      %2924 = vmatpush1.msra.mxu0 %v2828
      %2925 = vmatprep.subr.mxu0 0.0
      %2926 = vmatpush1.msra.mxu0 %v2829
      %2927 = vmatprep.subr.mxu0 0.0
      %2928 = vmatpush1.msra.mxu0 %v2830
      %2929 = vmatprep.subr.mxu0 0.0
      %2930 = vmatpush1.msra.mxu0 %v2831
      %2931 = vmatprep.subr.mxu0 0.0
      %2932 = vmatpush1.msra.mxu0 %v2832
      %2933 = vmatprep.subr.mxu0 0.0
      %2934 = vmatpush1.msra.mxu0 %v2833
      %2935 = vmatprep.subr.mxu0 0.0
      %2936 = vmatpush1.msra.mxu0 %v2834
      %2937 = vmatprep.subr.mxu0 0.0
      %2938 = vmatpush1.msra.mxu0 %v2835
      %2939 = vmatprep.subr.mxu0 0.0
      %2940 = vmatpush1.msra.mxu0 %v2836
      %2941 = vmatprep.subr.mxu0 0.0
      %2942 = vmatpush1.msra.mxu0 %v2837
      %2943 = vmatprep.subr.mxu0 0.0
      %2944 = vmatpush1.msra.mxu0 %v2838
      %2945 = vmatprep.subr.mxu0 0.0
      %2946 = vmatpush1.msra.mxu0 %v2839
      %2947 = vmatprep.subr.mxu0 0.0
      %2948 = vmatpush1.msra.mxu0 %v2840
      %2949 = vmatprep.subr.mxu0 0.0
      %2950 = vmatpush1.msra.mxu0 %v2841
      %2951 = vmatprep.subr.mxu0 0.0
      %2952 = vmatpush1.msra.mxu0 %v2842
      %2953 = vmatprep.subr.mxu0 0.0
      %2954 = vmatpush1.msra.mxu0 %v2843
      %2955 = vmatprep.subr.mxu0 0.0
      %2956 = vmatpush1.msra.mxu0 %v2844
      %2957 = vmatprep.subr.mxu0 0.0
      %2958 = vmatpush1.msra.mxu0 %v2845
      %2959 = vmatprep.subr.mxu0 0.0
      %2960 = vmatpush1.msra.mxu0 %v2846
      %2961 = vmatprep.subr.mxu0 0.0
      %2962 = vmatpush1.msra.mxu0 %v2847
      %2963 = vmatprep.subr.mxu0 0.0
      %2964 = vmatpush1.msra.mxu0 %v2848
      %2965 = vmatprep.subr.mxu0 0.0
      %2966 = vmatpush1.msra.mxu0 %v2849
      %2967 = vmatprep.subr.mxu0 0.0
      %2968 = vmatpush1.msra.mxu0 %v2850
      %2969 = vmatprep.subr.mxu0 0.0
      %2970 = vmatpush1.msra.mxu0 %v2851
      %2971 = vmatprep.subr.mxu0 0.0
      %2972 = vmatpush1.msra.mxu0 %v2852
      %2973 = vmatprep.subr.mxu0 0.0
      %2974 = vmatpush1.msra.mxu0 %v2853
      %2975 = vmatprep.subr.mxu0 0.0
      %2976 = vmatpush1.msra.mxu0 %v2854
      %2977 = vmatprep.subr.mxu0 0.0
      %2978 = vmatpush1.msra.mxu0 %v2855
      %2979 = vmatprep.subr.mxu0 0.0
      %2980 = vmatpush1.msra.mxu0 %v2856
      %2981 = vmatprep.subr.mxu0 0.0
      %2982 = vmatpush1.msra.mxu0 %v2857
      %2983 = vmatprep.subr.mxu0 0.0
      %2984 = vmatpush1.msra.mxu0 %v2858
      %2985 = vmatprep.subr.mxu0 0.0
      %2986 = vmatpush1.msra.mxu0 %v2859
      %2987 = vmatprep.mubr.f32.mxu0 %v2811
      %2988 = vmatmul.mubr.f32.gmra.mrb[0].mxu0 %v2803
      %v2989 = vpop.f32.mrb[0].mxu0
      %v2990 = vadd.f32 %v2905, %v2989
      %v2991 = vpop.f32.mrb[0].mxu0
      %2992 = vmatprep.mubr.f32.mxu0 %v2812
      %2993 = vmatmul.mubr.f32.gmra.mrb[0].mxu0 %v2804
      %v2994 = vpop.f32.mrb[0].mxu0
      %v2995 = vadd.f32 %v2905, %v2994
      %v2996 = vpop.f32.mrb[0].mxu0
      %2997 = vmatprep.mubr.f32.mxu0 %v2813
      %2998 = vmatmul.mubr.f32.gmra.mrb[0].mxu0 %v2805
      %v2999 = vpop.f32.mrb[0].mxu0
      %v3000 = vadd.f32 %v2905, %v2999
      %v3001 = vpop.f32.mrb[0].mxu0
      %3002 = vmatprep.mubr.f32.mxu0 %v2814
      %3003 = vmatmul.mubr.f32.gmra.mrb[0].mxu0 %v2806
      %v3004 = vpop.f32.mrb[0].mxu0
      %v3005 = vadd.f32 %v2905, %v3004
      %v3006 = vpop.f32.mrb[0].mxu0
      %3007 = vmatprep.mubr.f32.mxu0 %v2815
      %3008 = vmatmul.mubr.f32.gmra.mrb[0].mxu0 %v2807
      %v3009 = vpop.f32.mrb[0].mxu0
      %v3010 = vadd.f32 %v2905, %v3009
      %v3011 = vpop.f32.mrb[0].mxu0
      %3012 = vmatprep.mubr.f32.mxu0 %v2816
      %3013 = vmatmul.mubr.f32.gmra.mrb[0].mxu0 %v2808
      %v3014 = vpop.f32.mrb[0].mxu0
      %v3015 = vadd.f32 %v2905, %v3014
      %v3016 = vpop.f32.mrb[0].mxu0
      %3017 = vmatprep.mubr.f32.mxu0 %v2817
      %3018 = vmatmul.mubr.f32.gmra.mrb[0].mxu0 %v2809
      %v3019 = vpop.f32.mrb[0].mxu0
      %v3020 = vadd.f32 %v2905, %v3019
      %v3021 = vpop.f32.mrb[0].mxu0
      %3022 = vmatprep.mubr.f32.mxu0 %v2818
      %3023 = vmatmul.mubr.f32.gmra.mrb[0].mxu0 %v2810
      %v3024 = vpop.f32.mrb[0].mxu0
      %v3025 = vadd.f32 %v2905, %v3024
      %v3026 = vpop.f32.mrb[0].mxu0
      %3027 = vdwg.mxu0
      %3028 = vmatprep.subr.mxu0 0.0
      %3029 = vmatpush1.msra.mxu0 %v2860
      %3030 = vmatprep.subr.mxu0 0.0
      %3031 = vmatpush1.msra.mxu0 %v2861
      %3032 = vmatprep.subr.mxu0 0.0
      %3033 = vmatpush1.msra.mxu0 %v2862
      %3034 = vmatprep.subr.mxu0 0.0
      %3035 = vmatpush1.msra.mxu0 %v2863
      %3036 = vmatprep.subr.mxu0 0.0
      %3037 = vmatpush1.msra.mxu0 %v2864
      %3038 = vmatprep.subr.mxu0 0.0
      %3039 = vmatpush1.msra.mxu0 %v2865
      %3040 = vmatprep.subr.mxu0 0.0
      %3041 = vmatpush1.msra.mxu0 %v2866
      %3042 = vmatprep.subr.mxu0 0.0
      %3043 = vmatpush1.msra.mxu0 %v2867
      %3044 = vmatprep.subr.mxu0 0.0
      %3045 = vmatpush1.msra.mxu0 %v2868
      %3046 = vmatprep.subr.mxu0 0.0
      %3047 = vmatpush1.msra.mxu0 %v2869
      %3048 = vmatprep.subr.mxu0 0.0
      %3049 = vmatpush1.msra.mxu0 %v2870
      %3050 = vmatprep.subr.mxu0 0.0
      %3051 = vmatpush1.msra.mxu0 %v2871
      %3052 = vmatprep.subr.mxu0 0.0
      %3053 = vmatpush1.msra.mxu0 %v2872
      %3054 = vmatprep.subr.mxu0 0.0
      %3055 = vmatpush1.msra.mxu0 %v2873
      %3056 = vmatprep.subr.mxu0 0.0
      %3057 = vmatpush1.msra.mxu0 %v2874
      %3058 = vmatprep.subr.mxu0 0.0
      %3059 = vmatpush1.msra.mxu0 %v2875
      %3060 = vmatprep.subr.mxu0 0.0
      %3061 = vmatpush1.msra.mxu0 %v2876
      %3062 = vmatprep.subr.mxu0 0.0
      %3063 = vmatpush1.msra.mxu0 %v2877
      %3064 = vmatprep.subr.mxu0 0.0
      %3065 = vmatpush1.msra.mxu0 %v2878
      %3066 = vmatprep.subr.mxu0 0.0
      %3067 = vmatpush1.msra.mxu0 %v2879
      %3068 = vmatprep.subr.mxu0 0.0
      %3069 = vmatpush1.msra.mxu0 %v2880
      %3070 = vmatprep.subr.mxu0 0.0
      %3071 = vmatpush1.msra.mxu0 %v2881
      %3072 = vmatprep.subr.mxu0 0.0
      %3073 = vmatpush1.msra.mxu0 %v2882
      %3074 = vmatprep.subr.mxu0 0.0
      %3075 = vmatpush1.msra.mxu0 %v2883
      %3076 = vmatprep.subr.mxu0 0.0
      %3077 = vmatpush1.msra.mxu0 %v2884
      %3078 = vmatprep.subr.mxu0 0.0
      %3079 = vmatpush1.msra.mxu0 %v2885
      %3080 = vmatprep.subr.mxu0 0.0
      %3081 = vmatpush1.msra.mxu0 %v2886
      %3082 = vmatprep.subr.mxu0 0.0
      %3083 = vmatpush1.msra.mxu0 %v2887
      %3084 = vmatprep.subr.mxu0 0.0
      %3085 = vmatpush1.msra.mxu0 %v2888
      %3086 = vmatprep.subr.mxu0 0.0
      %3087 = vmatpush1.msra.mxu0 %v2889
      %3088 = vmatprep.subr.mxu0 0.0
      %3089 = vmatpush1.msra.mxu0 %v2890
      %3090 = vmatprep.subr.mxu0 0.0
      %3091 = vmatpush1.msra.mxu0 %v2891
      %3092 = vmatprep.mubr.f32.mxu0 %v2805
      %3093 = vmatmul.mubr.f32.gmra.mrb[0].mxu0 %v2819
      %v3094 = vpop.f32.mrb[0].mxu0
      %v3095 = vadd.f32 %v2990, %v3094
      %v3096 = vpop.f32.mrb[0].mxu0
      %3097 = vmatprep.mubr.f32.mxu0 %v2806
      %3098 = vmatmul.mubr.f32.gmra.mrb[0].mxu0 %v2820
      %v3099 = vpop.f32.mrb[0].mxu0
      %v3100 = vadd.f32 %v2995, %v3099
      %v3101 = vpop.f32.mrb[0].mxu0
      %3102 = vmatprep.mubr.f32.mxu0 %v2807
      %3103 = vmatmul.mubr.f32.gmra.mrb[0].mxu0 %v2821
      %v3104 = vpop.f32.mrb[0].mxu0
      %v3105 = vadd.f32 %v3000, %v3104
      %v3106 = vpop.f32.mrb[0].mxu0
      %3107 = vmatprep.mubr.f32.mxu0 %v2808
      %3108 = vmatmul.mubr.f32.gmra.mrb[0].mxu0 %v2822
      %v3109 = vpop.f32.mrb[0].mxu0
      %v3110 = vadd.f32 %v3005, %v3109
      %v3111 = vpop.f32.mrb[0].mxu0
      %3112 = vmatprep.mubr.f32.mxu0 %v2809
      %3113 = vmatmul.mubr.f32.gmra.mrb[0].mxu0 %v2823
      %v3114 = vpop.f32.mrb[0].mxu0
      %v3115 = vadd.f32 %v3010, %v3114
      %v3116 = vpop.f32.mrb[0].mxu0
      %3117 = vmatprep.mubr.f32.mxu0 %v2810
      %3118 = vmatmul.mubr.f32.gmra.mrb[0].mxu0 %v2824
      %v3119 = vpop.f32.mrb[0].mxu0
      %v3120 = vadd.f32 %v3015, %v3119
      %v3121 = vpop.f32.mrb[0].mxu0
      %3122 = vmatprep.mubr.f32.mxu0 %v2827
      %3123 = vmatmul.mubr.f32.gmra.mrb[0].mxu0 %v2825
      %v3124 = vpop.f32.mrb[0].mxu0
      %v3125 = vadd.f32 %v3020, %v3124
      %v3126 = vpop.f32.mrb[0].mxu0
      %3127 = vmatprep.mubr.f32.mxu0 %v2803
      %3128 = vmatmul.mubr.f32.gmra.mrb[0].mxu0 %v2826
      %v3129 = vpop.f32.mrb[0].mxu0
      %v3130 = vadd.f32 %v3025, %v3129
      %v3131 = vpop.f32.mrb[0].mxu0
      %3132 = vdwg.mxu0
      %3133 = vmatprep.subr.mxu0 0.0
      %3134 = vmatpush1.msra.mxu0 %v2892
      %3135 = vmatprep.subr.mxu0 0.0
      %3136 = vmatpush1.msra.mxu0 %v2893
      %3137 = vmatprep.subr.mxu0 0.0
      %3138 = vmatpush1.msra.mxu0 %v2894
      %3139 = vmatprep.subr.mxu0 0.0
      %3140 = vmatpush1.msra.mxu0 %v2895
      %3141 = vmatprep.subr.mxu0 0.0
      %3142 = vmatpush1.msra.mxu0 %v2896
      %3143 = vmatprep.subr.mxu0 0.0
      %3144 = vmatpush1.msra.mxu0 %v2897
      %3145 = vmatprep.subr.mxu0 0.0
      %3146 = vmatpush1.msra.mxu0 %v2898
      %3147 = vmatprep.subr.mxu0 0.0
      %3148 = vmatpush1.msra.mxu0 %v2899
      %3149 = vmatprep.subr.mxu0 0.0
      %3150 = vmatpush1.msra.mxu0 0.0
      %3151 = vmatprep.subr.mxu0 0.0
      %3152 = vmatpush1.msra.mxu0 0.0
      %3153 = vmatprep.subr.mxu0 0.0
      %3154 = vmatpush1.msra.mxu0 0.0
      %3155 = vmatprep.subr.mxu0 0.0
      %3156 = vmatpush1.msra.mxu0 0.0
      %3157 = vmatprep.subr.mxu0 0.0
      %3158 = vmatpush1.msra.mxu0 0.0
      %3159 = vmatprep.subr.mxu0 0.0
      %3160 = vmatpush1.msra.mxu0 0.0
      %3161 = vmatprep.subr.mxu0 0.0
      %3162 = vmatpush1.msra.mxu0 0.0
      %3163 = vmatprep.subr.mxu0 0.0
      %3164 = vmatpush1.msra.mxu0 0.0
      %3165 = vmatprep.subr.mxu0 0.0
      %3166 = vmatpush1.msra.mxu0 0.0
      %3167 = vmatprep.subr.mxu0 0.0
      %3168 = vmatpush1.msra.mxu0 0.0
      %3169 = vmatprep.subr.mxu0 0.0
      %3170 = vmatpush1.msra.mxu0 0.0
      %3171 = vmatprep.subr.mxu0 0.0
      %3172 = vmatpush1.msra.mxu0 0.0
      %3173 = vmatprep.subr.mxu0 0.0
      %3174 = vmatpush1.msra.mxu0 0.0
      %3175 = vmatprep.subr.mxu0 0.0
      %3176 = vmatpush1.msra.mxu0 0.0
      %3177 = vmatprep.subr.mxu0 0.0
      %3178 = vmatpush1.msra.mxu0 0.0
      %3179 = vmatprep.subr.mxu0 0.0
      %3180 = vmatpush1.msra.mxu0 0.0
      %3181 = vmatprep.subr.mxu0 0.0
      %3182 = vmatpush1.msra.mxu0 0.0
      %3183 = vmatprep.subr.mxu0 0.0
      %3184 = vmatpush1.msra.mxu0 0.0
      %3185 = vmatprep.subr.mxu0 0.0
      %3186 = vmatpush1.msra.mxu0 0.0
      %3187 = vmatprep.subr.mxu0 0.0
      %3188 = vmatpush1.msra.mxu0 0.0
      %3189 = vmatprep.subr.mxu0 0.0
      %3190 = vmatpush1.msra.mxu0 0.0
      %3191 = vmatprep.subr.mxu0 0.0
      %3192 = vmatpush1.msra.mxu0 0.0
      %3193 = vmatprep.subr.mxu0 0.0
      %3194 = vmatpush1.msra.mxu0 0.0
      %3195 = vmatprep.subr.mxu0 0.0
      %3196 = vmatpush1.msra.mxu0 0.0
      %3197 = vmatprep.mubr.f32.mxu0 0.0
      %3198 = vmatmul.mubr.f32.gmra.mrb[0].mxu0 %v2907
      %v3199 = vpop.f32.mrb[0].mxu0
      %v3200 = vadd.f32 %v3095, %v3199
      %v3201 = vpop.f32.mrb[0].mxu0
      %3202 = vmatprep.mubr.f32.mxu0 0.0
      %3203 = vmatmul.mubr.f32.gmra.mrb[0].mxu0 %v2909
      %v3204 = vpop.f32.mrb[0].mxu0
      %v3205 = vadd.f32 %v3100, %v3204
      %v3206 = vpop.f32.mrb[0].mxu0
      %3207 = vmatprep.mubr.f32.mxu0 0.0
      %3208 = vmatmul.mubr.f32.gmra.mrb[0].mxu0 %v2911
      %v3209 = vpop.f32.mrb[0].mxu0
      %v3210 = vadd.f32 %v3105, %v3209
      %v3211 = vpop.f32.mrb[0].mxu0
      %3212 = vmatprep.mubr.f32.mxu0 0.0
      %3213 = vmatmul.mubr.f32.gmra.mrb[0].mxu0 %v2913
      %v3214 = vpop.f32.mrb[0].mxu0
      %v3215 = vadd.f32 %v3110, %v3214
      %v3216 = vpop.f32.mrb[0].mxu0
      %3217 = vmatprep.mubr.f32.mxu0 0.0
      %3218 = vmatmul.mubr.f32.gmra.mrb[0].mxu0 %v2915
      %v3219 = vpop.f32.mrb[0].mxu0
      %v3220 = vadd.f32 %v3115, %v3219
      %v3221 = vpop.f32.mrb[0].mxu0
      %3222 = vmatprep.mubr.f32.mxu0 0.0
      %3223 = vmatmul.mubr.f32.gmra.mrb[0].mxu0 %v2917
      %v3224 = vpop.f32.mrb[0].mxu0
      %v3225 = vadd.f32 %v3120, %v3224
      %v3226 = vpop.f32.mrb[0].mxu0
      %3227 = vmatprep.mubr.f32.mxu0 0.0
      %3228 = vmatmul.mubr.f32.gmra.mrb[0].mxu0 %v2919
      %v3229 = vpop.f32.mrb[0].mxu0
      %v3230 = vadd.f32 %v3125, %v3229
      %v3231 = vpop.f32.mrb[0].mxu0
      %3232 = vmatprep.mubr.f32.mxu0 0.0
      %3233 = vmatmul.mubr.f32.gmra.mrb[0].mxu0 %v2921
      %v3234 = vpop.f32.mrb[0].mxu0
      %v3235 = vadd.f32 %v3130, %v3234
      %v3236 = vpop.f32.mrb[0].mxu0
      %3237 = vdwg.mxu0
      %v3238 = vmax.f32 %v3200, 0.0
      %v3239 = vmax.f32 %v3205, 0.0
      %v3240 = vmax.f32 %v3210, 0.0
      %v3241 = vmax.f32 %v3215, 0.0
      %v3242 = vmax.f32 %v3220, 0.0
      %v3243 = vmax.f32 %v3225, 0.0
      %v3244 = vmax.f32 %v3230, 0.0
      %v3245 = vmax.f32 %v3235, 0.0
      %v3254 = vcombine.high %v3238, %v3238
      %v3256 = vunpack.c.l.s4 1983009808
      %v3257 = vunpack.c.0.s8 %v3256
      %v3258 = vlaneseq
      %v3259 = vshrl.u32 %v3258, 7
      %v3260 = vsub.s32 %v3257, %v3259
      %v3261 = vrot.slane %v3238, %v3260
      %v3263 = vunpack.c.l.s4 1983009808
      %v3264 = vunpack.c.0.s8 %v3263
      %v3265 = vlaneseq
      %v3266 = vshrl.u32 %v3265, 7
      %v3267 = vsub.s32 %v3264, %v3266
      %v3268 = vrot.slane %v3254, %v3267
      %v3269 = vcombine.high %v3261, %v3261
      %v3270 = vcombine.high %v3268, %v3268
      %v3271 = vcombine.high %v3239, %v3239
      %v3273 = vunpack.c.l.s4 1983009808
      %v3274 = vunpack.c.0.s8 %v3273
      %v3275 = vlaneseq
      %v3276 = vshrl.u32 %v3275, 7
      %v3277 = vsub.s32 %v3274, %v3276
      %v3278 = vrot.slane %v3239, %v3277
      %v3280 = vunpack.c.l.s4 1983009808
      %v3281 = vunpack.c.0.s8 %v3280
      %v3282 = vlaneseq
      %v3283 = vshrl.u32 %v3282, 7
      %v3284 = vsub.s32 %v3281, %v3283
      %v3285 = vrot.slane %v3271, %v3284
      %v3286 = vcombine.high %v3278, %v3278
      %v3287 = vcombine.high %v3285, %v3285
      %v3288 = vcombine.high %v3240, %v3240
      %v3290 = vunpack.c.l.s4 1983009808
      %v3291 = vunpack.c.0.s8 %v3290
      %v3292 = vlaneseq
      %v3293 = vshrl.u32 %v3292, 7
      %v3294 = vsub.s32 %v3291, %v3293
      %v3295 = vrot.slane %v3240, %v3294
      %v3297 = vunpack.c.l.s4 1983009808
      %v3298 = vunpack.c.0.s8 %v3297
      %v3299 = vlaneseq
      %v3300 = vshrl.u32 %v3299, 7
      %v3301 = vsub.s32 %v3298, %v3300
      %v3302 = vrot.slane %v3288, %v3301
      %v3303 = vcombine.high %v3295, %v3295
      %v3304 = vcombine.high %v3302, %v3302
      %v3305 = vcombine.high %v3241, %v3241
      %v3307 = vunpack.c.l.s4 1983009808
      %v3308 = vunpack.c.0.s8 %v3307
      %v3309 = vlaneseq
      %v3310 = vshrl.u32 %v3309, 7
      %v3311 = vsub.s32 %v3308, %v3310
      %v3312 = vrot.slane %v3241, %v3311
      %v3314 = vunpack.c.l.s4 1983009808
      %v3315 = vunpack.c.0.s8 %v3314
      %v3316 = vlaneseq
      %v3317 = vshrl.u32 %v3316, 7
      %v3318 = vsub.s32 %v3315, %v3317
      %v3319 = vrot.slane %v3305, %v3318
      %v3320 = vcombine.high %v3312, %v3312
      %v3321 = vcombine.high %v3319, %v3319
      %v3322 = vcombine.high %v3242, %v3242
      %v3324 = vunpack.c.l.s4 1983009808
      %v3325 = vunpack.c.0.s8 %v3324
      %v3326 = vlaneseq
      %v3327 = vshrl.u32 %v3326, 7
      %v3328 = vsub.s32 %v3325, %v3327
      %v3329 = vrot.slane %v3242, %v3328
      %v3331 = vunpack.c.l.s4 1983009808
      %v3332 = vunpack.c.0.s8 %v3331
      %v3333 = vlaneseq
      %v3334 = vshrl.u32 %v3333, 7
      %v3335 = vsub.s32 %v3332, %v3334
      %v3336 = vrot.slane %v3322, %v3335
      %v3337 = vcombine.high %v3329, %v3329
      %v3338 = vcombine.high %v3336, %v3336
      %v3339 = vcombine.high %v3243, %v3243
      %v3341 = vunpack.c.l.s4 1983009808
      %v3342 = vunpack.c.0.s8 %v3341
      %v3343 = vlaneseq
      %v3344 = vshrl.u32 %v3343, 7
      %v3345 = vsub.s32 %v3342, %v3344
      %v3346 = vrot.slane %v3243, %v3345
      %v3348 = vunpack.c.l.s4 1983009808
      %v3349 = vunpack.c.0.s8 %v3348
      %v3350 = vlaneseq
      %v3351 = vshrl.u32 %v3350, 7
      %v3352 = vsub.s32 %v3349, %v3351
      %v3353 = vrot.slane %v3339, %v3352
      %v3354 = vcombine.high %v3346, %v3346
      %v3355 = vcombine.high %v3353, %v3353
      %v3356 = vcombine.high %v3244, %v3244
      %v3358 = vunpack.c.l.s4 1983009808
      %v3359 = vunpack.c.0.s8 %v3358
      %v3360 = vlaneseq
      %v3361 = vshrl.u32 %v3360, 7
      %v3362 = vsub.s32 %v3359, %v3361
      %v3363 = vrot.slane %v3244, %v3362
      %v3365 = vunpack.c.l.s4 1983009808
      %v3366 = vunpack.c.0.s8 %v3365
      %v3367 = vlaneseq
      %v3368 = vshrl.u32 %v3367, 7
      %v3369 = vsub.s32 %v3366, %v3368
      %v3370 = vrot.slane %v3356, %v3369
      %v3371 = vcombine.high %v3363, %v3363
      %v3372 = vcombine.high %v3370, %v3370
      %v3373 = vcombine.high %v3245, %v3245
      %v3375 = vunpack.c.l.s4 1983009808
      %v3376 = vunpack.c.0.s8 %v3375
      %v3377 = vlaneseq
      %v3378 = vshrl.u32 %v3377, 7
      %v3379 = vsub.s32 %v3376, %v3378
      %v3380 = vrot.slane %v3245, %v3379
      %v3382 = vunpack.c.l.s4 1983009808
      %v3383 = vunpack.c.0.s8 %v3382
      %v3384 = vlaneseq
      %v3385 = vshrl.u32 %v3384, 7
      %v3386 = vsub.s32 %v3383, %v3385
      %v3387 = vrot.slane %v3373, %v3386
      %v3388 = vcombine.high %v3380, %v3380
      %v3389 = vcombine.high %v3387, %v3387
      %vm3422 = vcmask 1041408
      %v3423 = vsel %vm3422, %v3261, -inf
      %v3424 = vrot.slane %v3423, 4
      %v3425 = vmax.f32 %v3423, %v3424
      %v3426 = vrot.slane %v3425, 2
      %v3427 = vmax.f32 %v3425, %v3426
      %v3428 = vrot.slane %v3427, 1
      %v3429 = vmax.f32 %v3427, %v3428
      %v3430 = vsel %vm3422, %v3269, -inf
      %v3431 = vrot.slane %v3430, 4
      %v3432 = vmax.f32 %v3430, %v3431
      %v3433 = vrot.slane %v3432, 2
      %v3434 = vmax.f32 %v3432, %v3433
      %v3435 = vrot.slane %v3434, 1
      %v3436 = vmax.f32 %v3434, %v3435
      %v3437 = vsel %vm3422, %v3268, -inf
      %v3438 = vrot.slane %v3437, 4
      %v3439 = vmax.f32 %v3437, %v3438
      %v3440 = vrot.slane %v3439, 2
      %v3441 = vmax.f32 %v3439, %v3440
      %v3442 = vrot.slane %v3441, 1
      %v3443 = vmax.f32 %v3441, %v3442
      %v3444 = vsel %vm3422, %v3270, -inf
      %v3445 = vrot.slane %v3444, 4
      %v3446 = vmax.f32 %v3444, %v3445
      %v3447 = vrot.slane %v3446, 2
      %v3448 = vmax.f32 %v3446, %v3447
      %v3449 = vrot.slane %v3448, 1
      %v3450 = vmax.f32 %v3448, %v3449
      %v3451 = vsel %vm3422, %v3278, -inf
      %v3452 = vrot.slane %v3451, 4
      %v3453 = vmax.f32 %v3451, %v3452
      %v3454 = vrot.slane %v3453, 2
      %v3455 = vmax.f32 %v3453, %v3454
      %v3456 = vrot.slane %v3455, 1
      %v3457 = vmax.f32 %v3455, %v3456
      %v3458 = vsel %vm3422, %v3286, -inf
      %v3459 = vrot.slane %v3458, 4
      %v3460 = vmax.f32 %v3458, %v3459
      %v3461 = vrot.slane %v3460, 2
      %v3462 = vmax.f32 %v3460, %v3461
      %v3463 = vrot.slane %v3462, 1
      %v3464 = vmax.f32 %v3462, %v3463
      %v3465 = vsel %vm3422, %v3285, -inf
      %v3466 = vrot.slane %v3465, 4
      %v3467 = vmax.f32 %v3465, %v3466
      %v3468 = vrot.slane %v3467, 2
      %v3469 = vmax.f32 %v3467, %v3468
      %v3470 = vrot.slane %v3469, 1
      %v3471 = vmax.f32 %v3469, %v3470
      %v3472 = vsel %vm3422, %v3287, -inf
      %v3473 = vrot.slane %v3472, 4
      %v3474 = vmax.f32 %v3472, %v3473
      %v3475 = vrot.slane %v3474, 2
      %v3476 = vmax.f32 %v3474, %v3475
      %v3477 = vrot.slane %v3476, 1
      %v3478 = vmax.f32 %v3476, %v3477
      %v3479 = vsel %vm3422, %v3295, -inf
      %v3480 = vrot.slane %v3479, 4
      %v3481 = vmax.f32 %v3479, %v3480
      %v3482 = vrot.slane %v3481, 2
      %v3483 = vmax.f32 %v3481, %v3482
      %v3484 = vrot.slane %v3483, 1
      %v3485 = vmax.f32 %v3483, %v3484
      %v3486 = vsel %vm3422, %v3303, -inf
      %v3487 = vrot.slane %v3486, 4
      %v3488 = vmax.f32 %v3486, %v3487
      %v3489 = vrot.slane %v3488, 2
      %v3490 = vmax.f32 %v3488, %v3489
      %v3491 = vrot.slane %v3490, 1
      %v3492 = vmax.f32 %v3490, %v3491
      %v3493 = vsel %vm3422, %v3302, -inf
      %v3494 = vrot.slane %v3493, 4
      %v3495 = vmax.f32 %v3493, %v3494
      %v3496 = vrot.slane %v3495, 2
      %v3497 = vmax.f32 %v3495, %v3496
      %v3498 = vrot.slane %v3497, 1
      %v3499 = vmax.f32 %v3497, %v3498
      %v3500 = vsel %vm3422, %v3304, -inf
      %v3501 = vrot.slane %v3500, 4
      %v3502 = vmax.f32 %v3500, %v3501
      %v3503 = vrot.slane %v3502, 2
      %v3504 = vmax.f32 %v3502, %v3503
      %v3505 = vrot.slane %v3504, 1
      %v3506 = vmax.f32 %v3504, %v3505
      %v3507 = vsel %vm3422, %v3312, -inf
      %v3508 = vrot.slane %v3507, 4
      %v3509 = vmax.f32 %v3507, %v3508
      %v3510 = vrot.slane %v3509, 2
      %v3511 = vmax.f32 %v3509, %v3510
      %v3512 = vrot.slane %v3511, 1
      %v3513 = vmax.f32 %v3511, %v3512
      %v3514 = vsel %vm3422, %v3320, -inf
      %v3515 = vrot.slane %v3514, 4
      %v3516 = vmax.f32 %v3514, %v3515
      %v3517 = vrot.slane %v3516, 2
      %v3518 = vmax.f32 %v3516, %v3517
      %v3519 = vrot.slane %v3518, 1
      %v3520 = vmax.f32 %v3518, %v3519
      %v3521 = vsel %vm3422, %v3319, -inf
      %v3522 = vrot.slane %v3521, 4
      %v3523 = vmax.f32 %v3521, %v3522
      %v3524 = vrot.slane %v3523, 2
      %v3525 = vmax.f32 %v3523, %v3524
      %v3526 = vrot.slane %v3525, 1
      %v3527 = vmax.f32 %v3525, %v3526
      %v3528 = vsel %vm3422, %v3321, -inf
      %v3529 = vrot.slane %v3528, 4
      %v3530 = vmax.f32 %v3528, %v3529
      %v3531 = vrot.slane %v3530, 2
      %v3532 = vmax.f32 %v3530, %v3531
      %v3533 = vrot.slane %v3532, 1
      %v3534 = vmax.f32 %v3532, %v3533
      %v3535 = vsel %vm3422, %v3329, -inf
      %v3536 = vrot.slane %v3535, 4
      %v3537 = vmax.f32 %v3535, %v3536
      %v3538 = vrot.slane %v3537, 2
      %v3539 = vmax.f32 %v3537, %v3538
      %v3540 = vrot.slane %v3539, 1
      %v3541 = vmax.f32 %v3539, %v3540
      %v3542 = vsel %vm3422, %v3337, -inf
      %v3543 = vrot.slane %v3542, 4
      %v3544 = vmax.f32 %v3542, %v3543
      %v3545 = vrot.slane %v3544, 2
      %v3546 = vmax.f32 %v3544, %v3545
      %v3547 = vrot.slane %v3546, 1
      %v3548 = vmax.f32 %v3546, %v3547
      %v3549 = vsel %vm3422, %v3336, -inf
      %v3550 = vrot.slane %v3549, 4
      %v3551 = vmax.f32 %v3549, %v3550
      %v3552 = vrot.slane %v3551, 2
      %v3553 = vmax.f32 %v3551, %v3552
      %v3554 = vrot.slane %v3553, 1
      %v3555 = vmax.f32 %v3553, %v3554
      %v3556 = vsel %vm3422, %v3338, -inf
      %v3557 = vrot.slane %v3556, 4
      %v3558 = vmax.f32 %v3556, %v3557
      %v3559 = vrot.slane %v3558, 2
      %v3560 = vmax.f32 %v3558, %v3559
      %v3561 = vrot.slane %v3560, 1
      %v3562 = vmax.f32 %v3560, %v3561
      %v3563 = vsel %vm3422, %v3346, -inf
      %v3564 = vrot.slane %v3563, 4
      %v3565 = vmax.f32 %v3563, %v3564
      %v3566 = vrot.slane %v3565, 2
      %v3567 = vmax.f32 %v3565, %v3566
      %v3568 = vrot.slane %v3567, 1
      %v3569 = vmax.f32 %v3567, %v3568
      %v3570 = vsel %vm3422, %v3354, -inf
      %v3571 = vrot.slane %v3570, 4
      %v3572 = vmax.f32 %v3570, %v3571
      %v3573 = vrot.slane %v3572, 2
      %v3574 = vmax.f32 %v3572, %v3573
      %v3575 = vrot.slane %v3574, 1
      %v3576 = vmax.f32 %v3574, %v3575
      %v3577 = vsel %vm3422, %v3353, -inf
      %v3578 = vrot.slane %v3577, 4
      %v3579 = vmax.f32 %v3577, %v3578
      %v3580 = vrot.slane %v3579, 2
      %v3581 = vmax.f32 %v3579, %v3580
      %v3582 = vrot.slane %v3581, 1
      %v3583 = vmax.f32 %v3581, %v3582
      %v3584 = vsel %vm3422, %v3355, -inf
      %v3585 = vrot.slane %v3584, 4
      %v3586 = vmax.f32 %v3584, %v3585
      %v3587 = vrot.slane %v3586, 2
      %v3588 = vmax.f32 %v3586, %v3587
      %v3589 = vrot.slane %v3588, 1
      %v3590 = vmax.f32 %v3588, %v3589
      %v3591 = vsel %vm3422, %v3363, -inf
      %v3592 = vrot.slane %v3591, 4
      %v3593 = vmax.f32 %v3591, %v3592
      %v3594 = vrot.slane %v3593, 2
      %v3595 = vmax.f32 %v3593, %v3594
      %v3596 = vrot.slane %v3595, 1
      %v3597 = vmax.f32 %v3595, %v3596
      %v3598 = vsel %vm3422, %v3371, -inf
      %v3599 = vrot.slane %v3598, 4
      %v3600 = vmax.f32 %v3598, %v3599
      %v3601 = vrot.slane %v3600, 2
      %v3602 = vmax.f32 %v3600, %v3601
      %v3603 = vrot.slane %v3602, 1
      %v3604 = vmax.f32 %v3602, %v3603
      %v3605 = vsel %vm3422, %v3370, -inf
      %v3606 = vrot.slane %v3605, 4
      %v3607 = vmax.f32 %v3605, %v3606
      %v3608 = vrot.slane %v3607, 2
      %v3609 = vmax.f32 %v3607, %v3608
      %v3610 = vrot.slane %v3609, 1
      %v3611 = vmax.f32 %v3609, %v3610
      %v3612 = vsel %vm3422, %v3372, -inf
      %v3613 = vrot.slane %v3612, 4
      %v3614 = vmax.f32 %v3612, %v3613
      %v3615 = vrot.slane %v3614, 2
      %v3616 = vmax.f32 %v3614, %v3615
      %v3617 = vrot.slane %v3616, 1
      %v3618 = vmax.f32 %v3616, %v3617
      %v3619 = vsel %vm3422, %v3380, -inf
      %v3620 = vrot.slane %v3619, 4
      %v3621 = vmax.f32 %v3619, %v3620
      %v3622 = vrot.slane %v3621, 2
      %v3623 = vmax.f32 %v3621, %v3622
      %v3624 = vrot.slane %v3623, 1
      %v3625 = vmax.f32 %v3623, %v3624
      %v3626 = vsel %vm3422, %v3388, -inf
      %v3627 = vrot.slane %v3626, 4
      %v3628 = vmax.f32 %v3626, %v3627
      %v3629 = vrot.slane %v3628, 2
      %v3630 = vmax.f32 %v3628, %v3629
      %v3631 = vrot.slane %v3630, 1
      %v3632 = vmax.f32 %v3630, %v3631
      %v3633 = vsel %vm3422, %v3387, -inf
      %v3634 = vrot.slane %v3633, 4
      %v3635 = vmax.f32 %v3633, %v3634
      %v3636 = vrot.slane %v3635, 2
      %v3637 = vmax.f32 %v3635, %v3636
      %v3638 = vrot.slane %v3637, 1
      %v3639 = vmax.f32 %v3637, %v3638
      %v3640 = vsel %vm3422, %v3389, -inf
      %v3641 = vrot.slane %v3640, 4
      %v3642 = vmax.f32 %v3640, %v3641
      %v3643 = vrot.slane %v3642, 2
      %v3644 = vmax.f32 %v3642, %v3643
      %v3645 = vrot.slane %v3644, 1
      %v3646 = vmax.f32 %v3644, %v3645
      %v3647 = vmax.f32 %v3429, %v3457
      %v3648 = vmax.f32 %v3436, %v3464
      %v3649 = vmax.f32 %v3443, %v3471
      %v3650 = vmax.f32 %v3450, %v3478
      %v3651 = vmax.f32 %v3485, %v3513
      %v3652 = vmax.f32 %v3492, %v3520
      %v3653 = vmax.f32 %v3499, %v3527
      %v3654 = vmax.f32 %v3506, %v3534
      %v3655 = vmax.f32 %v3541, %v3569
      %v3656 = vmax.f32 %v3548, %v3576
      %v3657 = vmax.f32 %v3555, %v3583
      %v3658 = vmax.f32 %v3562, %v3590
      %v3659 = vmax.f32 %v3597, %v3625
      %v3660 = vmax.f32 %v3604, %v3632
      %v3661 = vmax.f32 %v3611, %v3639
      %v3662 = vmax.f32 %v3618, %v3646
      %v3663 = vld [vmem:[%s5] sm:$0xff]
      %v3664 = vld [vmem:[%s5 + $0x8] sm:$0xff]
      %v3665 = vld [vmem:[%s5 + $0x10] sm:$0xff]
      %v3666 = vld [vmem:[%s5 + $0x18] sm:$0xff]
      %v3667 = vld [vmem:[%s5 + $0x20] sm:$0xff]
      %v3668 = vld [vmem:[%s5 + $0x28] sm:$0xff]
      %v3669 = vld [vmem:[%s5 + $0x30] sm:$0xff]
      %v3670 = vld [vmem:[%s5 + $0x38] sm:$0xff]
      %v3671 = vld [vmem:[%s5 + $0x40] sm:$0xff]
      %v3672 = vld [vmem:[%s5 + $0x48] sm:$0xff]
      %v3673 = vld [vmem:[%s5 + $0x50] sm:$0xff]
      %v3674 = vld [vmem:[%s5 + $0x58] sm:$0xff]
      %v3675 = vld [vmem:[%s5 + $0x60] sm:$0xff]
      %v3676 = vld [vmem:[%s5 + $0x68] sm:$0xff]
      %v3677 = vld [vmem:[%s5 + $0x70] sm:$0xff]
      %v3678 = vld [vmem:[%s5 + $0x78] sm:$0xff]
      %v3679 = vld [vmem:[%s6] sm:$0x1]
      %v3681 = vlaneseq
      %v3682 = vshrl.u32 %v3681, 7
      %v3683 = vsub.s32 0, %v3682
      %v3684 = vrot.slane %v3679, %v3683
      %v3702 = vsel %vm2537, %v3648, %v3647
      %v3703 = vsel %vm2539, %v3649, %v3702
      %v3704 = vsel %vm2541, %v3650, %v3703
      %v3705 = vsel %vm2543, %v3651, %v3704
      %v3706 = vsel %vm2545, %v3652, %v3705
      %v3707 = vsel %vm2547, %v3653, %v3706
      %v3708 = vsel %vm2549, %v3654, %v3707
      %v3709 = vsel %vm2537, %v3656, %v3655
      %v3710 = vsel %vm2539, %v3657, %v3709
      %v3711 = vsel %vm2541, %v3658, %v3710
      %v3712 = vsel %vm2543, %v3659, %v3711
      %v3713 = vsel %vm2545, %v3660, %v3712
      %v3714 = vsel %vm2547, %v3661, %v3713
      %v3715 = vsel %vm2549, %v3662, %v3714
      %3718 = vmatprep.subr.mxu0 0.0
      %3719 = vmatpush1.msra.mxu0 %v3663
      %3720 = vmatprep.subr.mxu0 0.0
      %3721 = vmatpush1.msra.mxu0 %v3664
      %3722 = vmatprep.subr.mxu0 0.0
      %3723 = vmatpush1.msra.mxu0 %v3665
      %3724 = vmatprep.subr.mxu0 0.0
      %3725 = vmatpush1.msra.mxu0 %v3666
      %3726 = vmatprep.subr.mxu0 0.0
      %3727 = vmatpush1.msra.mxu0 %v3667
      %3728 = vmatprep.subr.mxu0 0.0
      %3729 = vmatpush1.msra.mxu0 %v3668
      %3730 = vmatprep.subr.mxu0 0.0
      %3731 = vmatpush1.msra.mxu0 %v3669
      %3732 = vmatprep.subr.mxu0 0.0
      %3733 = vmatpush1.msra.mxu0 %v3670
      %3734 = vmatprep.subr.mxu0 0.0
      %3735 = vmatpush1.msra.mxu0 %v3671
      %3736 = vmatprep.subr.mxu0 0.0
      %3737 = vmatpush1.msra.mxu0 %v3672
      %3738 = vmatprep.subr.mxu0 0.0
      %3739 = vmatpush1.msra.mxu0 %v3673
      %3740 = vmatprep.subr.mxu0 0.0
      %3741 = vmatpush1.msra.mxu0 %v3674
      %3742 = vmatprep.subr.mxu0 0.0
      %3743 = vmatpush1.msra.mxu0 %v3675
      %3744 = vmatprep.subr.mxu0 0.0
      %3745 = vmatpush1.msra.mxu0 %v3676
      %3746 = vmatprep.subr.mxu0 0.0
      %3747 = vmatpush1.msra.mxu0 %v3677
      %3748 = vmatprep.subr.mxu0 0.0
      %3749 = vmatpush1.msra.mxu0 %v3678
      %3750 = vmatprep.subr.mxu0 0.0
      %3751 = vmatpush1.msra.mxu0 0.0
      %3752 = vmatprep.subr.mxu0 0.0
      %3753 = vmatpush1.msra.mxu0 0.0
      %3754 = vmatprep.subr.mxu0 0.0
      %3755 = vmatpush1.msra.mxu0 0.0
      %3756 = vmatprep.subr.mxu0 0.0
      %3757 = vmatpush1.msra.mxu0 0.0
      %3758 = vmatprep.subr.mxu0 0.0
      %3759 = vmatpush1.msra.mxu0 0.0
      %3760 = vmatprep.subr.mxu0 0.0
      %3761 = vmatpush1.msra.mxu0 0.0
      %3762 = vmatprep.subr.mxu0 0.0
      %3763 = vmatpush1.msra.mxu0 0.0
      %3764 = vmatprep.subr.mxu0 0.0
      %3765 = vmatpush1.msra.mxu0 0.0
      %3766 = vmatprep.subr.mxu0 0.0
      %3767 = vmatpush1.msra.mxu0 0.0
      %3768 = vmatprep.subr.mxu0 0.0
      %3769 = vmatpush1.msra.mxu0 0.0
      %3770 = vmatprep.subr.mxu0 0.0
      %3771 = vmatpush1.msra.mxu0 0.0
      %3772 = vmatprep.subr.mxu0 0.0
      %3773 = vmatpush1.msra.mxu0 0.0
      %3774 = vmatprep.subr.mxu0 0.0
      %3775 = vmatpush1.msra.mxu0 0.0
      %3776 = vmatprep.subr.mxu0 0.0
      %3777 = vmatpush1.msra.mxu0 0.0
      %3778 = vmatprep.subr.mxu0 0.0
      %3779 = vmatpush1.msra.mxu0 0.0
      %3780 = vmatprep.subr.mxu0 0.0
      %3781 = vmatpush1.msra.mxu0 0.0
      %3782 = vmatprep.mubr.f32.mxu0 0.0
      %3783 = vmatmul.mubr.f32.gmra.mrb[0].mxu0 %v3708
      %v3784 = vpop.f32.mrb[0].mxu0
      %v3785 = vadd.f32 %v3684, %v3784
      %v3786 = vpop.f32.mrb[0].mxu0
      %3787 = vmatprep.mubr.f32.mxu0 0.0
      %3788 = vmatmul.mubr.f32.gmra.mrb[0].mxu0 %v3715
      %v3789 = vpop.f32.mrb[0].mxu0
      %v3790 = vadd.f32 %v3684, %v3789
      %v3791 = vpop.f32.mrb[0].mxu0
      %3792 = vdwg.mxu0
      %3795 = vrot.lane.b32.xlu0 %v3785, 96
      %v3796 = vpop.permute.xlu0 %3795
      %3797 = vrot.lane.b32.xlu0 %v3790, 96
      %v3798 = vpop.permute.xlu0 %3797
      %vm3799 = vcmask 261120
      %v3800 = vsel %vm3799, %v3785, 0
      %v3802 = vsel %vm3799, %v3790, 0
      %v3804 = vsel %vm3799, %v3796, 0
      %v3806 = vsel %vm3799, %v3798, 0
      %3808 = vmatprep.subr.mxu0 0.0
      %3809 = vmatpush1.xpose.msra.mxu0 %v3804
      %3810 = vmatprep.subr.mxu0 0.0
      %3811 = vmatpush1.xpose.msra.mxu0 %v3806
      %3812 = vmatprep.subr.mxu0 0.0
      %3813 = vmatpush1.xpose.msra.mxu0 0.0
      %3814 = vmatprep.subr.mxu0 0.0
      %3815 = vmatpush1.xpose.msra.mxu0 0.0
      %3816 = vmatprep.subr.mxu0 0.0
      %3817 = vmatpush1.xpose.msra.mxu0 0.0
      %3818 = vmatprep.subr.mxu0 0.0
      %3819 = vmatpush1.xpose.msra.mxu0 0.0
      %3820 = vmatprep.subr.mxu0 0.0
      %3821 = vmatpush1.xpose.msra.mxu0 0.0
      %3822 = vmatprep.subr.mxu0 0.0
      %3823 = vmatpush1.xpose.msra.mxu0 0.0
      %3824 = vmatprep.subr.mxu0 0.0
      %3825 = vmatpush1.xpose.msra.mxu0 0.0
      %3826 = vmatprep.subr.mxu0 0.0
      %3827 = vmatpush1.xpose.msra.mxu0 0.0
      %3828 = vmatprep.subr.mxu0 0.0
      %3829 = vmatpush1.xpose.msra.mxu0 0.0
      %3830 = vmatprep.subr.mxu0 0.0
      %3831 = vmatpush1.xpose.msra.mxu0 0.0
      %3832 = vmatprep.subr.mxu0 0.0
      %3833 = vmatpush1.xpose.msra.mxu0 0.0
      %3834 = vmatprep.subr.mxu0 0.0
      %3835 = vmatpush1.xpose.msra.mxu0 0.0
      %3836 = vmatprep.subr.mxu0 0.0
      %3837 = vmatpush1.xpose.msra.mxu0 0.0
      %3838 = vmatprep.subr.mxu0 0.0
      %3839 = vmatpush1.xpose.msra.mxu0 0.0
      %3840 = vmatprep.subr.mxu0 0.0
      %3841 = vmatpush1.xpose.msra.mxu0 0.0
      %3842 = vmatprep.subr.mxu0 0.0
      %3843 = vmatpush1.xpose.msra.mxu0 0.0
      %3844 = vmatprep.subr.mxu0 0.0
      %3845 = vmatpush1.xpose.msra.mxu0 0.0
      %3846 = vmatprep.subr.mxu0 0.0
      %3847 = vmatpush1.xpose.msra.mxu0 0.0
      %3848 = vmatprep.subr.mxu0 0.0
      %3849 = vmatpush1.xpose.msra.mxu0 0.0
      %3850 = vmatprep.subr.mxu0 0.0
      %3851 = vmatpush1.xpose.msra.mxu0 0.0
      %3852 = vmatprep.subr.mxu0 0.0
      %3853 = vmatpush1.xpose.msra.mxu0 0.0
      %3854 = vmatprep.subr.mxu0 0.0
      %3855 = vmatpush1.xpose.msra.mxu0 0.0
      %3856 = vmatprep.subr.mxu0 0.0
      %3857 = vmatpush1.xpose.msra.mxu0 0.0
      %3858 = vmatprep.subr.mxu0 0.0
      %3859 = vmatpush1.xpose.msra.mxu0 0.0
      %3860 = vmatprep.subr.mxu0 0.0
      %3861 = vmatpush1.xpose.msra.mxu0 0.0
      %3862 = vmatprep.subr.mxu0 0.0
      %3863 = vmatpush1.xpose.msra.mxu0 0.0
      %3864 = vmatprep.subr.mxu0 0.0
      %3865 = vmatpush1.xpose.msra.mxu0 0.0
      %3866 = vmatprep.subr.mxu0 0.0
      %3867 = vmatpush1.xpose.msra.mxu0 0.0
      %3868 = vmatprep.subr.mxu0 0.0
      %3869 = vmatpush1.xpose.msra.mxu0 0.0
      %3870 = vmatprep.subr.mxu0 0.0
      %3871 = vmatpush1.xpose.msra.mxu0 0.0
      %3872 = vmatprep.mubr.f32.mxu0 0.0
      %3873 = vmatmul.mubr.f32.gmra.mrb[0].mxu0 %v3800
      %v3874 = vpop.f32.mrb[0].mxu0
      %v3875 = vadd.f32 0.0, %v3874
      %v3876 = vpop.f32.mrb[0].mxu0
      %3877 = vmatprep.mubr.f32.mxu0 0.0
      %3878 = vmatmul.mubr.f32.gmra.mrb[0].mxu0 %v3802
      %v3879 = vpop.f32.mrb[0].mxu0
      %v3880 = vadd.f32 0.0, %v3879
      %v3881 = vpop.f32.mrb[0].mxu0
      %3882 = vdwg.mxu0
      %vm3883 = vcmask 130048
      %v3884 = vsel %vm3883, %v3875, -inf
      %3885 = vmax.xlane.f32.xlu0 %v3884
      %v3886 = vpop.xlane.xlu0 %3885
      %v3887 = vsel %vm3883, %v3880, -inf
      %3888 = vmax.xlane.f32.xlu0 %v3887
      %v3889 = vpop.xlane.xlu0 %3888
      %v3890 = vsub.f32 %v3875, %v3886
      %v3891 = vsub.f32 %v3880, %v3889
      %v3892 = vmul.f32 %v3890, 1.442695
      %v3893 = vpow.pop %v3892
      %v3894 = vmul.f32 %v3891, 1.442695
      %v3895 = vpow.pop %v3894
      %v3896 = vsel %vm3883, %v3893, 0.0
      %3897 = vadd.xlane.f32.xlu0 %v3896
      %v3898 = vpop.xlane.xlu0 %3897
      %v3899 = vsel %vm3883, %v3895, 0.0
      %3900 = vadd.xlane.f32.xlu0 %v3899
      %v3901 = vpop.xlane.xlu0 %3900
      %v3902 = vrcp.pop %v3898
      %v3903 = vrcp.pop %v3901
      %v3904 = vmul.f32 %v3893, %v3902
      %v3905 = vmul.f32 %v3895, %v3903
      %3906 = vrot.lane.b32.xlu0 %v3785, 64
      %v3907 = vpop.permute.xlu0 %3906
      %3908 = vrot.lane.b32.xlu0 %v3790, 64
      %v3909 = vpop.permute.xlu0 %3908
      %v3913 = vsel %vm3883, %v3904, 0
      %v3916 = vsel %vm3883, %v3905, 0
      %3918 = vmatprep.subr.mxu0 0.0
      %3919 = vmatpush1.msra.mxu0 %v3907
      %3920 = vmatprep.subr.mxu0 0.0
      %3921 = vmatpush1.msra.mxu0 %v3909
      %3922 = vmatprep.subr.mxu0 0.0
      %3923 = vmatpush1.msra.mxu0 0.0
      %3924 = vmatprep.subr.mxu0 0.0
      %3925 = vmatpush1.msra.mxu0 0.0
      %3926 = vmatprep.subr.mxu0 0.0
      %3927 = vmatpush1.msra.mxu0 0.0
      %3928 = vmatprep.subr.mxu0 0.0
      %3929 = vmatpush1.msra.mxu0 0.0
      %3930 = vmatprep.subr.mxu0 0.0
      %3931 = vmatpush1.msra.mxu0 0.0
      %3932 = vmatprep.subr.mxu0 0.0
      %3933 = vmatpush1.msra.mxu0 0.0
      %3934 = vmatprep.subr.mxu0 0.0
      %3935 = vmatpush1.msra.mxu0 0.0
      %3936 = vmatprep.subr.mxu0 0.0
      %3937 = vmatpush1.msra.mxu0 0.0
      %3938 = vmatprep.subr.mxu0 0.0
      %3939 = vmatpush1.msra.mxu0 0.0
      %3940 = vmatprep.subr.mxu0 0.0
      %3941 = vmatpush1.msra.mxu0 0.0
      %3942 = vmatprep.subr.mxu0 0.0
      %3943 = vmatpush1.msra.mxu0 0.0
      %3944 = vmatprep.subr.mxu0 0.0
      %3945 = vmatpush1.msra.mxu0 0.0
      %3946 = vmatprep.subr.mxu0 0.0
      %3947 = vmatpush1.msra.mxu0 0.0
      %3948 = vmatprep.subr.mxu0 0.0
      %3949 = vmatpush1.msra.mxu0 0.0
      %3950 = vmatprep.subr.mxu0 0.0
      %3951 = vmatpush1.msra.mxu0 0.0
      %3952 = vmatprep.subr.mxu0 0.0
      %3953 = vmatpush1.msra.mxu0 0.0
      %3954 = vmatprep.subr.mxu0 0.0
      %3955 = vmatpush1.msra.mxu0 0.0
      %3956 = vmatprep.subr.mxu0 0.0
      %3957 = vmatpush1.msra.mxu0 0.0
      %3958 = vmatprep.subr.mxu0 0.0
      %3959 = vmatpush1.msra.mxu0 0.0
      %3960 = vmatprep.subr.mxu0 0.0
      %3961 = vmatpush1.msra.mxu0 0.0
      %3962 = vmatprep.subr.mxu0 0.0
      %3963 = vmatpush1.msra.mxu0 0.0
      %3964 = vmatprep.subr.mxu0 0.0
      %3965 = vmatpush1.msra.mxu0 0.0
      %3966 = vmatprep.subr.mxu0 0.0
      %3967 = vmatpush1.msra.mxu0 0.0
      %3968 = vmatprep.subr.mxu0 0.0
      %3969 = vmatpush1.msra.mxu0 0.0
      %3970 = vmatprep.subr.mxu0 0.0
      %3971 = vmatpush1.msra.mxu0 0.0
      %3972 = vmatprep.subr.mxu0 0.0
      %3973 = vmatpush1.msra.mxu0 0.0
      %3974 = vmatprep.subr.mxu0 0.0
      %3975 = vmatpush1.msra.mxu0 0.0
      %3976 = vmatprep.subr.mxu0 0.0
      %3977 = vmatpush1.msra.mxu0 0.0
      %3978 = vmatprep.subr.mxu0 0.0
      %3979 = vmatpush1.msra.mxu0 0.0
      %3980 = vmatprep.subr.mxu0 0.0
      %3981 = vmatpush1.msra.mxu0 0.0
      %3982 = vmatprep.mubr.f32.mxu0 0.0
      %3983 = vmatmul.mubr.f32.gmra.mrb[0].mxu0 %v3913
      %v3984 = vpop.f32.mrb[0].mxu0
      %v3985 = vadd.f32 0.0, %v3984
      %v3986 = vpop.f32.mrb[0].mxu0
      %3987 = vmatprep.mubr.f32.mxu0 0.0
      %3988 = vmatmul.mubr.f32.gmra.mrb[0].mxu0 %v3916
      %v3989 = vpop.f32.mrb[0].mxu0
      %v3990 = vadd.f32 0.0, %v3989
      %v3991 = vpop.f32.mrb[0].mxu0
      %3992 = vdwg.mxu0
      %v3994 = vrot.slane %v3985, 4
      %3995 = vrot.lane.b32.xlu0 %v3994, 32
      %v3996 = vpop.permute.xlu0 %3995
      %3999 = vrot.lane.b32.xlu0 %v3990, 64
      %v4000 = vpop.permute.xlu0 %3999
      %v4002 = vrot.slane %v3990, 4
      %4003 = vrot.lane.b32.xlu0 %v4002, 96
      %v4004 = vpop.permute.xlu0 %4003
      %v4006 = vsel %vm3799, %v3985, %v3996
      %v4007 = vsel %vm2280, %v4006, %v4000
      %vm4008 = vcmask 785408
      %v4009 = vsel %vm4008, %v4007, %v4004
      %4010 = vst [vmem:[%s276] sm:$0xf] %v4009
      %p4011 = scmp.lt.s32.totalorder %s18, 1
      %s4012 = scalar_select %p4011, %s18, 1
      %s4013 = smul.addr %s4012, 4
      %s4014 = scalar_lea.vmem %s7, %s4013
      // Predicated region
      $region49: #{cnn_with_attention.1} parent=47 // pred_check
        %p4015 = pneg %p188
      $region50: #{cnn_with_attention.1} parent=47 // pred_check_branch
        %4017 = sbr.rel (%p4015) target = $region52
      $region51: #{cnn_with_attention.1} parent=47 // pred_region
        _
      $region52: #{cnn_with_attention.1} parent=47 // pred_fallthru
        _
    $region48: #{cnn_with_attention.1} parent=5 // pred_fallthru
      _
    %p4018 = scmp.le.s32.totalorder 2, %s13
    // Predicated region
    $region53: #{cnn_with_attention.1} parent=5 // pred_check
      %p4019 = pneg %p4018
    $region54: #{cnn_with_attention.1} parent=5 // pred_check_branch
      %4021 = sbr.rel (%p4019) target = $region56
    $region55: #{cnn_with_attention.1} parent=5 // pred_region
      %s4022 = ssub.s32 %s13, 2
      // Predicated region
      $region57: #{cnn_with_attention.1} parent=55 // pred_check
        %p4023 = pneg %p194
      $region58: #{cnn_with_attention.1} parent=55 // pred_check_branch
        %4025 = sbr.rel (%p4023) target = $region60
      $region59: #{cnn_with_attention.1} parent=55 // pred_region
        %p4026 = scmp.lt.s32.totalorder %s19, 1
        %s4027 = scalar_select %p4026, %s19, 1
        %s4028 = smul.addr %s4027, 4
        %s4029 = scalar_lea.vmem %s7, %s4028
      $region60: #{cnn_with_attention.1} parent=55 // pred_fallthru
        _
    $region56: #{cnn_with_attention.1} parent=5 // pred_fallthru
      _
  $region6: #{cnn_with_attention.1} parent=0 // loop_footer
    %s17 = sadd.s32 1, %s13
  $region7: #{cnn_with_attention.1} parent=0 // loop_footer_branch
    %12 = sbr.rel target = $region3
  $region8: #{cnn_with_attention.1} parent=0 // loop_exit
    _

</llo_original>
